<compile_context>
chip_gen: v7x
topology: tpu7x:2x2x1
jax: 0.10.0
libtpu: 0.0.40
codegen_flags: <defaults>
</compile_context>

<pallas_src>
import functools

import jax
import jax.numpy as jnp
from jax.experimental import pallas as pl
from jax.experimental.pallas import tpu as pltpu


# ----------------------------------------------------------------------------
# Kernel 1: GAT layer, all timesteps in one launch (no grid).
#   x2d is the time-flattened node matrix (T*N, F); Wh / Wh@a computed for all
#   timesteps with one matmul each, then a static unrolled loop does the per-t
#   masked softmax attention.
# ----------------------------------------------------------------------------
def gat_kernel(x_ref, adj_ref, w_ref, a1_ref, a2_ref, out_ref, *, T, N, alpha):
    Wh = jnp.dot(x_ref[...], w_ref[...], preferred_element_type=jnp.float32)   # (T*N, F)
    Wh1 = jnp.dot(Wh, a1_ref[...], preferred_element_type=jnp.float32)         # (T*N, 1)
    Wh2 = jnp.dot(Wh, a2_ref[...], preferred_element_type=jnp.float32)         # (T*N, 1)
    adj_mask = adj_ref[...] > 0                                                # (N, N)

    for t in range(T):                                                         # static unroll
        lo = t * N
        Wh_t = Wh[lo:lo + N, :]                                                # (N, F)
        e = Wh1[lo:lo + N, :] + Wh2[lo:lo + N, :].T                            # (N, N)
        e = jnp.where(e > 0, e, alpha * e)                                     # LeakyReLU
        att = jnp.where(adj_mask, e, jnp.full_like(e, -9.0e15))
        att = att - jnp.max(att, axis=1, keepdims=True)                        # softmax(dim=1)
        att = jnp.exp(att)
        att = att * pl.reciprocal(jnp.sum(att, axis=1, keepdims=True), approx=False)
        # TODO(synk): F.dropout on attention (training-mode stochastic) omitted -> inference semantics.
        hp = jnp.dot(att, Wh_t, preferred_element_type=jnp.float32)            # (N, F)
        out_ref[lo:lo + N, :] = jnp.where(hp > 0, hp,
                                          jnp.exp(jnp.minimum(hp, 0.0)) - 1.0)  # ELU


def gat_forward(x2d, adj, p, *, T, N, alpha=0.1):
    TN, F_ = x2d.shape
    vmem = pl.BlockSpec(memory_space=pltpu.MemorySpace.VMEM)
    kernel = functools.partial(gat_kernel, T=T, N=N, alpha=alpha)
    return pl.pallas_call(
        kernel,
        out_shape=jax.ShapeDtypeStruct((TN, F_), jnp.float32),
        in_specs=[vmem] * 5,
        out_specs=vmem,
    )(x2d, adj, p["W"], p["a1"], p["a2"])


# ----------------------------------------------------------------------------
# Kernel 2: fused LSTM encoder + two interleaved autoregressive decoders + both
# MSE losses. Everything stays in VMEM; outputs are two (1,1) loss scalars.
# ----------------------------------------------------------------------------
def fused_lstm_kernel(seq_ref, xflat_ref, tgt_ref,
                      e_wih_ref, e_whh_ref, e_b_ref,
                      p_wih_ref, p_whh_ref, p_b_ref, p_wfc_ref, p_bfc_ref,
                      r_wih_ref, r_whh_ref, r_b_ref, r_wfc_ref, r_bfc_ref,
                      recon_ref, pred_ref,
                      hpred_ref, hrec_ref):
    T, Isz = seq_ref.shape
    H = e_whh_ref.shape[0]

    def cell(gates, c):
        # Full-width nonlinearities (one sigmoid + one tanh over (1, 4H)), then slice.
        sig = jax.nn.sigmoid(gates)
        th = jnp.tanh(gates)
        i_g = sig[:, 0:H]
        f_g = sig[:, H:2 * H]
        g_g = th[:, 2 * H:3 * H]
        o_g = sig[:, 3 * H:4 * H]
        c_new = f_g * c + i_g * g_g
        h_new = o_g * jnp.tanh(c_new)
        return h_new, c_new

    # --- Encoder: hoist input projection off the serial path ---------------------
    xw = jnp.dot(seq_ref[...], e_wih_ref[...],
                 preferred_element_type=jnp.float32) + e_b_ref[...]            # (T, 4H)
    h = jnp.zeros((1, H), jnp.float32)
    c = jnp.zeros((1, H), jnp.float32)
    for t in range(T):                                                         # serial scan
        gates = xw[t:t + 1, :] + jnp.dot(h, e_whh_ref[...],
                                         preferred_element_type=jnp.float32)
        h, c = cell(gates, c)

    # --- Fold decoder fc into the recurrence (x_{t+1} = h_t @ Wfc + bfc) ---------
    #   gates_t = h_{t-1} @ (W_hh + W_fc @ W_ih) + (b + b_fc @ W_ih)   for t >= 1
    p_wp = p_whh_ref[...] + jnp.dot(p_wfc_ref[...], p_wih_ref[...],
                                    preferred_element_type=jnp.float32)        # (H, 4H)
    p_bp = p_b_ref[...] + jnp.dot(p_bfc_ref[...], p_wih_ref[...],
                                  preferred_element_type=jnp.float32)          # (1, 4H)
    r_wp = r_whh_ref[...] + jnp.dot(r_wfc_ref[...], r_wih_ref[...],
                                    preferred_element_type=jnp.float32)
    r_bp = r_b_ref[...] + jnp.dot(r_bfc_ref[...], r_wih_ref[...],
                                  preferred_element_type=jnp.float32)

    # --- Two decoders, interleaved for ILP; x_0 = 0 for both ---------------------
    hp, cp = h, c          # predict decoder state
    hr, cr = h, c          # reconstruct decoder state
    for t in range(T):
        if t == 0:         # x_0 = 0  ->  gates = h_enc @ W_hh + b
            gp = jnp.dot(hp, p_whh_ref[...], preferred_element_type=jnp.float32) + p_b_ref[...]
            gr = jnp.dot(hr, r_whh_ref[...], preferred_element_type=jnp.float32) + r_b_ref[...]
        else:
            gp = jnp.dot(hp, p_wp, preferred_element_type=jnp.float32) + p_bp
            gr = jnp.dot(hr, r_wp, preferred_element_type=jnp.float32) + r_bp
        hp, cp = cell(gp, cp)
        hr, cr = cell(gr, cr)
        hpred_ref[t:t + 1, :] = hp
        # Store reconstruction hidden time-reversed so the loss compares directly
        # against x_flat (equivalent to reversing the target, MSE is symmetric).
        hrec_ref[T - 1 - t:T - t, :] = hr

    # --- Batched fc + losses ------------------------------------------------------
    preds = jnp.dot(hpred_ref[...], p_wfc_ref[...],
                    preferred_element_type=jnp.float32) + p_bfc_ref[...]       # (T, O)
    recon_rev = jnp.dot(hrec_ref[...], r_wfc_ref[...],
                        preferred_element_type=jnp.float32) + r_bfc_ref[...]   # (T, O), reversed

    dpred = preds - tgt_ref[...]
    drec = recon_rev - xflat_ref[...]
    inv = 1.0 / float(T * Isz)
    pred_ref[...] = jnp.broadcast_to(jnp.sum(dpred * dpred) * inv, (1, 1))
    recon_ref[...] = jnp.broadcast_to(jnp.sum(drec * drec) * inv, (1, 1))


def fused_lstm_losses(seq, x_flat, tgt_flat, params):
    T, Isz = seq.shape
    H = params["enc"]["whh"].shape[0]
    e, dp, dr = params["enc"], params["dec_pred"], params["dec_recon"]
    vmem = pl.BlockSpec(memory_space=pltpu.MemorySpace.VMEM)
    recon, pred = pl.pallas_call(
        fused_lstm_kernel,
        out_shape=(jax.ShapeDtypeStruct((1, 1), jnp.float32),
                   jax.ShapeDtypeStruct((1, 1), jnp.float32)),
        in_specs=[vmem] * 16,
        out_specs=(vmem, vmem),
        scratch_shapes=[pltpu.VMEM((T, H), jnp.float32),   # predict-decoder hiddens
                        pltpu.VMEM((T, H), jnp.float32)],  # reconstruct-decoder hiddens (reversed)
    )(seq, x_flat, tgt_flat,
      e["wih"], e["whh"], e["b"],
      dp["wih"], dp["whh"], dp["b"], dp["wfc"], dp["bfc"],
      dr["wih"], dr["whh"], dr["b"], dr["wfc"], dr["bfc"])
    return recon, pred


# ----------------------------------------------------------------------------
# Parameter init (deterministic, synthetic).
# ----------------------------------------------------------------------------
def init_params(key, N, F_, H):
    I = N * F_
    O = I
    ks = jax.random.split(key, 16)

    def rnd(k, shape, scale=0.1):
        return jax.random.normal(k, shape, jnp.float32) * scale

    def dec(k0, k1, k2, k3, k4):
        return {"wih": rnd(k0, (I, 4 * H)), "whh": rnd(k1, (H, 4 * H)),
                "b": rnd(k2, (1, 4 * H)), "wfc": rnd(k3, (H, O)), "bfc": rnd(k4, (1, O))}

    return {
        "gat": {"W": rnd(ks[0], (F_, F_)), "a1": rnd(ks[1], (F_, 1)), "a2": rnd(ks[2], (F_, 1))},
        "enc": {"wih": rnd(ks[3], (I, 4 * H)), "whh": rnd(ks[4], (H, 4 * H)), "b": rnd(ks[5], (1, 4 * H))},
        "dec_pred": dec(ks[6], ks[7], ks[8], ks[9], ks[10]),
        "dec_recon": dec(ks[11], ks[12], ks[13], ks[14], ks[15]),
    }


# ----------------------------------------------------------------------------
# Full forward (mirrors MyModel.forward): returns (reconstruct_loss, predict_loss).
# ----------------------------------------------------------------------------
def my_model_forward(params, x, adj, target):
    T, N, F_ = x.shape
    I = N * F_

    # Free, contiguity-preserving reshapes done in the wrapper (outside kernels).
    x2d = x.reshape(T * N, F_)            # (T*N, F)  -> GAT input
    x_flat = x.reshape(T, I)              # (T, I)    -> reconstruction target (un-reversed)
    tgt_flat = target.reshape(T, I)       # (T, I)    -> prediction target

    gat_out = gat_forward(x2d, adj, params["gat"], T=T, N=N, alpha=0.1)   # (T*N, F)
    seq = gat_out.reshape(T, I)           # == view(1, T, N*F)

    recon, pred = fused_lstm_losses(seq, x_flat, tgt_flat, params)
    return recon[0, 0], pred[0, 0]


if __name__ == "__main__":
    # Small shapes consistent with the module: T timesteps, N nodes, F features, H hidden.
    T, N, F_, H = 8, 8, 4, 32

    key = jax.random.PRNGKey(0)
    k_x, k_t, k_a, k_p = jax.random.split(key, 4)
    x = jax.random.normal(k_x, (T, N, F_), jnp.float32)
    target = jax.random.normal(k_t, (T, N, F_), jnp.float32)
    adj = (jax.random.uniform(k_a, (N, N)) > 0.5).astype(jnp.int32)

    params = init_params(k_p, N, F_, H)

    recon_loss, pred_loss = jax.jit(my_model_forward)(params, x, adj, target)
    jax.block_until_ready((recon_loss, pred_loss))
    print("KERNEL_OK")
</pallas_src>

<mosaic_0001>
module attributes {stable_mosaic.version = 11 : i64} {
  func.func @gat_kernel(%arg0: memref<64x4xf32, #tpu.memory_space<vmem>>, %arg1: memref<8x8xi32, #tpu.memory_space<vmem>>, %arg2: memref<4x4xf32, #tpu.memory_space<vmem>>, %arg3: memref<4x1xf32, #tpu.memory_space<vmem>>, %arg4: memref<4x1xf32, #tpu.memory_space<vmem>>, %arg5: memref<64x4xf32, #tpu.memory_space<vmem>>) attributes {dimension_semantics = [], scalar_prefetch = 0 : i64, scratch_operands = 0 : i64, tpu.core_type = #tpu.core_type<tc>} {
    %c0 = arith.constant 0 : index
    %c0_0 = arith.constant 0 : index
    %0 = vector.load %arg0[%c0, %c0_0] : memref<64x4xf32, #tpu.memory_space<vmem>>, vector<64x4xf32>
    %c0_1 = arith.constant 0 : index
    %c0_2 = arith.constant 0 : index
    %1 = vector.load %arg2[%c0_1, %c0_2] : memref<4x4xf32, #tpu.memory_space<vmem>>, vector<4x4xf32>
    %cst = arith.constant dense<0.000000e+00> : vector<64x4xf32>
    %2 = tpu.matmul %0, %1, %cst {dimension_numbers = #tpu.dot_dimension_numbers<[1], [0], [0], [1], [0, 0, 1, 1], [], []>} : vector<64x4xf32>, vector<4x4xf32>, vector<64x4xf32> -> vector<64x4xf32>
    %c0_3 = arith.constant 0 : index
    %c0_4 = arith.constant 0 : index
    %3 = vector.load %arg3[%c0_3, %c0_4] : memref<4x1xf32, #tpu.memory_space<vmem>>, vector<4x1xf32>
    %cst_5 = arith.constant dense<0.000000e+00> : vector<64x1xf32>
    %4 = tpu.matmul %2, %3, %cst_5 {dimension_numbers = #tpu.dot_dimension_numbers<[1], [0], [0], [1], [0, 0, 1, 1], [], []>} : vector<64x4xf32>, vector<4x1xf32>, vector<64x1xf32> -> vector<64x1xf32>
    %c0_6 = arith.constant 0 : index
    %c0_7 = arith.constant 0 : index
    %5 = vector.load %arg4[%c0_6, %c0_7] : memref<4x1xf32, #tpu.memory_space<vmem>>, vector<4x1xf32>
    %cst_8 = arith.constant dense<0.000000e+00> : vector<64x1xf32>
    %6 = tpu.matmul %2, %5, %cst_8 {dimension_numbers = #tpu.dot_dimension_numbers<[1], [0], [0], [1], [0, 0, 1, 1], [], []>} : vector<64x4xf32>, vector<4x1xf32>, vector<64x1xf32> -> vector<64x1xf32>
    %c0_9 = arith.constant 0 : index
    %c0_10 = arith.constant 0 : index
    %7 = vector.load %arg1[%c0_9, %c0_10] : memref<8x8xi32, #tpu.memory_space<vmem>>, vector<8x8xi32>
    %c0_i32 = arith.constant 0 : i32
    %8 = vector.broadcast %c0_i32 : i32 to vector<8x8xi32>
    %9 = arith.cmpi sgt, %7, %8 : vector<8x8xi32>
    %10 = vector.extract_strided_slice %2 {offsets = [0, 0], sizes = [8, 4], strides = [1, 1]} : vector<64x4xf32> to vector<8x4xf32>
    %11 = vector.extract_strided_slice %4 {offsets = [0, 0], sizes = [8, 1], strides = [1, 1]} : vector<64x1xf32> to vector<8x1xf32>
    %12 = vector.extract_strided_slice %6 {offsets = [0, 0], sizes = [8, 1], strides = [1, 1]} : vector<64x1xf32> to vector<8x1xf32>
    %13 = tpu.transpose %12, [1, 0] : vector<8x1xf32> -> vector<1x8xf32>
    %14 = vector.broadcast %11 : vector<8x1xf32> to vector<8x8xf32>
    %15 = vector.broadcast %13 : vector<1x8xf32> to vector<8x8xf32>
    %16 = arith.addf %14, %15 : vector<8x8xf32>
    %cst_11 = arith.constant 0.000000e+00 : f32
    %17 = vector.broadcast %cst_11 : f32 to vector<8x8xf32>
    %18 = arith.cmpf ogt, %16, %17 : vector<8x8xf32>
    %cst_12 = arith.constant 1.000000e-01 : f32
    %19 = vector.broadcast %cst_12 : f32 to vector<8x8xf32>
    %20 = arith.mulf %19, %16 : vector<8x8xf32>
    %21 = arith.select %18, %16, %20 : vector<8x8xi1>, vector<8x8xf32>
    %cst_13 = arith.constant -9.000000e+15 : f32
    %22 = vector.broadcast %cst_13 : f32 to vector<8x8xf32>
    %23 = arith.select %9, %21, %22 : vector<8x8xi1>, vector<8x8xf32>
    %cst_14 = arith.constant dense<0xFF800000> : vector<8xf32>
    %24 = vector.multi_reduction <maximumf>, %23, %cst_14 [1] : vector<8x8xf32> to vector<8xf32>
    %25 = vector.shape_cast %24 : vector<8xf32> to vector<8x1xf32>
    %26 = vector.broadcast %25 : vector<8x1xf32> to vector<8x8xf32>
    %27 = arith.subf %23, %26 : vector<8x8xf32>
    %28 = math.exp %27 : vector<8x8xf32>
    %cst_15 = arith.constant dense<0.000000e+00> : vector<8xf32>
    %29 = vector.multi_reduction <add>, %28, %cst_15 [1] : vector<8x8xf32> to vector<8xf32>
    %30 = vector.shape_cast %29 : vector<8xf32> to vector<8x1xf32>
    %31 = tpu.reciprocal %30 : vector<8x1xf32> -> vector<8x1xf32>
    %32 = vector.broadcast %31 : vector<8x1xf32> to vector<8x8xf32>
    %33 = arith.mulf %28, %32 : vector<8x8xf32>
    %cst_16 = arith.constant dense<0.000000e+00> : vector<8x4xf32>
    %34 = tpu.matmul %33, %10, %cst_16 {dimension_numbers = #tpu.dot_dimension_numbers<[1], [0], [0], [1], [0, 0, 1, 1], [], []>} : vector<8x8xf32>, vector<8x4xf32>, vector<8x4xf32> -> vector<8x4xf32>
    %cst_17 = arith.constant 0.000000e+00 : f32
    %35 = vector.broadcast %cst_17 : f32 to vector<8x4xf32>
    %36 = arith.cmpf ogt, %34, %35 : vector<8x4xf32>
    %cst_18 = arith.constant 0.000000e+00 : f32
    %37 = vector.broadcast %cst_18 : f32 to vector<8x4xf32>
    %38 = arith.minimumf %34, %37 : vector<8x4xf32>
    %39 = math.exp %38 : vector<8x4xf32>
    %cst_19 = arith.constant 1.000000e+00 : f32
    %40 = vector.broadcast %cst_19 : f32 to vector<8x4xf32>
    %41 = arith.subf %39, %40 : vector<8x4xf32>
    %42 = arith.select %36, %34, %41 : vector<8x4xi1>, vector<8x4xf32>
    %c0_20 = arith.constant 0 : index
    %c0_21 = arith.constant 0 : index
    %43 = vector.load %arg5[%c0_20, %c0_21] : memref<64x4xf32, #tpu.memory_space<vmem>>, vector<8x4xf32>
    tpu.vector_store %arg5[%c0_20, %c0_21], %42 {strides = array<i32>} : memref<64x4xf32, #tpu.memory_space<vmem>>, vector<8x4xf32>,
    %44 = vector.extract_strided_slice %2 {offsets = [8, 0], sizes = [8, 4], strides = [1, 1]} : vector<64x4xf32> to vector<8x4xf32>
    %45 = vector.extract_strided_slice %4 {offsets = [8, 0], sizes = [8, 1], strides = [1, 1]} : vector<64x1xf32> to vector<8x1xf32>
    %46 = vector.extract_strided_slice %6 {offsets = [8, 0], sizes = [8, 1], strides = [1, 1]} : vector<64x1xf32> to vector<8x1xf32>
    %47 = tpu.transpose %46, [1, 0] : vector<8x1xf32> -> vector<1x8xf32>
    %48 = vector.broadcast %45 : vector<8x1xf32> to vector<8x8xf32>
    %49 = vector.broadcast %47 : vector<1x8xf32> to vector<8x8xf32>
    %50 = arith.addf %48, %49 : vector<8x8xf32>
    %cst_22 = arith.constant 0.000000e+00 : f32
    %51 = vector.broadcast %cst_22 : f32 to vector<8x8xf32>
    %52 = arith.cmpf ogt, %50, %51 : vector<8x8xf32>
    %cst_23 = arith.constant 1.000000e-01 : f32
    %53 = vector.broadcast %cst_23 : f32 to vector<8x8xf32>
    %54 = arith.mulf %53, %50 : vector<8x8xf32>
    %55 = arith.select %52, %50, %54 : vector<8x8xi1>, vector<8x8xf32>
    %cst_24 = arith.constant -9.000000e+15 : f32
    %56 = vector.broadcast %cst_24 : f32 to vector<8x8xf32>
    %57 = arith.select %9, %55, %56 : vector<8x8xi1>, vector<8x8xf32>
    %cst_25 = arith.constant dense<0xFF800000> : vector<8xf32>
    %58 = vector.multi_reduction <maximumf>, %57, %cst_25 [1] : vector<8x8xf32> to vector<8xf32>
    %59 = vector.shape_cast %58 : vector<8xf32> to vector<8x1xf32>
    %60 = vector.broadcast %59 : vector<8x1xf32> to vector<8x8xf32>
    %61 = arith.subf %57, %60 : vector<8x8xf32>
    %62 = math.exp %61 : vector<8x8xf32>
    %cst_26 = arith.constant dense<0.000000e+00> : vector<8xf32>
    %63 = vector.multi_reduction <add>, %62, %cst_26 [1] : vector<8x8xf32> to vector<8xf32>
    %64 = vector.shape_cast %63 : vector<8xf32> to vector<8x1xf32>
    %65 = tpu.reciprocal %64 : vector<8x1xf32> -> vector<8x1xf32>
    %66 = vector.broadcast %65 : vector<8x1xf32> to vector<8x8xf32>
    %67 = arith.mulf %62, %66 : vector<8x8xf32>
    %cst_27 = arith.constant dense<0.000000e+00> : vector<8x4xf32>
    %68 = tpu.matmul %67, %44, %cst_27 {dimension_numbers = #tpu.dot_dimension_numbers<[1], [0], [0], [1], [0, 0, 1, 1], [], []>} : vector<8x8xf32>, vector<8x4xf32>, vector<8x4xf32> -> vector<8x4xf32>
    %cst_28 = arith.constant 0.000000e+00 : f32
    %69 = vector.broadcast %cst_28 : f32 to vector<8x4xf32>
    %70 = arith.cmpf ogt, %68, %69 : vector<8x4xf32>
    %cst_29 = arith.constant 0.000000e+00 : f32
    %71 = vector.broadcast %cst_29 : f32 to vector<8x4xf32>
    %72 = arith.minimumf %68, %71 : vector<8x4xf32>
    %73 = math.exp %72 : vector<8x4xf32>
    %cst_30 = arith.constant 1.000000e+00 : f32
    %74 = vector.broadcast %cst_30 : f32 to vector<8x4xf32>
    %75 = arith.subf %73, %74 : vector<8x4xf32>
    %76 = arith.select %70, %68, %75 : vector<8x4xi1>, vector<8x4xf32>
    %c8 = arith.constant 8 : index
    %c0_31 = arith.constant 0 : index
    %77 = vector.load %arg5[%c8, %c0_31] : memref<64x4xf32, #tpu.memory_space<vmem>>, vector<8x4xf32>
    tpu.vector_store %arg5[%c8, %c0_31], %76 {strides = array<i32>} : memref<64x4xf32, #tpu.memory_space<vmem>>, vector<8x4xf32>,
    %78 = vector.extract_strided_slice %2 {offsets = [16, 0], sizes = [8, 4], strides = [1, 1]} : vector<64x4xf32> to vector<8x4xf32>
    %79 = vector.extract_strided_slice %4 {offsets = [16, 0], sizes = [8, 1], strides = [1, 1]} : vector<64x1xf32> to vector<8x1xf32>
    %80 = vector.extract_strided_slice %6 {offsets = [16, 0], sizes = [8, 1], strides = [1, 1]} : vector<64x1xf32> to vector<8x1xf32>
    %81 = tpu.transpose %80, [1, 0] : vector<8x1xf32> -> vector<1x8xf32>
    %82 = vector.broadcast %79 : vector<8x1xf32> to vector<8x8xf32>
    %83 = vector.broadcast %81 : vector<1x8xf32> to vector<8x8xf32>
    %84 = arith.addf %82, %83 : vector<8x8xf32>
    %cst_32 = arith.constant 0.000000e+00 : f32
    %85 = vector.broadcast %cst_32 : f32 to vector<8x8xf32>
    %86 = arith.cmpf ogt, %84, %85 : vector<8x8xf32>
    %cst_33 = arith.constant 1.000000e-01 : f32
    %87 = vector.broadcast %cst_33 : f32 to vector<8x8xf32>
    %88 = arith.mulf %87, %84 : vector<8x8xf32>
    %89 = arith.select %86, %84, %88 : vector<8x8xi1>, vector<8x8xf32>
    %cst_34 = arith.constant -9.000000e+15 : f32
    %90 = vector.broadcast %cst_34 : f32 to vector<8x8xf32>
    %91 = arith.select %9, %89, %90 : vector<8x8xi1>, vector<8x8xf32>
    %cst_35 = arith.constant dense<0xFF800000> : vector<8xf32>
    %92 = vector.multi_reduction <maximumf>, %91, %cst_35 [1] : vector<8x8xf32> to vector<8xf32>
    %93 = vector.shape_cast %92 : vector<8xf32> to vector<8x1xf32>
    %94 = vector.broadcast %93 : vector<8x1xf32> to vector<8x8xf32>
    %95 = arith.subf %91, %94 : vector<8x8xf32>
    %96 = math.exp %95 : vector<8x8xf32>
    %cst_36 = arith.constant dense<0.000000e+00> : vector<8xf32>
    %97 = vector.multi_reduction <add>, %96, %cst_36 [1] : vector<8x8xf32> to vector<8xf32>
    %98 = vector.shape_cast %97 : vector<8xf32> to vector<8x1xf32>
    %99 = tpu.reciprocal %98 : vector<8x1xf32> -> vector<8x1xf32>
    %100 = vector.broadcast %99 : vector<8x1xf32> to vector<8x8xf32>
    %101 = arith.mulf %96, %100 : vector<8x8xf32>
    %cst_37 = arith.constant dense<0.000000e+00> : vector<8x4xf32>
    %102 = tpu.matmul %101, %78, %cst_37 {dimension_numbers = #tpu.dot_dimension_numbers<[1], [0], [0], [1], [0, 0, 1, 1], [], []>} : vector<8x8xf32>, vector<8x4xf32>, vector<8x4xf32> -> vector<8x4xf32>
    %cst_38 = arith.constant 0.000000e+00 : f32
    %103 = vector.broadcast %cst_38 : f32 to vector<8x4xf32>
    %104 = arith.cmpf ogt, %102, %103 : vector<8x4xf32>
    %cst_39 = arith.constant 0.000000e+00 : f32
    %105 = vector.broadcast %cst_39 : f32 to vector<8x4xf32>
    %106 = arith.minimumf %102, %105 : vector<8x4xf32>
    %107 = math.exp %106 : vector<8x4xf32>
    %cst_40 = arith.constant 1.000000e+00 : f32
    %108 = vector.broadcast %cst_40 : f32 to vector<8x4xf32>
    %109 = arith.subf %107, %108 : vector<8x4xf32>
    %110 = arith.select %104, %102, %109 : vector<8x4xi1>, vector<8x4xf32>
    %c16 = arith.constant 16 : index
    %c0_41 = arith.constant 0 : index
    %111 = vector.load %arg5[%c16, %c0_41] : memref<64x4xf32, #tpu.memory_space<vmem>>, vector<8x4xf32>
    tpu.vector_store %arg5[%c16, %c0_41], %110 {strides = array<i32>} : memref<64x4xf32, #tpu.memory_space<vmem>>, vector<8x4xf32>,
    %112 = vector.extract_strided_slice %2 {offsets = [24, 0], sizes = [8, 4], strides = [1, 1]} : vector<64x4xf32> to vector<8x4xf32>
    %113 = vector.extract_strided_slice %4 {offsets = [24, 0], sizes = [8, 1], strides = [1, 1]} : vector<64x1xf32> to vector<8x1xf32>
    %114 = vector.extract_strided_slice %6 {offsets = [24, 0], sizes = [8, 1], strides = [1, 1]} : vector<64x1xf32> to vector<8x1xf32>
    %115 = tpu.transpose %114, [1, 0] : vector<8x1xf32> -> vector<1x8xf32>
    %116 = vector.broadcast %113 : vector<8x1xf32> to vector<8x8xf32>
    %117 = vector.broadcast %115 : vector<1x8xf32> to vector<8x8xf32>
    %118 = arith.addf %116, %117 : vector<8x8xf32>
    %cst_42 = arith.constant 0.000000e+00 : f32
    %119 = vector.broadcast %cst_42 : f32 to vector<8x8xf32>
    %120 = arith.cmpf ogt, %118, %119 : vector<8x8xf32>
    %cst_43 = arith.constant 1.000000e-01 : f32
    %121 = vector.broadcast %cst_43 : f32 to vector<8x8xf32>
    %122 = arith.mulf %121, %118 : vector<8x8xf32>
    %123 = arith.select %120, %118, %122 : vector<8x8xi1>, vector<8x8xf32>
    %cst_44 = arith.constant -9.000000e+15 : f32
    %124 = vector.broadcast %cst_44 : f32 to vector<8x8xf32>
    %125 = arith.select %9, %123, %124 : vector<8x8xi1>, vector<8x8xf32>
    %cst_45 = arith.constant dense<0xFF800000> : vector<8xf32>
    %126 = vector.multi_reduction <maximumf>, %125, %cst_45 [1] : vector<8x8xf32> to vector<8xf32>
    %127 = vector.shape_cast %126 : vector<8xf32> to vector<8x1xf32>
    %128 = vector.broadcast %127 : vector<8x1xf32> to vector<8x8xf32>
    %129 = arith.subf %125, %128 : vector<8x8xf32>
    %130 = math.exp %129 : vector<8x8xf32>
    %cst_46 = arith.constant dense<0.000000e+00> : vector<8xf32>
    %131 = vector.multi_reduction <add>, %130, %cst_46 [1] : vector<8x8xf32> to vector<8xf32>
    %132 = vector.shape_cast %131 : vector<8xf32> to vector<8x1xf32>
    %133 = tpu.reciprocal %132 : vector<8x1xf32> -> vector<8x1xf32>
    %134 = vector.broadcast %133 : vector<8x1xf32> to vector<8x8xf32>
    %135 = arith.mulf %130, %134 : vector<8x8xf32>
    %cst_47 = arith.constant dense<0.000000e+00> : vector<8x4xf32>
    %136 = tpu.matmul %135, %112, %cst_47 {dimension_numbers = #tpu.dot_dimension_numbers<[1], [0], [0], [1], [0, 0, 1, 1], [], []>} : vector<8x8xf32>, vector<8x4xf32>, vector<8x4xf32> -> vector<8x4xf32>
    %cst_48 = arith.constant 0.000000e+00 : f32
    %137 = vector.broadcast %cst_48 : f32 to vector<8x4xf32>
    %138 = arith.cmpf ogt, %136, %137 : vector<8x4xf32>
    %cst_49 = arith.constant 0.000000e+00 : f32
    %139 = vector.broadcast %cst_49 : f32 to vector<8x4xf32>
    %140 = arith.minimumf %136, %139 : vector<8x4xf32>
    %141 = math.exp %140 : vector<8x4xf32>
    %cst_50 = arith.constant 1.000000e+00 : f32
    %142 = vector.broadcast %cst_50 : f32 to vector<8x4xf32>
    %143 = arith.subf %141, %142 : vector<8x4xf32>
    %144 = arith.select %138, %136, %143 : vector<8x4xi1>, vector<8x4xf32>
    %c24 = arith.constant 24 : index
    %c0_51 = arith.constant 0 : index
    %145 = vector.load %arg5[%c24, %c0_51] : memref<64x4xf32, #tpu.memory_space<vmem>>, vector<8x4xf32>
    tpu.vector_store %arg5[%c24, %c0_51], %144 {strides = array<i32>} : memref<64x4xf32, #tpu.memory_space<vmem>>, vector<8x4xf32>,
    %146 = vector.extract_strided_slice %2 {offsets = [32, 0], sizes = [8, 4], strides = [1, 1]} : vector<64x4xf32> to vector<8x4xf32>
    %147 = vector.extract_strided_slice %4 {offsets = [32, 0], sizes = [8, 1], strides = [1, 1]} : vector<64x1xf32> to vector<8x1xf32>
    %148 = vector.extract_strided_slice %6 {offsets = [32, 0], sizes = [8, 1], strides = [1, 1]} : vector<64x1xf32> to vector<8x1xf32>
    %149 = tpu.transpose %148, [1, 0] : vector<8x1xf32> -> vector<1x8xf32>
    %150 = vector.broadcast %147 : vector<8x1xf32> to vector<8x8xf32>
    %151 = vector.broadcast %149 : vector<1x8xf32> to vector<8x8xf32>
    %152 = arith.addf %150, %151 : vector<8x8xf32>
    %cst_52 = arith.constant 0.000000e+00 : f32
    %153 = vector.broadcast %cst_52 : f32 to vector<8x8xf32>
    %154 = arith.cmpf ogt, %152, %153 : vector<8x8xf32>
    %cst_53 = arith.constant 1.000000e-01 : f32
    %155 = vector.broadcast %cst_53 : f32 to vector<8x8xf32>
    %156 = arith.mulf %155, %152 : vector<8x8xf32>
    %157 = arith.select %154, %152, %156 : vector<8x8xi1>, vector<8x8xf32>
    %cst_54 = arith.constant -9.000000e+15 : f32
    %158 = vector.broadcast %cst_54 : f32 to vector<8x8xf32>
    %159 = arith.select %9, %157, %158 : vector<8x8xi1>, vector<8x8xf32>
    %cst_55 = arith.constant dense<0xFF800000> : vector<8xf32>
    %160 = vector.multi_reduction <maximumf>, %159, %cst_55 [1] : vector<8x8xf32> to vector<8xf32>
    %161 = vector.shape_cast %160 : vector<8xf32> to vector<8x1xf32>
    %162 = vector.broadcast %161 : vector<8x1xf32> to vector<8x8xf32>
    %163 = arith.subf %159, %162 : vector<8x8xf32>
    %164 = math.exp %163 : vector<8x8xf32>
    %cst_56 = arith.constant dense<0.000000e+00> : vector<8xf32>
    %165 = vector.multi_reduction <add>, %164, %cst_56 [1] : vector<8x8xf32> to vector<8xf32>
    %166 = vector.shape_cast %165 : vector<8xf32> to vector<8x1xf32>
    %167 = tpu.reciprocal %166 : vector<8x1xf32> -> vector<8x1xf32>
    %168 = vector.broadcast %167 : vector<8x1xf32> to vector<8x8xf32>
    %169 = arith.mulf %164, %168 : vector<8x8xf32>
    %cst_57 = arith.constant dense<0.000000e+00> : vector<8x4xf32>
    %170 = tpu.matmul %169, %146, %cst_57 {dimension_numbers = #tpu.dot_dimension_numbers<[1], [0], [0], [1], [0, 0, 1, 1], [], []>} : vector<8x8xf32>, vector<8x4xf32>, vector<8x4xf32> -> vector<8x4xf32>
    %cst_58 = arith.constant 0.000000e+00 : f32
    %171 = vector.broadcast %cst_58 : f32 to vector<8x4xf32>
    %172 = arith.cmpf ogt, %170, %171 : vector<8x4xf32>
    %cst_59 = arith.constant 0.000000e+00 : f32
    %173 = vector.broadcast %cst_59 : f32 to vector<8x4xf32>
    %174 = arith.minimumf %170, %173 : vector<8x4xf32>
    %175 = math.exp %174 : vector<8x4xf32>
    %cst_60 = arith.constant 1.000000e+00 : f32
    %176 = vector.broadcast %cst_60 : f32 to vector<8x4xf32>
    %177 = arith.subf %175, %176 : vector<8x4xf32>
    %178 = arith.select %172, %170, %177 : vector<8x4xi1>, vector<8x4xf32>
    %c32 = arith.constant 32 : index
    %c0_61 = arith.constant 0 : index
    %179 = vector.load %arg5[%c32, %c0_61] : memref<64x4xf32, #tpu.memory_space<vmem>>, vector<8x4xf32>
    tpu.vector_store %arg5[%c32, %c0_61], %178 {strides = array<i32>} : memref<64x4xf32, #tpu.memory_space<vmem>>, vector<8x4xf32>,
    %180 = vector.extract_strided_slice %2 {offsets = [40, 0], sizes = [8, 4], strides = [1, 1]} : vector<64x4xf32> to vector<8x4xf32>
    %181 = vector.extract_strided_slice %4 {offsets = [40, 0], sizes = [8, 1], strides = [1, 1]} : vector<64x1xf32> to vector<8x1xf32>
    %182 = vector.extract_strided_slice %6 {offsets = [40, 0], sizes = [8, 1], strides = [1, 1]} : vector<64x1xf32> to vector<8x1xf32>
    %183 = tpu.transpose %182, [1, 0] : vector<8x1xf32> -> vector<1x8xf32>
    %184 = vector.broadcast %181 : vector<8x1xf32> to vector<8x8xf32>
    %185 = vector.broadcast %183 : vector<1x8xf32> to vector<8x8xf32>
    %186 = arith.addf %184, %185 : vector<8x8xf32>
    %cst_62 = arith.constant 0.000000e+00 : f32
    %187 = vector.broadcast %cst_62 : f32 to vector<8x8xf32>
    %188 = arith.cmpf ogt, %186, %187 : vector<8x8xf32>
    %cst_63 = arith.constant 1.000000e-01 : f32
    %189 = vector.broadcast %cst_63 : f32 to vector<8x8xf32>
    %190 = arith.mulf %189, %186 : vector<8x8xf32>
    %191 = arith.select %188, %186, %190 : vector<8x8xi1>, vector<8x8xf32>
    %cst_64 = arith.constant -9.000000e+15 : f32
    %192 = vector.broadcast %cst_64 : f32 to vector<8x8xf32>
    %193 = arith.select %9, %191, %192 : vector<8x8xi1>, vector<8x8xf32>
    %cst_65 = arith.constant dense<0xFF800000> : vector<8xf32>
    %194 = vector.multi_reduction <maximumf>, %193, %cst_65 [1] : vector<8x8xf32> to vector<8xf32>
    %195 = vector.shape_cast %194 : vector<8xf32> to vector<8x1xf32>
    %196 = vector.broadcast %195 : vector<8x1xf32> to vector<8x8xf32>
    %197 = arith.subf %193, %196 : vector<8x8xf32>
    %198 = math.exp %197 : vector<8x8xf32>
    %cst_66 = arith.constant dense<0.000000e+00> : vector<8xf32>
    %199 = vector.multi_reduction <add>, %198, %cst_66 [1] : vector<8x8xf32> to vector<8xf32>
    %200 = vector.shape_cast %199 : vector<8xf32> to vector<8x1xf32>
    %201 = tpu.reciprocal %200 : vector<8x1xf32> -> vector<8x1xf32>
    %202 = vector.broadcast %201 : vector<8x1xf32> to vector<8x8xf32>
    %203 = arith.mulf %198, %202 : vector<8x8xf32>
    %cst_67 = arith.constant dense<0.000000e+00> : vector<8x4xf32>
    %204 = tpu.matmul %203, %180, %cst_67 {dimension_numbers = #tpu.dot_dimension_numbers<[1], [0], [0], [1], [0, 0, 1, 1], [], []>} : vector<8x8xf32>, vector<8x4xf32>, vector<8x4xf32> -> vector<8x4xf32>
    %cst_68 = arith.constant 0.000000e+00 : f32
    %205 = vector.broadcast %cst_68 : f32 to vector<8x4xf32>
    %206 = arith.cmpf ogt, %204, %205 : vector<8x4xf32>
    %cst_69 = arith.constant 0.000000e+00 : f32
    %207 = vector.broadcast %cst_69 : f32 to vector<8x4xf32>
    %208 = arith.minimumf %204, %207 : vector<8x4xf32>
    %209 = math.exp %208 : vector<8x4xf32>
    %cst_70 = arith.constant 1.000000e+00 : f32
    %210 = vector.broadcast %cst_70 : f32 to vector<8x4xf32>
    %211 = arith.subf %209, %210 : vector<8x4xf32>
    %212 = arith.select %206, %204, %211 : vector<8x4xi1>, vector<8x4xf32>
    %c40 = arith.constant 40 : index
    %c0_71 = arith.constant 0 : index
    %213 = vector.load %arg5[%c40, %c0_71] : memref<64x4xf32, #tpu.memory_space<vmem>>, vector<8x4xf32>
    tpu.vector_store %arg5[%c40, %c0_71], %212 {strides = array<i32>} : memref<64x4xf32, #tpu.memory_space<vmem>>, vector<8x4xf32>,
    %214 = vector.extract_strided_slice %2 {offsets = [48, 0], sizes = [8, 4], strides = [1, 1]} : vector<64x4xf32> to vector<8x4xf32>
    %215 = vector.extract_strided_slice %4 {offsets = [48, 0], sizes = [8, 1], strides = [1, 1]} : vector<64x1xf32> to vector<8x1xf32>
    %216 = vector.extract_strided_slice %6 {offsets = [48, 0], sizes = [8, 1], strides = [1, 1]} : vector<64x1xf32> to vector<8x1xf32>
    %217 = tpu.transpose %216, [1, 0] : vector<8x1xf32> -> vector<1x8xf32>
    %218 = vector.broadcast %215 : vector<8x1xf32> to vector<8x8xf32>
    %219 = vector.broadcast %217 : vector<1x8xf32> to vector<8x8xf32>
    %220 = arith.addf %218, %219 : vector<8x8xf32>
    %cst_72 = arith.constant 0.000000e+00 : f32
    %221 = vector.broadcast %cst_72 : f32 to vector<8x8xf32>
    %222 = arith.cmpf ogt, %220, %221 : vector<8x8xf32>
    %cst_73 = arith.constant 1.000000e-01 : f32
    %223 = vector.broadcast %cst_73 : f32 to vector<8x8xf32>
    %224 = arith.mulf %223, %220 : vector<8x8xf32>
    %225 = arith.select %222, %220, %224 : vector<8x8xi1>, vector<8x8xf32>
    %cst_74 = arith.constant -9.000000e+15 : f32
    %226 = vector.broadcast %cst_74 : f32 to vector<8x8xf32>
    %227 = arith.select %9, %225, %226 : vector<8x8xi1>, vector<8x8xf32>
    %cst_75 = arith.constant dense<0xFF800000> : vector<8xf32>
    %228 = vector.multi_reduction <maximumf>, %227, %cst_75 [1] : vector<8x8xf32> to vector<8xf32>
    %229 = vector.shape_cast %228 : vector<8xf32> to vector<8x1xf32>
    %230 = vector.broadcast %229 : vector<8x1xf32> to vector<8x8xf32>
    %231 = arith.subf %227, %230 : vector<8x8xf32>
    %232 = math.exp %231 : vector<8x8xf32>
    %cst_76 = arith.constant dense<0.000000e+00> : vector<8xf32>
    %233 = vector.multi_reduction <add>, %232, %cst_76 [1] : vector<8x8xf32> to vector<8xf32>
    %234 = vector.shape_cast %233 : vector<8xf32> to vector<8x1xf32>
    %235 = tpu.reciprocal %234 : vector<8x1xf32> -> vector<8x1xf32>
    %236 = vector.broadcast %235 : vector<8x1xf32> to vector<8x8xf32>
    %237 = arith.mulf %232, %236 : vector<8x8xf32>
    %cst_77 = arith.constant dense<0.000000e+00> : vector<8x4xf32>
    %238 = tpu.matmul %237, %214, %cst_77 {dimension_numbers = #tpu.dot_dimension_numbers<[1], [0], [0], [1], [0, 0, 1, 1], [], []>} : vector<8x8xf32>, vector<8x4xf32>, vector<8x4xf32> -> vector<8x4xf32>
    %cst_78 = arith.constant 0.000000e+00 : f32
    %239 = vector.broadcast %cst_78 : f32 to vector<8x4xf32>
    %240 = arith.cmpf ogt, %238, %239 : vector<8x4xf32>
    %cst_79 = arith.constant 0.000000e+00 : f32
    %241 = vector.broadcast %cst_79 : f32 to vector<8x4xf32>
    %242 = arith.minimumf %238, %241 : vector<8x4xf32>
    %243 = math.exp %242 : vector<8x4xf32>
    %cst_80 = arith.constant 1.000000e+00 : f32
    %244 = vector.broadcast %cst_80 : f32 to vector<8x4xf32>
    %245 = arith.subf %243, %244 : vector<8x4xf32>
    %246 = arith.select %240, %238, %245 : vector<8x4xi1>, vector<8x4xf32>
    %c48 = arith.constant 48 : index
    %c0_81 = arith.constant 0 : index
    %247 = vector.load %arg5[%c48, %c0_81] : memref<64x4xf32, #tpu.memory_space<vmem>>, vector<8x4xf32>
    tpu.vector_store %arg5[%c48, %c0_81], %246 {strides = array<i32>} : memref<64x4xf32, #tpu.memory_space<vmem>>, vector<8x4xf32>,
    %248 = vector.extract_strided_slice %2 {offsets = [56, 0], sizes = [8, 4], strides = [1, 1]} : vector<64x4xf32> to vector<8x4xf32>
    %249 = vector.extract_strided_slice %4 {offsets = [56, 0], sizes = [8, 1], strides = [1, 1]} : vector<64x1xf32> to vector<8x1xf32>
    %250 = vector.extract_strided_slice %6 {offsets = [56, 0], sizes = [8, 1], strides = [1, 1]} : vector<64x1xf32> to vector<8x1xf32>
    %251 = tpu.transpose %250, [1, 0] : vector<8x1xf32> -> vector<1x8xf32>
    %252 = vector.broadcast %249 : vector<8x1xf32> to vector<8x8xf32>
    %253 = vector.broadcast %251 : vector<1x8xf32> to vector<8x8xf32>
    %254 = arith.addf %252, %253 : vector<8x8xf32>
    %cst_82 = arith.constant 0.000000e+00 : f32
    %255 = vector.broadcast %cst_82 : f32 to vector<8x8xf32>
    %256 = arith.cmpf ogt, %254, %255 : vector<8x8xf32>
    %cst_83 = arith.constant 1.000000e-01 : f32
    %257 = vector.broadcast %cst_83 : f32 to vector<8x8xf32>
    %258 = arith.mulf %257, %254 : vector<8x8xf32>
    %259 = arith.select %256, %254, %258 : vector<8x8xi1>, vector<8x8xf32>
    %cst_84 = arith.constant -9.000000e+15 : f32
    %260 = vector.broadcast %cst_84 : f32 to vector<8x8xf32>
    %261 = arith.select %9, %259, %260 : vector<8x8xi1>, vector<8x8xf32>
    %cst_85 = arith.constant dense<0xFF800000> : vector<8xf32>
    %262 = vector.multi_reduction <maximumf>, %261, %cst_85 [1] : vector<8x8xf32> to vector<8xf32>
    %263 = vector.shape_cast %262 : vector<8xf32> to vector<8x1xf32>
    %264 = vector.broadcast %263 : vector<8x1xf32> to vector<8x8xf32>
    %265 = arith.subf %261, %264 : vector<8x8xf32>
    %266 = math.exp %265 : vector<8x8xf32>
    %cst_86 = arith.constant dense<0.000000e+00> : vector<8xf32>
    %267 = vector.multi_reduction <add>, %266, %cst_86 [1] : vector<8x8xf32> to vector<8xf32>
    %268 = vector.shape_cast %267 : vector<8xf32> to vector<8x1xf32>
    %269 = tpu.reciprocal %268 : vector<8x1xf32> -> vector<8x1xf32>
    %270 = vector.broadcast %269 : vector<8x1xf32> to vector<8x8xf32>
    %271 = arith.mulf %266, %270 : vector<8x8xf32>
    %cst_87 = arith.constant dense<0.000000e+00> : vector<8x4xf32>
    %272 = tpu.matmul %271, %248, %cst_87 {dimension_numbers = #tpu.dot_dimension_numbers<[1], [0], [0], [1], [0, 0, 1, 1], [], []>} : vector<8x8xf32>, vector<8x4xf32>, vector<8x4xf32> -> vector<8x4xf32>
    %cst_88 = arith.constant 0.000000e+00 : f32
    %273 = vector.broadcast %cst_88 : f32 to vector<8x4xf32>
    %274 = arith.cmpf ogt, %272, %273 : vector<8x4xf32>
    %cst_89 = arith.constant 0.000000e+00 : f32
    %275 = vector.broadcast %cst_89 : f32 to vector<8x4xf32>
    %276 = arith.minimumf %272, %275 : vector<8x4xf32>
    %277 = math.exp %276 : vector<8x4xf32>
    %cst_90 = arith.constant 1.000000e+00 : f32
    %278 = vector.broadcast %cst_90 : f32 to vector<8x4xf32>
    %279 = arith.subf %277, %278 : vector<8x4xf32>
    %280 = arith.select %274, %272, %279 : vector<8x4xi1>, vector<8x4xf32>
    %c56 = arith.constant 56 : index
    %c0_91 = arith.constant 0 : index
    %281 = vector.load %arg5[%c56, %c0_91] : memref<64x4xf32, #tpu.memory_space<vmem>>, vector<8x4xf32>
    tpu.vector_store %arg5[%c56, %c0_91], %280 {strides = array<i32>} : memref<64x4xf32, #tpu.memory_space<vmem>>, vector<8x4xf32>,
    return
  }
}

module attributes {stable_mosaic.version = 11 : i64} {
  func.func @fused_lstm_kernel(%arg0: memref<8x32xf32, #tpu.memory_space<vmem>>, %arg1: memref<8x32xf32, #tpu.memory_space<vmem>>, %arg2: memref<8x32xf32, #tpu.memory_space<vmem>>, %arg3: memref<32x128xf32, #tpu.memory_space<vmem>>, %arg4: memref<32x128xf32, #tpu.memory_space<vmem>>, %arg5: memref<1x128xf32, #tpu.memory_space<vmem>>, %arg6: memref<32x128xf32, #tpu.memory_space<vmem>>, %arg7: memref<32x128xf32, #tpu.memory_space<vmem>>, %arg8: memref<1x128xf32, #tpu.memory_space<vmem>>, %arg9: memref<32x32xf32, #tpu.memory_space<vmem>>, %arg10: memref<1x32xf32, #tpu.memory_space<vmem>>, %arg11: memref<32x128xf32, #tpu.memory_space<vmem>>, %arg12: memref<32x128xf32, #tpu.memory_space<vmem>>, %arg13: memref<1x128xf32, #tpu.memory_space<vmem>>, %arg14: memref<32x32xf32, #tpu.memory_space<vmem>>, %arg15: memref<1x32xf32, #tpu.memory_space<vmem>>, %arg16: memref<1x1xf32, #tpu.memory_space<vmem>>, %arg17: memref<1x1xf32, #tpu.memory_space<vmem>>, %arg18: memref<8x32xf32, #tpu.memory_space<vmem>>, %arg19: memref<8x32xf32, #tpu.memory_space<vmem>>) attributes {dimension_semantics = [], scalar_prefetch = 0 : i64, scratch_operands = 2 : i64, tpu.core_type = #tpu.core_type<tc>} {
    %c0 = arith.constant 0 : index
    %c0_0 = arith.constant 0 : index
    %0 = vector.load %arg0[%c0, %c0_0] : memref<8x32xf32, #tpu.memory_space<vmem>>, vector<8x32xf32>
    %c0_1 = arith.constant 0 : index
    %c0_2 = arith.constant 0 : index
    %1 = vector.load %arg3[%c0_1, %c0_2] : memref<32x128xf32, #tpu.memory_space<vmem>>, vector<32x128xf32>
    %cst = arith.constant dense<0.000000e+00> : vector<8x128xf32>
    %2 = tpu.matmul %0, %1, %cst {dimension_numbers = #tpu.dot_dimension_numbers<[1], [0], [0], [1], [0, 0, 1, 1], [], []>} : vector<8x32xf32>, vector<32x128xf32>, vector<8x128xf32> -> vector<8x128xf32>
    %c0_3 = arith.constant 0 : index
    %c0_4 = arith.constant 0 : index
    %3 = vector.load %arg5[%c0_3, %c0_4] : memref<1x128xf32, #tpu.memory_space<vmem>>, vector<1x128xf32>
    %4 = vector.broadcast %3 : vector<1x128xf32> to vector<8x128xf32>
    %5 = arith.addf %2, %4 : vector<8x128xf32>
    %cst_5 = arith.constant 0.000000e+00 : f32
    %6 = vector.broadcast %cst_5 : f32 to vector<1x32xf32>
    %cst_6 = arith.constant 0.000000e+00 : f32
    %7 = vector.broadcast %cst_6 : f32 to vector<1x32xf32>
    %8 = vector.extract_strided_slice %5 {offsets = [0, 0], sizes = [1, 128], strides = [1, 1]} : vector<8x128xf32> to vector<1x128xf32>
    %c0_7 = arith.constant 0 : index
    %c0_8 = arith.constant 0 : index
    %9 = vector.load %arg4[%c0_7, %c0_8] : memref<32x128xf32, #tpu.memory_space<vmem>>, vector<32x128xf32>
    %cst_9 = arith.constant dense<0.000000e+00> : vector<1x128xf32>
    %10 = tpu.matmul %6, %9, %cst_9 {dimension_numbers = #tpu.dot_dimension_numbers<[1], [0], [0], [1], [0, 0, 1, 1], [], []>} : vector<1x32xf32>, vector<32x128xf32>, vector<1x128xf32> -> vector<1x128xf32>
    %11 = arith.addf %8, %10 : vector<1x128xf32>
    %12 = arith.negf %11 : vector<1x128xf32>
    %13 = math.exp %12 : vector<1x128xf32>
    %cst_10 = arith.constant 1.000000e+00 : f32
    %14 = vector.broadcast %cst_10 : f32 to vector<1x128xf32>
    %15 = arith.addf %14, %13 : vector<1x128xf32>
    %16 = arith.divf %14, %15 : vector<1x128xf32>
    %17 = math.tanh %11 : vector<1x128xf32>
    %18 = vector.extract_strided_slice %16 {offsets = [0, 0], sizes = [1, 32], strides = [1, 1]} : vector<1x128xf32> to vector<1x32xf32>
    %19 = vector.extract_strided_slice %16 {offsets = [0, 32], sizes = [1, 32], strides = [1, 1]} : vector<1x128xf32> to vector<1x32xf32>
    %20 = vector.extract_strided_slice %17 {offsets = [0, 64], sizes = [1, 32], strides = [1, 1]} : vector<1x128xf32> to vector<1x32xf32>
    %21 = vector.extract_strided_slice %16 {offsets = [0, 96], sizes = [1, 32], strides = [1, 1]} : vector<1x128xf32> to vector<1x32xf32>
    %22 = arith.mulf %19, %7 : vector<1x32xf32>
    %23 = arith.mulf %18, %20 : vector<1x32xf32>
    %24 = arith.addf %22, %23 : vector<1x32xf32>
    %25 = math.tanh %24 : vector<1x32xf32>
    %26 = arith.mulf %21, %25 : vector<1x32xf32>
    %27 = vector.extract_strided_slice %5 {offsets = [1, 0], sizes = [1, 128], strides = [1, 1]} : vector<8x128xf32> to vector<1x128xf32>
    %c0_11 = arith.constant 0 : index
    %c0_12 = arith.constant 0 : index
    %28 = vector.load %arg4[%c0_11, %c0_12] : memref<32x128xf32, #tpu.memory_space<vmem>>, vector<32x128xf32>
    %cst_13 = arith.constant dense<0.000000e+00> : vector<1x128xf32>
    %29 = tpu.matmul %26, %28, %cst_13 {dimension_numbers = #tpu.dot_dimension_numbers<[1], [0], [0], [1], [0, 0, 1, 1], [], []>} : vector<1x32xf32>, vector<32x128xf32>, vector<1x128xf32> -> vector<1x128xf32>
    %30 = arith.addf %27, %29 : vector<1x128xf32>
    %31 = arith.negf %30 : vector<1x128xf32>
    %32 = math.exp %31 : vector<1x128xf32>
    %cst_14 = arith.constant 1.000000e+00 : f32
    %33 = vector.broadcast %cst_14 : f32 to vector<1x128xf32>
    %34 = arith.addf %33, %32 : vector<1x128xf32>
    %35 = arith.divf %33, %34 : vector<1x128xf32>
    %36 = math.tanh %30 : vector<1x128xf32>
    %37 = vector.extract_strided_slice %35 {offsets = [0, 0], sizes = [1, 32], strides = [1, 1]} : vector<1x128xf32> to vector<1x32xf32>
    %38 = vector.extract_strided_slice %35 {offsets = [0, 32], sizes = [1, 32], strides = [1, 1]} : vector<1x128xf32> to vector<1x32xf32>
    %39 = vector.extract_strided_slice %36 {offsets = [0, 64], sizes = [1, 32], strides = [1, 1]} : vector<1x128xf32> to vector<1x32xf32>
    %40 = vector.extract_strided_slice %35 {offsets = [0, 96], sizes = [1, 32], strides = [1, 1]} : vector<1x128xf32> to vector<1x32xf32>
    %41 = arith.mulf %38, %24 : vector<1x32xf32>
    %42 = arith.mulf %37, %39 : vector<1x32xf32>
    %43 = arith.addf %41, %42 : vector<1x32xf32>
    %44 = math.tanh %43 : vector<1x32xf32>
    %45 = arith.mulf %40, %44 : vector<1x32xf32>
    %46 = vector.extract_strided_slice %5 {offsets = [2, 0], sizes = [1, 128], strides = [1, 1]} : vector<8x128xf32> to vector<1x128xf32>
    %c0_15 = arith.constant 0 : index
    %c0_16 = arith.constant 0 : index
    %47 = vector.load %arg4[%c0_15, %c0_16] : memref<32x128xf32, #tpu.memory_space<vmem>>, vector<32x128xf32>
    %cst_17 = arith.constant dense<0.000000e+00> : vector<1x128xf32>
    %48 = tpu.matmul %45, %47, %cst_17 {dimension_numbers = #tpu.dot_dimension_numbers<[1], [0], [0], [1], [0, 0, 1, 1], [], []>} : vector<1x32xf32>, vector<32x128xf32>, vector<1x128xf32> -> vector<1x128xf32>
    %49 = arith.addf %46, %48 : vector<1x128xf32>
    %50 = arith.negf %49 : vector<1x128xf32>
    %51 = math.exp %50 : vector<1x128xf32>
    %cst_18 = arith.constant 1.000000e+00 : f32
    %52 = vector.broadcast %cst_18 : f32 to vector<1x128xf32>
    %53 = arith.addf %52, %51 : vector<1x128xf32>
    %54 = arith.divf %52, %53 : vector<1x128xf32>
    %55 = math.tanh %49 : vector<1x128xf32>
    %56 = vector.extract_strided_slice %54 {offsets = [0, 0], sizes = [1, 32], strides = [1, 1]} : vector<1x128xf32> to vector<1x32xf32>
    %57 = vector.extract_strided_slice %54 {offsets = [0, 32], sizes = [1, 32], strides = [1, 1]} : vector<1x128xf32> to vector<1x32xf32>
    %58 = vector.extract_strided_slice %55 {offsets = [0, 64], sizes = [1, 32], strides = [1, 1]} : vector<1x128xf32> to vector<1x32xf32>
    %59 = vector.extract_strided_slice %54 {offsets = [0, 96], sizes = [1, 32], strides = [1, 1]} : vector<1x128xf32> to vector<1x32xf32>
    %60 = arith.mulf %57, %43 : vector<1x32xf32>
    %61 = arith.mulf %56, %58 : vector<1x32xf32>
    %62 = arith.addf %60, %61 : vector<1x32xf32>
    %63 = math.tanh %62 : vector<1x32xf32>
    %64 = arith.mulf %59, %63 : vector<1x32xf32>
    %65 = vector.extract_strided_slice %5 {offsets = [3, 0], sizes = [1, 128], strides = [1, 1]} : vector<8x128xf32> to vector<1x128xf32>
    %c0_19 = arith.constant 0 : index
    %c0_20 = arith.constant 0 : index
    %66 = vector.load %arg4[%c0_19, %c0_20] : memref<32x128xf32, #tpu.memory_space<vmem>>, vector<32x128xf32>
    %cst_21 = arith.constant dense<0.000000e+00> : vector<1x128xf32>
    %67 = tpu.matmul %64, %66, %cst_21 {dimension_numbers = #tpu.dot_dimension_numbers<[1], [0], [0], [1], [0, 0, 1, 1], [], []>} : vector<1x32xf32>, vector<32x128xf32>, vector<1x128xf32> -> vector<1x128xf32>
    %68 = arith.addf %65, %67 : vector<1x128xf32>
    %69 = arith.negf %68 : vector<1x128xf32>
    %70 = math.exp %69 : vector<1x128xf32>
    %cst_22 = arith.constant 1.000000e+00 : f32
    %71 = vector.broadcast %cst_22 : f32 to vector<1x128xf32>
    %72 = arith.addf %71, %70 : vector<1x128xf32>
    %73 = arith.divf %71, %72 : vector<1x128xf32>
    %74 = math.tanh %68 : vector<1x128xf32>
    %75 = vector.extract_strided_slice %73 {offsets = [0, 0], sizes = [1, 32], strides = [1, 1]} : vector<1x128xf32> to vector<1x32xf32>
    %76 = vector.extract_strided_slice %73 {offsets = [0, 32], sizes = [1, 32], strides = [1, 1]} : vector<1x128xf32> to vector<1x32xf32>
    %77 = vector.extract_strided_slice %74 {offsets = [0, 64], sizes = [1, 32], strides = [1, 1]} : vector<1x128xf32> to vector<1x32xf32>
    %78 = vector.extract_strided_slice %73 {offsets = [0, 96], sizes = [1, 32], strides = [1, 1]} : vector<1x128xf32> to vector<1x32xf32>
    %79 = arith.mulf %76, %62 : vector<1x32xf32>
    %80 = arith.mulf %75, %77 : vector<1x32xf32>
    %81 = arith.addf %79, %80 : vector<1x32xf32>
    %82 = math.tanh %81 : vector<1x32xf32>
    %83 = arith.mulf %78, %82 : vector<1x32xf32>
    %84 = vector.extract_strided_slice %5 {offsets = [4, 0], sizes = [1, 128], strides = [1, 1]} : vector<8x128xf32> to vector<1x128xf32>
    %c0_23 = arith.constant 0 : index
    %c0_24 = arith.constant 0 : index
    %85 = vector.load %arg4[%c0_23, %c0_24] : memref<32x128xf32, #tpu.memory_space<vmem>>, vector<32x128xf32>
    %cst_25 = arith.constant dense<0.000000e+00> : vector<1x128xf32>
    %86 = tpu.matmul %83, %85, %cst_25 {dimension_numbers = #tpu.dot_dimension_numbers<[1], [0], [0], [1], [0, 0, 1, 1], [], []>} : vector<1x32xf32>, vector<32x128xf32>, vector<1x128xf32> -> vector<1x128xf32>
    %87 = arith.addf %84, %86 : vector<1x128xf32>
    %88 = arith.negf %87 : vector<1x128xf32>
    %89 = math.exp %88 : vector<1x128xf32>
    %cst_26 = arith.constant 1.000000e+00 : f32
    %90 = vector.broadcast %cst_26 : f32 to vector<1x128xf32>
    %91 = arith.addf %90, %89 : vector<1x128xf32>
    %92 = arith.divf %90, %91 : vector<1x128xf32>
    %93 = math.tanh %87 : vector<1x128xf32>
    %94 = vector.extract_strided_slice %92 {offsets = [0, 0], sizes = [1, 32], strides = [1, 1]} : vector<1x128xf32> to vector<1x32xf32>
    %95 = vector.extract_strided_slice %92 {offsets = [0, 32], sizes = [1, 32], strides = [1, 1]} : vector<1x128xf32> to vector<1x32xf32>
    %96 = vector.extract_strided_slice %93 {offsets = [0, 64], sizes = [1, 32], strides = [1, 1]} : vector<1x128xf32> to vector<1x32xf32>
    %97 = vector.extract_strided_slice %92 {offsets = [0, 96], sizes = [1, 32], strides = [1, 1]} : vector<1x128xf32> to vector<1x32xf32>
    %98 = arith.mulf %95, %81 : vector<1x32xf32>
    %99 = arith.mulf %94, %96 : vector<1x32xf32>
    %100 = arith.addf %98, %99 : vector<1x32xf32>
    %101 = math.tanh %100 : vector<1x32xf32>
    %102 = arith.mulf %97, %101 : vector<1x32xf32>
    %103 = vector.extract_strided_slice %5 {offsets = [5, 0], sizes = [1, 128], strides = [1, 1]} : vector<8x128xf32> to vector<1x128xf32>
    %c0_27 = arith.constant 0 : index
    %c0_28 = arith.constant 0 : index
    %104 = vector.load %arg4[%c0_27, %c0_28] : memref<32x128xf32, #tpu.memory_space<vmem>>, vector<32x128xf32>
    %cst_29 = arith.constant dense<0.000000e+00> : vector<1x128xf32>
    %105 = tpu.matmul %102, %104, %cst_29 {dimension_numbers = #tpu.dot_dimension_numbers<[1], [0], [0], [1], [0, 0, 1, 1], [], []>} : vector<1x32xf32>, vector<32x128xf32>, vector<1x128xf32> -> vector<1x128xf32>
    %106 = arith.addf %103, %105 : vector<1x128xf32>
    %107 = arith.negf %106 : vector<1x128xf32>
    %108 = math.exp %107 : vector<1x128xf32>
    %cst_30 = arith.constant 1.000000e+00 : f32
    %109 = vector.broadcast %cst_30 : f32 to vector<1x128xf32>
    %110 = arith.addf %109, %108 : vector<1x128xf32>
    %111 = arith.divf %109, %110 : vector<1x128xf32>
    %112 = math.tanh %106 : vector<1x128xf32>
    %113 = vector.extract_strided_slice %111 {offsets = [0, 0], sizes = [1, 32], strides = [1, 1]} : vector<1x128xf32> to vector<1x32xf32>
    %114 = vector.extract_strided_slice %111 {offsets = [0, 32], sizes = [1, 32], strides = [1, 1]} : vector<1x128xf32> to vector<1x32xf32>
    %115 = vector.extract_strided_slice %112 {offsets = [0, 64], sizes = [1, 32], strides = [1, 1]} : vector<1x128xf32> to vector<1x32xf32>
    %116 = vector.extract_strided_slice %111 {offsets = [0, 96], sizes = [1, 32], strides = [1, 1]} : vector<1x128xf32> to vector<1x32xf32>
    %117 = arith.mulf %114, %100 : vector<1x32xf32>
    %118 = arith.mulf %113, %115 : vector<1x32xf32>
    %119 = arith.addf %117, %118 : vector<1x32xf32>
    %120 = math.tanh %119 : vector<1x32xf32>
    %121 = arith.mulf %116, %120 : vector<1x32xf32>
    %122 = vector.extract_strided_slice %5 {offsets = [6, 0], sizes = [1, 128], strides = [1, 1]} : vector<8x128xf32> to vector<1x128xf32>
    %c0_31 = arith.constant 0 : index
    %c0_32 = arith.constant 0 : index
    %123 = vector.load %arg4[%c0_31, %c0_32] : memref<32x128xf32, #tpu.memory_space<vmem>>, vector<32x128xf32>
    %cst_33 = arith.constant dense<0.000000e+00> : vector<1x128xf32>
    %124 = tpu.matmul %121, %123, %cst_33 {dimension_numbers = #tpu.dot_dimension_numbers<[1], [0], [0], [1], [0, 0, 1, 1], [], []>} : vector<1x32xf32>, vector<32x128xf32>, vector<1x128xf32> -> vector<1x128xf32>
    %125 = arith.addf %122, %124 : vector<1x128xf32>
    %126 = arith.negf %125 : vector<1x128xf32>
    %127 = math.exp %126 : vector<1x128xf32>
    %cst_34 = arith.constant 1.000000e+00 : f32
    %128 = vector.broadcast %cst_34 : f32 to vector<1x128xf32>
    %129 = arith.addf %128, %127 : vector<1x128xf32>
    %130 = arith.divf %128, %129 : vector<1x128xf32>
    %131 = math.tanh %125 : vector<1x128xf32>
    %132 = vector.extract_strided_slice %130 {offsets = [0, 0], sizes = [1, 32], strides = [1, 1]} : vector<1x128xf32> to vector<1x32xf32>
    %133 = vector.extract_strided_slice %130 {offsets = [0, 32], sizes = [1, 32], strides = [1, 1]} : vector<1x128xf32> to vector<1x32xf32>
    %134 = vector.extract_strided_slice %131 {offsets = [0, 64], sizes = [1, 32], strides = [1, 1]} : vector<1x128xf32> to vector<1x32xf32>
    %135 = vector.extract_strided_slice %130 {offsets = [0, 96], sizes = [1, 32], strides = [1, 1]} : vector<1x128xf32> to vector<1x32xf32>
    %136 = arith.mulf %133, %119 : vector<1x32xf32>
    %137 = arith.mulf %132, %134 : vector<1x32xf32>
    %138 = arith.addf %136, %137 : vector<1x32xf32>
    %139 = math.tanh %138 : vector<1x32xf32>
    %140 = arith.mulf %135, %139 : vector<1x32xf32>
    %141 = vector.extract_strided_slice %5 {offsets = [7, 0], sizes = [1, 128], strides = [1, 1]} : vector<8x128xf32> to vector<1x128xf32>
    %c0_35 = arith.constant 0 : index
    %c0_36 = arith.constant 0 : index
    %142 = vector.load %arg4[%c0_35, %c0_36] : memref<32x128xf32, #tpu.memory_space<vmem>>, vector<32x128xf32>
    %cst_37 = arith.constant dense<0.000000e+00> : vector<1x128xf32>
    %143 = tpu.matmul %140, %142, %cst_37 {dimension_numbers = #tpu.dot_dimension_numbers<[1], [0], [0], [1], [0, 0, 1, 1], [], []>} : vector<1x32xf32>, vector<32x128xf32>, vector<1x128xf32> -> vector<1x128xf32>
    %144 = arith.addf %141, %143 : vector<1x128xf32>
    %145 = arith.negf %144 : vector<1x128xf32>
    %146 = math.exp %145 : vector<1x128xf32>
    %cst_38 = arith.constant 1.000000e+00 : f32
    %147 = vector.broadcast %cst_38 : f32 to vector<1x128xf32>
    %148 = arith.addf %147, %146 : vector<1x128xf32>
    %149 = arith.divf %147, %148 : vector<1x128xf32>
    %150 = math.tanh %144 : vector<1x128xf32>
    %151 = vector.extract_strided_slice %149 {offsets = [0, 0], sizes = [1, 32], strides = [1, 1]} : vector<1x128xf32> to vector<1x32xf32>
    %152 = vector.extract_strided_slice %149 {offsets = [0, 32], sizes = [1, 32], strides = [1, 1]} : vector<1x128xf32> to vector<1x32xf32>
    %153 = vector.extract_strided_slice %150 {offsets = [0, 64], sizes = [1, 32], strides = [1, 1]} : vector<1x128xf32> to vector<1x32xf32>
    %154 = vector.extract_strided_slice %149 {offsets = [0, 96], sizes = [1, 32], strides = [1, 1]} : vector<1x128xf32> to vector<1x32xf32>
    %155 = arith.mulf %152, %138 : vector<1x32xf32>
    %156 = arith.mulf %151, %153 : vector<1x32xf32>
    %157 = arith.addf %155, %156 : vector<1x32xf32>
    %158 = math.tanh %157 : vector<1x32xf32>
    %159 = arith.mulf %154, %158 : vector<1x32xf32>
    %c0_39 = arith.constant 0 : index
    %c0_40 = arith.constant 0 : index
    %160 = vector.load %arg7[%c0_39, %c0_40] : memref<32x128xf32, #tpu.memory_space<vmem>>, vector<32x128xf32>
    %c0_41 = arith.constant 0 : index
    %c0_42 = arith.constant 0 : index
    %161 = vector.load %arg9[%c0_41, %c0_42] : memref<32x32xf32, #tpu.memory_space<vmem>>, vector<32x32xf32>
    %c0_43 = arith.constant 0 : index
    %c0_44 = arith.constant 0 : index
    %162 = vector.load %arg6[%c0_43, %c0_44] : memref<32x128xf32, #tpu.memory_space<vmem>>, vector<32x128xf32>
    %cst_45 = arith.constant dense<0.000000e+00> : vector<32x128xf32>
    %163 = tpu.matmul %161, %162, %cst_45 {dimension_numbers = #tpu.dot_dimension_numbers<[1], [0], [0], [1], [0, 0, 1, 1], [], []>} : vector<32x32xf32>, vector<32x128xf32>, vector<32x128xf32> -> vector<32x128xf32>
    %164 = arith.addf %160, %163 : vector<32x128xf32>
    %c0_46 = arith.constant 0 : index
    %c0_47 = arith.constant 0 : index
    %165 = vector.load %arg8[%c0_46, %c0_47] : memref<1x128xf32, #tpu.memory_space<vmem>>, vector<1x128xf32>
    %c0_48 = arith.constant 0 : index
    %c0_49 = arith.constant 0 : index
    %166 = vector.load %arg10[%c0_48, %c0_49] : memref<1x32xf32, #tpu.memory_space<vmem>>, vector<1x32xf32>
    %c0_50 = arith.constant 0 : index
    %c0_51 = arith.constant 0 : index
    %167 = vector.load %arg6[%c0_50, %c0_51] : memref<32x128xf32, #tpu.memory_space<vmem>>, vector<32x128xf32>
    %cst_52 = arith.constant dense<0.000000e+00> : vector<1x128xf32>
    %168 = tpu.matmul %166, %167, %cst_52 {dimension_numbers = #tpu.dot_dimension_numbers<[1], [0], [0], [1], [0, 0, 1, 1], [], []>} : vector<1x32xf32>, vector<32x128xf32>, vector<1x128xf32> -> vector<1x128xf32>
    %169 = arith.addf %165, %168 : vector<1x128xf32>
    %c0_53 = arith.constant 0 : index
    %c0_54 = arith.constant 0 : index
    %170 = vector.load %arg12[%c0_53, %c0_54] : memref<32x128xf32, #tpu.memory_space<vmem>>, vector<32x128xf32>
    %c0_55 = arith.constant 0 : index
    %c0_56 = arith.constant 0 : index
    %171 = vector.load %arg14[%c0_55, %c0_56] : memref<32x32xf32, #tpu.memory_space<vmem>>, vector<32x32xf32>
    %c0_57 = arith.constant 0 : index
    %c0_58 = arith.constant 0 : index
    %172 = vector.load %arg11[%c0_57, %c0_58] : memref<32x128xf32, #tpu.memory_space<vmem>>, vector<32x128xf32>
    %cst_59 = arith.constant dense<0.000000e+00> : vector<32x128xf32>
    %173 = tpu.matmul %171, %172, %cst_59 {dimension_numbers = #tpu.dot_dimension_numbers<[1], [0], [0], [1], [0, 0, 1, 1], [], []>} : vector<32x32xf32>, vector<32x128xf32>, vector<32x128xf32> -> vector<32x128xf32>
    %174 = arith.addf %170, %173 : vector<32x128xf32>
    %c0_60 = arith.constant 0 : index
    %c0_61 = arith.constant 0 : index
    %175 = vector.load %arg13[%c0_60, %c0_61] : memref<1x128xf32, #tpu.memory_space<vmem>>, vector<1x128xf32>
    %c0_62 = arith.constant 0 : index
    %c0_63 = arith.constant 0 : index
    %176 = vector.load %arg15[%c0_62, %c0_63] : memref<1x32xf32, #tpu.memory_space<vmem>>, vector<1x32xf32>
    %c0_64 = arith.constant 0 : index
    %c0_65 = arith.constant 0 : index
    %177 = vector.load %arg11[%c0_64, %c0_65] : memref<32x128xf32, #tpu.memory_space<vmem>>, vector<32x128xf32>
    %cst_66 = arith.constant dense<0.000000e+00> : vector<1x128xf32>
    %178 = tpu.matmul %176, %177, %cst_66 {dimension_numbers = #tpu.dot_dimension_numbers<[1], [0], [0], [1], [0, 0, 1, 1], [], []>} : vector<1x32xf32>, vector<32x128xf32>, vector<1x128xf32> -> vector<1x128xf32>
    %179 = arith.addf %175, %178 : vector<1x128xf32>
    %c0_67 = arith.constant 0 : index
    %c0_68 = arith.constant 0 : index
    %180 = vector.load %arg7[%c0_67, %c0_68] : memref<32x128xf32, #tpu.memory_space<vmem>>, vector<32x128xf32>
    %cst_69 = arith.constant dense<0.000000e+00> : vector<1x128xf32>
    %181 = tpu.matmul %159, %180, %cst_69 {dimension_numbers = #tpu.dot_dimension_numbers<[1], [0], [0], [1], [0, 0, 1, 1], [], []>} : vector<1x32xf32>, vector<32x128xf32>, vector<1x128xf32> -> vector<1x128xf32>
    %c0_70 = arith.constant 0 : index
    %c0_71 = arith.constant 0 : index
    %182 = vector.load %arg8[%c0_70, %c0_71] : memref<1x128xf32, #tpu.memory_space<vmem>>, vector<1x128xf32>
    %183 = arith.addf %181, %182 : vector<1x128xf32>
    %c0_72 = arith.constant 0 : index
    %c0_73 = arith.constant 0 : index
    %184 = vector.load %arg12[%c0_72, %c0_73] : memref<32x128xf32, #tpu.memory_space<vmem>>, vector<32x128xf32>
    %cst_74 = arith.constant dense<0.000000e+00> : vector<1x128xf32>
    %185 = tpu.matmul %159, %184, %cst_74 {dimension_numbers = #tpu.dot_dimension_numbers<[1], [0], [0], [1], [0, 0, 1, 1], [], []>} : vector<1x32xf32>, vector<32x128xf32>, vector<1x128xf32> -> vector<1x128xf32>
    %c0_75 = arith.constant 0 : index
    %c0_76 = arith.constant 0 : index
    %186 = vector.load %arg13[%c0_75, %c0_76] : memref<1x128xf32, #tpu.memory_space<vmem>>, vector<1x128xf32>
    %187 = arith.addf %185, %186 : vector<1x128xf32>
    %188 = arith.negf %183 : vector<1x128xf32>
    %189 = math.exp %188 : vector<1x128xf32>
    %cst_77 = arith.constant 1.000000e+00 : f32
    %190 = vector.broadcast %cst_77 : f32 to vector<1x128xf32>
    %191 = arith.addf %190, %189 : vector<1x128xf32>
    %192 = arith.divf %190, %191 : vector<1x128xf32>
    %193 = math.tanh %183 : vector<1x128xf32>
    %194 = vector.extract_strided_slice %192 {offsets = [0, 0], sizes = [1, 32], strides = [1, 1]} : vector<1x128xf32> to vector<1x32xf32>
    %195 = vector.extract_strided_slice %192 {offsets = [0, 32], sizes = [1, 32], strides = [1, 1]} : vector<1x128xf32> to vector<1x32xf32>
    %196 = vector.extract_strided_slice %193 {offsets = [0, 64], sizes = [1, 32], strides = [1, 1]} : vector<1x128xf32> to vector<1x32xf32>
    %197 = vector.extract_strided_slice %192 {offsets = [0, 96], sizes = [1, 32], strides = [1, 1]} : vector<1x128xf32> to vector<1x32xf32>
    %198 = arith.mulf %195, %157 : vector<1x32xf32>
    %199 = arith.mulf %194, %196 : vector<1x32xf32>
    %200 = arith.addf %198, %199 : vector<1x32xf32>
    %201 = math.tanh %200 : vector<1x32xf32>
    %202 = arith.mulf %197, %201 : vector<1x32xf32>
    %203 = arith.negf %187 : vector<1x128xf32>
    %204 = math.exp %203 : vector<1x128xf32>
    %cst_78 = arith.constant 1.000000e+00 : f32
    %205 = vector.broadcast %cst_78 : f32 to vector<1x128xf32>
    %206 = arith.addf %205, %204 : vector<1x128xf32>
    %207 = arith.divf %205, %206 : vector<1x128xf32>
    %208 = math.tanh %187 : vector<1x128xf32>
    %209 = vector.extract_strided_slice %207 {offsets = [0, 0], sizes = [1, 32], strides = [1, 1]} : vector<1x128xf32> to vector<1x32xf32>
    %210 = vector.extract_strided_slice %207 {offsets = [0, 32], sizes = [1, 32], strides = [1, 1]} : vector<1x128xf32> to vector<1x32xf32>
    %211 = vector.extract_strided_slice %208 {offsets = [0, 64], sizes = [1, 32], strides = [1, 1]} : vector<1x128xf32> to vector<1x32xf32>
    %212 = vector.extract_strided_slice %207 {offsets = [0, 96], sizes = [1, 32], strides = [1, 1]} : vector<1x128xf32> to vector<1x32xf32>
    %213 = arith.mulf %210, %157 : vector<1x32xf32>
    %214 = arith.mulf %209, %211 : vector<1x32xf32>
    %215 = arith.addf %213, %214 : vector<1x32xf32>
    %216 = math.tanh %215 : vector<1x32xf32>
    %217 = arith.mulf %212, %216 : vector<1x32xf32>
    %c0_79 = arith.constant 0 : index
    %c0_80 = arith.constant 0 : index
    %218 = vector.load %arg18[%c0_79, %c0_80] : memref<8x32xf32, #tpu.memory_space<vmem>>, vector<1x32xf32>
    tpu.vector_store %arg18[%c0_79, %c0_80], %202 {strides = array<i32>} : memref<8x32xf32, #tpu.memory_space<vmem>>, vector<1x32xf32>,
    %c7 = arith.constant 7 : index
    %c0_81 = arith.constant 0 : index
    %219 = vector.load %arg19[%c7, %c0_81] : memref<8x32xf32, #tpu.memory_space<vmem>>, vector<1x32xf32>
    tpu.vector_store %arg19[%c7, %c0_81], %217 {strides = array<i32>} : memref<8x32xf32, #tpu.memory_space<vmem>>, vector<1x32xf32>,
    %cst_82 = arith.constant dense<0.000000e+00> : vector<1x128xf32>
    %220 = tpu.matmul %202, %164, %cst_82 {dimension_numbers = #tpu.dot_dimension_numbers<[1], [0], [0], [1], [0, 0, 1, 1], [], []>} : vector<1x32xf32>, vector<32x128xf32>, vector<1x128xf32> -> vector<1x128xf32>
    %221 = arith.addf %220, %169 : vector<1x128xf32>
    %cst_83 = arith.constant dense<0.000000e+00> : vector<1x128xf32>
    %222 = tpu.matmul %217, %174, %cst_83 {dimension_numbers = #tpu.dot_dimension_numbers<[1], [0], [0], [1], [0, 0, 1, 1], [], []>} : vector<1x32xf32>, vector<32x128xf32>, vector<1x128xf32> -> vector<1x128xf32>
    %223 = arith.addf %222, %179 : vector<1x128xf32>
    %224 = arith.negf %221 : vector<1x128xf32>
    %225 = math.exp %224 : vector<1x128xf32>
    %cst_84 = arith.constant 1.000000e+00 : f32
    %226 = vector.broadcast %cst_84 : f32 to vector<1x128xf32>
    %227 = arith.addf %226, %225 : vector<1x128xf32>
    %228 = arith.divf %226, %227 : vector<1x128xf32>
    %229 = math.tanh %221 : vector<1x128xf32>
    %230 = vector.extract_strided_slice %228 {offsets = [0, 0], sizes = [1, 32], strides = [1, 1]} : vector<1x128xf32> to vector<1x32xf32>
    %231 = vector.extract_strided_slice %228 {offsets = [0, 32], sizes = [1, 32], strides = [1, 1]} : vector<1x128xf32> to vector<1x32xf32>
    %232 = vector.extract_strided_slice %229 {offsets = [0, 64], sizes = [1, 32], strides = [1, 1]} : vector<1x128xf32> to vector<1x32xf32>
    %233 = vector.extract_strided_slice %228 {offsets = [0, 96], sizes = [1, 32], strides = [1, 1]} : vector<1x128xf32> to vector<1x32xf32>
    %234 = arith.mulf %231, %200 : vector<1x32xf32>
    %235 = arith.mulf %230, %232 : vector<1x32xf32>
    %236 = arith.addf %234, %235 : vector<1x32xf32>
    %237 = math.tanh %236 : vector<1x32xf32>
    %238 = arith.mulf %233, %237 : vector<1x32xf32>
    %239 = arith.negf %223 : vector<1x128xf32>
    %240 = math.exp %239 : vector<1x128xf32>
    %cst_85 = arith.constant 1.000000e+00 : f32
    %241 = vector.broadcast %cst_85 : f32 to vector<1x128xf32>
    %242 = arith.addf %241, %240 : vector<1x128xf32>
    %243 = arith.divf %241, %242 : vector<1x128xf32>
    %244 = math.tanh %223 : vector<1x128xf32>
    %245 = vector.extract_strided_slice %243 {offsets = [0, 0], sizes = [1, 32], strides = [1, 1]} : vector<1x128xf32> to vector<1x32xf32>
    %246 = vector.extract_strided_slice %243 {offsets = [0, 32], sizes = [1, 32], strides = [1, 1]} : vector<1x128xf32> to vector<1x32xf32>
    %247 = vector.extract_strided_slice %244 {offsets = [0, 64], sizes = [1, 32], strides = [1, 1]} : vector<1x128xf32> to vector<1x32xf32>
    %248 = vector.extract_strided_slice %243 {offsets = [0, 96], sizes = [1, 32], strides = [1, 1]} : vector<1x128xf32> to vector<1x32xf32>
    %249 = arith.mulf %246, %215 : vector<1x32xf32>
    %250 = arith.mulf %245, %247 : vector<1x32xf32>
    %251 = arith.addf %249, %250 : vector<1x32xf32>
    %252 = math.tanh %251 : vector<1x32xf32>
    %253 = arith.mulf %248, %252 : vector<1x32xf32>
    %c1 = arith.constant 1 : index
    %c0_86 = arith.constant 0 : index
    %254 = vector.load %arg18[%c1, %c0_86] : memref<8x32xf32, #tpu.memory_space<vmem>>, vector<1x32xf32>
    tpu.vector_store %arg18[%c1, %c0_86], %238 {strides = array<i32>} : memref<8x32xf32, #tpu.memory_space<vmem>>, vector<1x32xf32>,
    %c6 = arith.constant 6 : index
    %c0_87 = arith.constant 0 : index
    %255 = vector.load %arg19[%c6, %c0_87] : memref<8x32xf32, #tpu.memory_space<vmem>>, vector<1x32xf32>
    tpu.vector_store %arg19[%c6, %c0_87], %253 {strides = array<i32>} : memref<8x32xf32, #tpu.memory_space<vmem>>, vector<1x32xf32>,
    %cst_88 = arith.constant dense<0.000000e+00> : vector<1x128xf32>
    %256 = tpu.matmul %238, %164, %cst_88 {dimension_numbers = #tpu.dot_dimension_numbers<[1], [0], [0], [1], [0, 0, 1, 1], [], []>} : vector<1x32xf32>, vector<32x128xf32>, vector<1x128xf32> -> vector<1x128xf32>
    %257 = arith.addf %256, %169 : vector<1x128xf32>
    %cst_89 = arith.constant dense<0.000000e+00> : vector<1x128xf32>
    %258 = tpu.matmul %253, %174, %cst_89 {dimension_numbers = #tpu.dot_dimension_numbers<[1], [0], [0], [1], [0, 0, 1, 1], [], []>} : vector<1x32xf32>, vector<32x128xf32>, vector<1x128xf32> -> vector<1x128xf32>
    %259 = arith.addf %258, %179 : vector<1x128xf32>
    %260 = arith.negf %257 : vector<1x128xf32>
    %261 = math.exp %260 : vector<1x128xf32>
    %cst_90 = arith.constant 1.000000e+00 : f32
    %262 = vector.broadcast %cst_90 : f32 to vector<1x128xf32>
    %263 = arith.addf %262, %261 : vector<1x128xf32>
    %264 = arith.divf %262, %263 : vector<1x128xf32>
    %265 = math.tanh %257 : vector<1x128xf32>
    %266 = vector.extract_strided_slice %264 {offsets = [0, 0], sizes = [1, 32], strides = [1, 1]} : vector<1x128xf32> to vector<1x32xf32>
    %267 = vector.extract_strided_slice %264 {offsets = [0, 32], sizes = [1, 32], strides = [1, 1]} : vector<1x128xf32> to vector<1x32xf32>
    %268 = vector.extract_strided_slice %265 {offsets = [0, 64], sizes = [1, 32], strides = [1, 1]} : vector<1x128xf32> to vector<1x32xf32>
    %269 = vector.extract_strided_slice %264 {offsets = [0, 96], sizes = [1, 32], strides = [1, 1]} : vector<1x128xf32> to vector<1x32xf32>
    %270 = arith.mulf %267, %236 : vector<1x32xf32>
    %271 = arith.mulf %266, %268 : vector<1x32xf32>
    %272 = arith.addf %270, %271 : vector<1x32xf32>
    %273 = math.tanh %272 : vector<1x32xf32>
    %274 = arith.mulf %269, %273 : vector<1x32xf32>
    %275 = arith.negf %259 : vector<1x128xf32>
    %276 = math.exp %275 : vector<1x128xf32>
    %cst_91 = arith.constant 1.000000e+00 : f32
    %277 = vector.broadcast %cst_91 : f32 to vector<1x128xf32>
    %278 = arith.addf %277, %276 : vector<1x128xf32>
    %279 = arith.divf %277, %278 : vector<1x128xf32>
    %280 = math.tanh %259 : vector<1x128xf32>
    %281 = vector.extract_strided_slice %279 {offsets = [0, 0], sizes = [1, 32], strides = [1, 1]} : vector<1x128xf32> to vector<1x32xf32>
    %282 = vector.extract_strided_slice %279 {offsets = [0, 32], sizes = [1, 32], strides = [1, 1]} : vector<1x128xf32> to vector<1x32xf32>
    %283 = vector.extract_strided_slice %280 {offsets = [0, 64], sizes = [1, 32], strides = [1, 1]} : vector<1x128xf32> to vector<1x32xf32>
    %284 = vector.extract_strided_slice %279 {offsets = [0, 96], sizes = [1, 32], strides = [1, 1]} : vector<1x128xf32> to vector<1x32xf32>
    %285 = arith.mulf %282, %251 : vector<1x32xf32>
    %286 = arith.mulf %281, %283 : vector<1x32xf32>
    %287 = arith.addf %285, %286 : vector<1x32xf32>
    %288 = math.tanh %287 : vector<1x32xf32>
    %289 = arith.mulf %284, %288 : vector<1x32xf32>
    %c2 = arith.constant 2 : index
    %c0_92 = arith.constant 0 : index
    %290 = vector.load %arg18[%c2, %c0_92] : memref<8x32xf32, #tpu.memory_space<vmem>>, vector<1x32xf32>
    tpu.vector_store %arg18[%c2, %c0_92], %274 {strides = array<i32>} : memref<8x32xf32, #tpu.memory_space<vmem>>, vector<1x32xf32>,
    %c5 = arith.constant 5 : index
    %c0_93 = arith.constant 0 : index
    %291 = vector.load %arg19[%c5, %c0_93] : memref<8x32xf32, #tpu.memory_space<vmem>>, vector<1x32xf32>
    tpu.vector_store %arg19[%c5, %c0_93], %289 {strides = array<i32>} : memref<8x32xf32, #tpu.memory_space<vmem>>, vector<1x32xf32>,
    %cst_94 = arith.constant dense<0.000000e+00> : vector<1x128xf32>
    %292 = tpu.matmul %274, %164, %cst_94 {dimension_numbers = #tpu.dot_dimension_numbers<[1], [0], [0], [1], [0, 0, 1, 1], [], []>} : vector<1x32xf32>, vector<32x128xf32>, vector<1x128xf32> -> vector<1x128xf32>
    %293 = arith.addf %292, %169 : vector<1x128xf32>
    %cst_95 = arith.constant dense<0.000000e+00> : vector<1x128xf32>
    %294 = tpu.matmul %289, %174, %cst_95 {dimension_numbers = #tpu.dot_dimension_numbers<[1], [0], [0], [1], [0, 0, 1, 1], [], []>} : vector<1x32xf32>, vector<32x128xf32>, vector<1x128xf32> -> vector<1x128xf32>
    %295 = arith.addf %294, %179 : vector<1x128xf32>
    %296 = arith.negf %293 : vector<1x128xf32>
    %297 = math.exp %296 : vector<1x128xf32>
    %cst_96 = arith.constant 1.000000e+00 : f32
    %298 = vector.broadcast %cst_96 : f32 to vector<1x128xf32>
    %299 = arith.addf %298, %297 : vector<1x128xf32>
    %300 = arith.divf %298, %299 : vector<1x128xf32>
    %301 = math.tanh %293 : vector<1x128xf32>
    %302 = vector.extract_strided_slice %300 {offsets = [0, 0], sizes = [1, 32], strides = [1, 1]} : vector<1x128xf32> to vector<1x32xf32>
    %303 = vector.extract_strided_slice %300 {offsets = [0, 32], sizes = [1, 32], strides = [1, 1]} : vector<1x128xf32> to vector<1x32xf32>
    %304 = vector.extract_strided_slice %301 {offsets = [0, 64], sizes = [1, 32], strides = [1, 1]} : vector<1x128xf32> to vector<1x32xf32>
    %305 = vector.extract_strided_slice %300 {offsets = [0, 96], sizes = [1, 32], strides = [1, 1]} : vector<1x128xf32> to vector<1x32xf32>
    %306 = arith.mulf %303, %272 : vector<1x32xf32>
    %307 = arith.mulf %302, %304 : vector<1x32xf32>
    %308 = arith.addf %306, %307 : vector<1x32xf32>
    %309 = math.tanh %308 : vector<1x32xf32>
    %310 = arith.mulf %305, %309 : vector<1x32xf32>
    %311 = arith.negf %295 : vector<1x128xf32>
    %312 = math.exp %311 : vector<1x128xf32>
    %cst_97 = arith.constant 1.000000e+00 : f32
    %313 = vector.broadcast %cst_97 : f32 to vector<1x128xf32>
    %314 = arith.addf %313, %312 : vector<1x128xf32>
    %315 = arith.divf %313, %314 : vector<1x128xf32>
    %316 = math.tanh %295 : vector<1x128xf32>
    %317 = vector.extract_strided_slice %315 {offsets = [0, 0], sizes = [1, 32], strides = [1, 1]} : vector<1x128xf32> to vector<1x32xf32>
    %318 = vector.extract_strided_slice %315 {offsets = [0, 32], sizes = [1, 32], strides = [1, 1]} : vector<1x128xf32> to vector<1x32xf32>
    %319 = vector.extract_strided_slice %316 {offsets = [0, 64], sizes = [1, 32], strides = [1, 1]} : vector<1x128xf32> to vector<1x32xf32>
    %320 = vector.extract_strided_slice %315 {offsets = [0, 96], sizes = [1, 32], strides = [1, 1]} : vector<1x128xf32> to vector<1x32xf32>
    %321 = arith.mulf %318, %287 : vector<1x32xf32>
    %322 = arith.mulf %317, %319 : vector<1x32xf32>
    %323 = arith.addf %321, %322 : vector<1x32xf32>
    %324 = math.tanh %323 : vector<1x32xf32>
    %325 = arith.mulf %320, %324 : vector<1x32xf32>
    %c3 = arith.constant 3 : index
    %c0_98 = arith.constant 0 : index
    %326 = vector.load %arg18[%c3, %c0_98] : memref<8x32xf32, #tpu.memory_space<vmem>>, vector<1x32xf32>
    tpu.vector_store %arg18[%c3, %c0_98], %310 {strides = array<i32>} : memref<8x32xf32, #tpu.memory_space<vmem>>, vector<1x32xf32>,
    %c4 = arith.constant 4 : index
    %c0_99 = arith.constant 0 : index
    %327 = vector.load %arg19[%c4, %c0_99] : memref<8x32xf32, #tpu.memory_space<vmem>>, vector<1x32xf32>
    tpu.vector_store %arg19[%c4, %c0_99], %325 {strides = array<i32>} : memref<8x32xf32, #tpu.memory_space<vmem>>, vector<1x32xf32>,
    %cst_100 = arith.constant dense<0.000000e+00> : vector<1x128xf32>
    %328 = tpu.matmul %310, %164, %cst_100 {dimension_numbers = #tpu.dot_dimension_numbers<[1], [0], [0], [1], [0, 0, 1, 1], [], []>} : vector<1x32xf32>, vector<32x128xf32>, vector<1x128xf32> -> vector<1x128xf32>
    %329 = arith.addf %328, %169 : vector<1x128xf32>
    %cst_101 = arith.constant dense<0.000000e+00> : vector<1x128xf32>
    %330 = tpu.matmul %325, %174, %cst_101 {dimension_numbers = #tpu.dot_dimension_numbers<[1], [0], [0], [1], [0, 0, 1, 1], [], []>} : vector<1x32xf32>, vector<32x128xf32>, vector<1x128xf32> -> vector<1x128xf32>
    %331 = arith.addf %330, %179 : vector<1x128xf32>
    %332 = arith.negf %329 : vector<1x128xf32>
    %333 = math.exp %332 : vector<1x128xf32>
    %cst_102 = arith.constant 1.000000e+00 : f32
    %334 = vector.broadcast %cst_102 : f32 to vector<1x128xf32>
    %335 = arith.addf %334, %333 : vector<1x128xf32>
    %336 = arith.divf %334, %335 : vector<1x128xf32>
    %337 = math.tanh %329 : vector<1x128xf32>
    %338 = vector.extract_strided_slice %336 {offsets = [0, 0], sizes = [1, 32], strides = [1, 1]} : vector<1x128xf32> to vector<1x32xf32>
    %339 = vector.extract_strided_slice %336 {offsets = [0, 32], sizes = [1, 32], strides = [1, 1]} : vector<1x128xf32> to vector<1x32xf32>
    %340 = vector.extract_strided_slice %337 {offsets = [0, 64], sizes = [1, 32], strides = [1, 1]} : vector<1x128xf32> to vector<1x32xf32>
    %341 = vector.extract_strided_slice %336 {offsets = [0, 96], sizes = [1, 32], strides = [1, 1]} : vector<1x128xf32> to vector<1x32xf32>
    %342 = arith.mulf %339, %308 : vector<1x32xf32>
    %343 = arith.mulf %338, %340 : vector<1x32xf32>
    %344 = arith.addf %342, %343 : vector<1x32xf32>
    %345 = math.tanh %344 : vector<1x32xf32>
    %346 = arith.mulf %341, %345 : vector<1x32xf32>
    %347 = arith.negf %331 : vector<1x128xf32>
    %348 = math.exp %347 : vector<1x128xf32>
    %cst_103 = arith.constant 1.000000e+00 : f32
    %349 = vector.broadcast %cst_103 : f32 to vector<1x128xf32>
    %350 = arith.addf %349, %348 : vector<1x128xf32>
    %351 = arith.divf %349, %350 : vector<1x128xf32>
    %352 = math.tanh %331 : vector<1x128xf32>
    %353 = vector.extract_strided_slice %351 {offsets = [0, 0], sizes = [1, 32], strides = [1, 1]} : vector<1x128xf32> to vector<1x32xf32>
    %354 = vector.extract_strided_slice %351 {offsets = [0, 32], sizes = [1, 32], strides = [1, 1]} : vector<1x128xf32> to vector<1x32xf32>
    %355 = vector.extract_strided_slice %352 {offsets = [0, 64], sizes = [1, 32], strides = [1, 1]} : vector<1x128xf32> to vector<1x32xf32>
    %356 = vector.extract_strided_slice %351 {offsets = [0, 96], sizes = [1, 32], strides = [1, 1]} : vector<1x128xf32> to vector<1x32xf32>
    %357 = arith.mulf %354, %323 : vector<1x32xf32>
    %358 = arith.mulf %353, %355 : vector<1x32xf32>
    %359 = arith.addf %357, %358 : vector<1x32xf32>
    %360 = math.tanh %359 : vector<1x32xf32>
    %361 = arith.mulf %356, %360 : vector<1x32xf32>
    %c4_104 = arith.constant 4 : index
    %c0_105 = arith.constant 0 : index
    %362 = vector.load %arg18[%c4_104, %c0_105] : memref<8x32xf32, #tpu.memory_space<vmem>>, vector<1x32xf32>
    tpu.vector_store %arg18[%c4_104, %c0_105], %346 {strides = array<i32>} : memref<8x32xf32, #tpu.memory_space<vmem>>, vector<1x32xf32>,
    %c3_106 = arith.constant 3 : index
    %c0_107 = arith.constant 0 : index
    %363 = vector.load %arg19[%c3_106, %c0_107] : memref<8x32xf32, #tpu.memory_space<vmem>>, vector<1x32xf32>
    tpu.vector_store %arg19[%c3_106, %c0_107], %361 {strides = array<i32>} : memref<8x32xf32, #tpu.memory_space<vmem>>, vector<1x32xf32>,
    %cst_108 = arith.constant dense<0.000000e+00> : vector<1x128xf32>
    %364 = tpu.matmul %346, %164, %cst_108 {dimension_numbers = #tpu.dot_dimension_numbers<[1], [0], [0], [1], [0, 0, 1, 1], [], []>} : vector<1x32xf32>, vector<32x128xf32>, vector<1x128xf32> -> vector<1x128xf32>
    %365 = arith.addf %364, %169 : vector<1x128xf32>
    %cst_109 = arith.constant dense<0.000000e+00> : vector<1x128xf32>
    %366 = tpu.matmul %361, %174, %cst_109 {dimension_numbers = #tpu.dot_dimension_numbers<[1], [0], [0], [1], [0, 0, 1, 1], [], []>} : vector<1x32xf32>, vector<32x128xf32>, vector<1x128xf32> -> vector<1x128xf32>
    %367 = arith.addf %366, %179 : vector<1x128xf32>
    %368 = arith.negf %365 : vector<1x128xf32>
    %369 = math.exp %368 : vector<1x128xf32>
    %cst_110 = arith.constant 1.000000e+00 : f32
    %370 = vector.broadcast %cst_110 : f32 to vector<1x128xf32>
    %371 = arith.addf %370, %369 : vector<1x128xf32>
    %372 = arith.divf %370, %371 : vector<1x128xf32>
    %373 = math.tanh %365 : vector<1x128xf32>
    %374 = vector.extract_strided_slice %372 {offsets = [0, 0], sizes = [1, 32], strides = [1, 1]} : vector<1x128xf32> to vector<1x32xf32>
    %375 = vector.extract_strided_slice %372 {offsets = [0, 32], sizes = [1, 32], strides = [1, 1]} : vector<1x128xf32> to vector<1x32xf32>
    %376 = vector.extract_strided_slice %373 {offsets = [0, 64], sizes = [1, 32], strides = [1, 1]} : vector<1x128xf32> to vector<1x32xf32>
    %377 = vector.extract_strided_slice %372 {offsets = [0, 96], sizes = [1, 32], strides = [1, 1]} : vector<1x128xf32> to vector<1x32xf32>
    %378 = arith.mulf %375, %344 : vector<1x32xf32>
    %379 = arith.mulf %374, %376 : vector<1x32xf32>
    %380 = arith.addf %378, %379 : vector<1x32xf32>
    %381 = math.tanh %380 : vector<1x32xf32>
    %382 = arith.mulf %377, %381 : vector<1x32xf32>
    %383 = arith.negf %367 : vector<1x128xf32>
    %384 = math.exp %383 : vector<1x128xf32>
    %cst_111 = arith.constant 1.000000e+00 : f32
    %385 = vector.broadcast %cst_111 : f32 to vector<1x128xf32>
    %386 = arith.addf %385, %384 : vector<1x128xf32>
    %387 = arith.divf %385, %386 : vector<1x128xf32>
    %388 = math.tanh %367 : vector<1x128xf32>
    %389 = vector.extract_strided_slice %387 {offsets = [0, 0], sizes = [1, 32], strides = [1, 1]} : vector<1x128xf32> to vector<1x32xf32>
    %390 = vector.extract_strided_slice %387 {offsets = [0, 32], sizes = [1, 32], strides = [1, 1]} : vector<1x128xf32> to vector<1x32xf32>
    %391 = vector.extract_strided_slice %388 {offsets = [0, 64], sizes = [1, 32], strides = [1, 1]} : vector<1x128xf32> to vector<1x32xf32>
    %392 = vector.extract_strided_slice %387 {offsets = [0, 96], sizes = [1, 32], strides = [1, 1]} : vector<1x128xf32> to vector<1x32xf32>
    %393 = arith.mulf %390, %359 : vector<1x32xf32>
    %394 = arith.mulf %389, %391 : vector<1x32xf32>
    %395 = arith.addf %393, %394 : vector<1x32xf32>
    %396 = math.tanh %395 : vector<1x32xf32>
    %397 = arith.mulf %392, %396 : vector<1x32xf32>
    %c5_112 = arith.constant 5 : index
    %c0_113 = arith.constant 0 : index
    %398 = vector.load %arg18[%c5_112, %c0_113] : memref<8x32xf32, #tpu.memory_space<vmem>>, vector<1x32xf32>
    tpu.vector_store %arg18[%c5_112, %c0_113], %382 {strides = array<i32>} : memref<8x32xf32, #tpu.memory_space<vmem>>, vector<1x32xf32>,
    %c2_114 = arith.constant 2 : index
    %c0_115 = arith.constant 0 : index
    %399 = vector.load %arg19[%c2_114, %c0_115] : memref<8x32xf32, #tpu.memory_space<vmem>>, vector<1x32xf32>
    tpu.vector_store %arg19[%c2_114, %c0_115], %397 {strides = array<i32>} : memref<8x32xf32, #tpu.memory_space<vmem>>, vector<1x32xf32>,
    %cst_116 = arith.constant dense<0.000000e+00> : vector<1x128xf32>
    %400 = tpu.matmul %382, %164, %cst_116 {dimension_numbers = #tpu.dot_dimension_numbers<[1], [0], [0], [1], [0, 0, 1, 1], [], []>} : vector<1x32xf32>, vector<32x128xf32>, vector<1x128xf32> -> vector<1x128xf32>
    %401 = arith.addf %400, %169 : vector<1x128xf32>
    %cst_117 = arith.constant dense<0.000000e+00> : vector<1x128xf32>
    %402 = tpu.matmul %397, %174, %cst_117 {dimension_numbers = #tpu.dot_dimension_numbers<[1], [0], [0], [1], [0, 0, 1, 1], [], []>} : vector<1x32xf32>, vector<32x128xf32>, vector<1x128xf32> -> vector<1x128xf32>
    %403 = arith.addf %402, %179 : vector<1x128xf32>
    %404 = arith.negf %401 : vector<1x128xf32>
    %405 = math.exp %404 : vector<1x128xf32>
    %cst_118 = arith.constant 1.000000e+00 : f32
    %406 = vector.broadcast %cst_118 : f32 to vector<1x128xf32>
    %407 = arith.addf %406, %405 : vector<1x128xf32>
    %408 = arith.divf %406, %407 : vector<1x128xf32>
    %409 = math.tanh %401 : vector<1x128xf32>
    %410 = vector.extract_strided_slice %408 {offsets = [0, 0], sizes = [1, 32], strides = [1, 1]} : vector<1x128xf32> to vector<1x32xf32>
    %411 = vector.extract_strided_slice %408 {offsets = [0, 32], sizes = [1, 32], strides = [1, 1]} : vector<1x128xf32> to vector<1x32xf32>
    %412 = vector.extract_strided_slice %409 {offsets = [0, 64], sizes = [1, 32], strides = [1, 1]} : vector<1x128xf32> to vector<1x32xf32>
    %413 = vector.extract_strided_slice %408 {offsets = [0, 96], sizes = [1, 32], strides = [1, 1]} : vector<1x128xf32> to vector<1x32xf32>
    %414 = arith.mulf %411, %380 : vector<1x32xf32>
    %415 = arith.mulf %410, %412 : vector<1x32xf32>
    %416 = arith.addf %414, %415 : vector<1x32xf32>
    %417 = math.tanh %416 : vector<1x32xf32>
    %418 = arith.mulf %413, %417 : vector<1x32xf32>
    %419 = arith.negf %403 : vector<1x128xf32>
    %420 = math.exp %419 : vector<1x128xf32>
    %cst_119 = arith.constant 1.000000e+00 : f32
    %421 = vector.broadcast %cst_119 : f32 to vector<1x128xf32>
    %422 = arith.addf %421, %420 : vector<1x128xf32>
    %423 = arith.divf %421, %422 : vector<1x128xf32>
    %424 = math.tanh %403 : vector<1x128xf32>
    %425 = vector.extract_strided_slice %423 {offsets = [0, 0], sizes = [1, 32], strides = [1, 1]} : vector<1x128xf32> to vector<1x32xf32>
    %426 = vector.extract_strided_slice %423 {offsets = [0, 32], sizes = [1, 32], strides = [1, 1]} : vector<1x128xf32> to vector<1x32xf32>
    %427 = vector.extract_strided_slice %424 {offsets = [0, 64], sizes = [1, 32], strides = [1, 1]} : vector<1x128xf32> to vector<1x32xf32>
    %428 = vector.extract_strided_slice %423 {offsets = [0, 96], sizes = [1, 32], strides = [1, 1]} : vector<1x128xf32> to vector<1x32xf32>
    %429 = arith.mulf %426, %395 : vector<1x32xf32>
    %430 = arith.mulf %425, %427 : vector<1x32xf32>
    %431 = arith.addf %429, %430 : vector<1x32xf32>
    %432 = math.tanh %431 : vector<1x32xf32>
    %433 = arith.mulf %428, %432 : vector<1x32xf32>
    %c6_120 = arith.constant 6 : index
    %c0_121 = arith.constant 0 : index
    %434 = vector.load %arg18[%c6_120, %c0_121] : memref<8x32xf32, #tpu.memory_space<vmem>>, vector<1x32xf32>
    tpu.vector_store %arg18[%c6_120, %c0_121], %418 {strides = array<i32>} : memref<8x32xf32, #tpu.memory_space<vmem>>, vector<1x32xf32>,
    %c1_122 = arith.constant 1 : index
    %c0_123 = arith.constant 0 : index
    %435 = vector.load %arg19[%c1_122, %c0_123] : memref<8x32xf32, #tpu.memory_space<vmem>>, vector<1x32xf32>
    tpu.vector_store %arg19[%c1_122, %c0_123], %433 {strides = array<i32>} : memref<8x32xf32, #tpu.memory_space<vmem>>, vector<1x32xf32>,
    %cst_124 = arith.constant dense<0.000000e+00> : vector<1x128xf32>
    %436 = tpu.matmul %418, %164, %cst_124 {dimension_numbers = #tpu.dot_dimension_numbers<[1], [0], [0], [1], [0, 0, 1, 1], [], []>} : vector<1x32xf32>, vector<32x128xf32>, vector<1x128xf32> -> vector<1x128xf32>
    %437 = arith.addf %436, %169 : vector<1x128xf32>
    %cst_125 = arith.constant dense<0.000000e+00> : vector<1x128xf32>
    %438 = tpu.matmul %433, %174, %cst_125 {dimension_numbers = #tpu.dot_dimension_numbers<[1], [0], [0], [1], [0, 0, 1, 1], [], []>} : vector<1x32xf32>, vector<32x128xf32>, vector<1x128xf32> -> vector<1x128xf32>
    %439 = arith.addf %438, %179 : vector<1x128xf32>
    %440 = arith.negf %437 : vector<1x128xf32>
    %441 = math.exp %440 : vector<1x128xf32>
    %cst_126 = arith.constant 1.000000e+00 : f32
    %442 = vector.broadcast %cst_126 : f32 to vector<1x128xf32>
    %443 = arith.addf %442, %441 : vector<1x128xf32>
    %444 = arith.divf %442, %443 : vector<1x128xf32>
    %445 = math.tanh %437 : vector<1x128xf32>
    %446 = vector.extract_strided_slice %444 {offsets = [0, 0], sizes = [1, 32], strides = [1, 1]} : vector<1x128xf32> to vector<1x32xf32>
    %447 = vector.extract_strided_slice %444 {offsets = [0, 32], sizes = [1, 32], strides = [1, 1]} : vector<1x128xf32> to vector<1x32xf32>
    %448 = vector.extract_strided_slice %445 {offsets = [0, 64], sizes = [1, 32], strides = [1, 1]} : vector<1x128xf32> to vector<1x32xf32>
    %449 = vector.extract_strided_slice %444 {offsets = [0, 96], sizes = [1, 32], strides = [1, 1]} : vector<1x128xf32> to vector<1x32xf32>
    %450 = arith.mulf %447, %416 : vector<1x32xf32>
    %451 = arith.mulf %446, %448 : vector<1x32xf32>
    %452 = arith.addf %450, %451 : vector<1x32xf32>
    %453 = math.tanh %452 : vector<1x32xf32>
    %454 = arith.mulf %449, %453 : vector<1x32xf32>
    %455 = arith.negf %439 : vector<1x128xf32>
    %456 = math.exp %455 : vector<1x128xf32>
    %cst_127 = arith.constant 1.000000e+00 : f32
    %457 = vector.broadcast %cst_127 : f32 to vector<1x128xf32>
    %458 = arith.addf %457, %456 : vector<1x128xf32>
    %459 = arith.divf %457, %458 : vector<1x128xf32>
    %460 = math.tanh %439 : vector<1x128xf32>
    %461 = vector.extract_strided_slice %459 {offsets = [0, 0], sizes = [1, 32], strides = [1, 1]} : vector<1x128xf32> to vector<1x32xf32>
    %462 = vector.extract_strided_slice %459 {offsets = [0, 32], sizes = [1, 32], strides = [1, 1]} : vector<1x128xf32> to vector<1x32xf32>
    %463 = vector.extract_strided_slice %460 {offsets = [0, 64], sizes = [1, 32], strides = [1, 1]} : vector<1x128xf32> to vector<1x32xf32>
    %464 = vector.extract_strided_slice %459 {offsets = [0, 96], sizes = [1, 32], strides = [1, 1]} : vector<1x128xf32> to vector<1x32xf32>
    %465 = arith.mulf %462, %431 : vector<1x32xf32>
    %466 = arith.mulf %461, %463 : vector<1x32xf32>
    %467 = arith.addf %465, %466 : vector<1x32xf32>
    %468 = math.tanh %467 : vector<1x32xf32>
    %469 = arith.mulf %464, %468 : vector<1x32xf32>
    %c7_128 = arith.constant 7 : index
    %c0_129 = arith.constant 0 : index
    %470 = vector.load %arg18[%c7_128, %c0_129] : memref<8x32xf32, #tpu.memory_space<vmem>>, vector<1x32xf32>
    tpu.vector_store %arg18[%c7_128, %c0_129], %454 {strides = array<i32>} : memref<8x32xf32, #tpu.memory_space<vmem>>, vector<1x32xf32>,
    %c0_130 = arith.constant 0 : index
    %c0_131 = arith.constant 0 : index
    %471 = vector.load %arg19[%c0_130, %c0_131] : memref<8x32xf32, #tpu.memory_space<vmem>>, vector<1x32xf32>
    tpu.vector_store %arg19[%c0_130, %c0_131], %469 {strides = array<i32>} : memref<8x32xf32, #tpu.memory_space<vmem>>, vector<1x32xf32>,
    %c0_132 = arith.constant 0 : index
    %c0_133 = arith.constant 0 : index
    %472 = vector.load %arg18[%c0_132, %c0_133] : memref<8x32xf32, #tpu.memory_space<vmem>>, vector<8x32xf32>
    %c0_134 = arith.constant 0 : index
    %c0_135 = arith.constant 0 : index
    %473 = vector.load %arg9[%c0_134, %c0_135] : memref<32x32xf32, #tpu.memory_space<vmem>>, vector<32x32xf32>
    %cst_136 = arith.constant dense<0.000000e+00> : vector<8x32xf32>
    %474 = tpu.matmul %472, %473, %cst_136 {dimension_numbers = #tpu.dot_dimension_numbers<[1], [0], [0], [1], [0, 0, 1, 1], [], []>} : vector<8x32xf32>, vector<32x32xf32>, vector<8x32xf32> -> vector<8x32xf32>
    %c0_137 = arith.constant 0 : index
    %c0_138 = arith.constant 0 : index
    %475 = vector.load %arg10[%c0_137, %c0_138] : memref<1x32xf32, #tpu.memory_space<vmem>>, vector<1x32xf32>
    %476 = vector.broadcast %475 : vector<1x32xf32> to vector<8x32xf32>
    %477 = arith.addf %474, %476 : vector<8x32xf32>
    %c0_139 = arith.constant 0 : index
    %c0_140 = arith.constant 0 : index
    %478 = vector.load %arg19[%c0_139, %c0_140] : memref<8x32xf32, #tpu.memory_space<vmem>>, vector<8x32xf32>
    %c0_141 = arith.constant 0 : index
    %c0_142 = arith.constant 0 : index
    %479 = vector.load %arg14[%c0_141, %c0_142] : memref<32x32xf32, #tpu.memory_space<vmem>>, vector<32x32xf32>
    %cst_143 = arith.constant dense<0.000000e+00> : vector<8x32xf32>
    %480 = tpu.matmul %478, %479, %cst_143 {dimension_numbers = #tpu.dot_dimension_numbers<[1], [0], [0], [1], [0, 0, 1, 1], [], []>} : vector<8x32xf32>, vector<32x32xf32>, vector<8x32xf32> -> vector<8x32xf32>
    %c0_144 = arith.constant 0 : index
    %c0_145 = arith.constant 0 : index
    %481 = vector.load %arg15[%c0_144, %c0_145] : memref<1x32xf32, #tpu.memory_space<vmem>>, vector<1x32xf32>
    %482 = vector.broadcast %481 : vector<1x32xf32> to vector<8x32xf32>
    %483 = arith.addf %480, %482 : vector<8x32xf32>
    %c0_146 = arith.constant 0 : index
    %c0_147 = arith.constant 0 : index
    %484 = vector.load %arg2[%c0_146, %c0_147] : memref<8x32xf32, #tpu.memory_space<vmem>>, vector<8x32xf32>
    %485 = arith.subf %477, %484 : vector<8x32xf32>
    %c0_148 = arith.constant 0 : index
    %c0_149 = arith.constant 0 : index
    %486 = vector.load %arg1[%c0_148, %c0_149] : memref<8x32xf32, #tpu.memory_space<vmem>>, vector<8x32xf32>
    %487 = arith.subf %483, %486 : vector<8x32xf32>
    %488 = arith.mulf %485, %485 : vector<8x32xf32>
    %489 = vector.shape_cast %488 : vector<8x32xf32> to vector<1x8x32xf32>
    %cst_150 = arith.constant dense<0.000000e+00> : vector<1xf32>
    %490 = vector.multi_reduction <add>, %489, %cst_150 [1, 2] : vector<1x8x32xf32> to vector<1xf32>
    %491 = vector.shape_cast %490 : vector<1xf32> to vector<1x1x1xf32>
    %492 = vector.extract %491[0, 0, 0] : f32 from vector<1x1x1xf32>
    %cst_151 = arith.constant 3.906250e-03 : f32
    %493 = arith.mulf %492, %cst_151 : f32
    %494 = vector.broadcast %493 : f32 to vector<1x1xf32>
    %c0_152 = arith.constant 0 : index
    %c0_153 = arith.constant 0 : index
    %495 = vector.load %arg17[%c0_152, %c0_153] : memref<1x1xf32, #tpu.memory_space<vmem>>, vector<1x1xf32>
    tpu.vector_store %arg17[%c0_152, %c0_153], %494 {strides = array<i32>} : memref<1x1xf32, #tpu.memory_space<vmem>>, vector<1x1xf32>,
    %496 = arith.mulf %487, %487 : vector<8x32xf32>
    %497 = vector.shape_cast %496 : vector<8x32xf32> to vector<1x8x32xf32>
    %cst_154 = arith.constant dense<0.000000e+00> : vector<1xf32>
    %498 = vector.multi_reduction <add>, %497, %cst_154 [1, 2] : vector<1x8x32xf32> to vector<1xf32>
    %499 = vector.shape_cast %498 : vector<1xf32> to vector<1x1x1xf32>
    %500 = vector.extract %499[0, 0, 0] : f32 from vector<1x1x1xf32>
    %cst_155 = arith.constant 3.906250e-03 : f32
    %501 = arith.mulf %500, %cst_155 : f32
    %502 = vector.broadcast %501 : f32 to vector<1x1xf32>
    %c0_156 = arith.constant 0 : index
    %c0_157 = arith.constant 0 : index
    %503 = vector.load %arg16[%c0_156, %c0_157] : memref<1x1xf32, #tpu.memory_space<vmem>>, vector<1x1xf32>
    tpu.vector_store %arg16[%c0_156, %c0_157], %502 {strides = array<i32>} : memref<1x1xf32, #tpu.memory_space<vmem>>, vector<1x1xf32>,
    return
  }
}

</mosaic_0001>

<llo_original>
// kernel: my_model_forward.2
$region0: #{my_model_forward.2}
  #allocation0 [shape = 'u32[]', space=smem, size = 0x4, offset = 0x4, fixed_abs, tag = 'smem constant byte address 0x4 - core index']
  #allocation1 [shape = 'u32[144,128]{1,0:T(1,128)}', space=vmem, size = 0x12000, scoped, tag = 'internal scratch']
  %s0 = inlined_call_operand.vmem [shape: f32[64,4], index: 0, kind: input, shape index: {}]
  %s1 = inlined_call_operand.vmem [shape: s32[8,8], index: 1, kind: input, shape index: {}]
  %s2 = inlined_call_operand.vmem [shape: f32[4,4], index: 2, kind: input, shape index: {}]
  %s3 = inlined_call_operand.vmem [shape: f32[4,1], index: 3, kind: input, shape index: {}]
  %s4 = inlined_call_operand.vmem [shape: f32[4,1], index: 4, kind: input, shape index: {}]
  %s5 = inlined_call_operand.vmem [shape: f32[64,4], index: 5, kind: output, shape index: {}]
  %s6 = sld [smem:[#allocation0]]
  $region30: #{my_model_forward.2} parent=0
    _
  %s8 = ssub.s32 1, %s6
  %s9 = scalar_select 0, %s8, %s6
  // Predicated region
  $region2: #{my_model_forward.2} parent=0 // pred_check
    _
  $region3: #{my_model_forward.2} parent=0 // pred_check_branch
    %11 = sbr.rel (0) target = $region5
  $region4: #{my_model_forward.2} parent=0 // pred_region
    _
  $region5: #{my_model_forward.2} parent=0 // pred_fallthru
    _
  // Predicated region
  $region6: #{my_model_forward.2} parent=0 // pred_check
    _
  $region7: #{my_model_forward.2} parent=0 // pred_check_branch
    %13 = sbr.rel (0) target = $region9
  $region8: #{my_model_forward.2} parent=0 // pred_region
    _
  $region9: #{my_model_forward.2} parent=0 // pred_fallthru
    _
  // Predicated region
  $region10: #{my_model_forward.2} parent=0 // pred_check
    _
  $region11: #{my_model_forward.2} parent=0 // pred_check_branch
    %15 = sbr.rel (0) target = $region13
  $region12: #{my_model_forward.2} parent=0 // pred_region
    _
  $region13: #{my_model_forward.2} parent=0 // pred_fallthru
    _
  // Predicated region
  $region14: #{my_model_forward.2} parent=0 // pred_check
    _
  $region15: #{my_model_forward.2} parent=0 // pred_check_branch
    %17 = sbr.rel (0) target = $region17
  $region16: #{my_model_forward.2} parent=0 // pred_region
    _
  $region17: #{my_model_forward.2} parent=0 // pred_fallthru
    _
  // Predicated region
  $region18: #{my_model_forward.2} parent=0 // pred_check
    _
  $region19: #{my_model_forward.2} parent=0 // pred_check_branch
    %19 = sbr.rel (0) target = $region21
  $region20: #{my_model_forward.2} parent=0 // pred_region
    _
  $region21: #{my_model_forward.2} parent=0 // pred_fallthru
    _
  %v20 = vld [vmem:[%s0] sm:$0xff]
  %v21 = vld [vmem:[%s0 + $0x8] sm:$0xff]
  %v22 = vld [vmem:[%s0 + $0x10] sm:$0xff]
  %v23 = vld [vmem:[%s0 + $0x18] sm:$0xff]
  %v24 = vld [vmem:[%s0 + $0x20] sm:$0xff]
  %v25 = vld [vmem:[%s0 + $0x28] sm:$0xff]
  %v26 = vld [vmem:[%s0 + $0x30] sm:$0xff]
  %v27 = vld [vmem:[%s0 + $0x38] sm:$0xff]
  %v28 = vld [vmem:[%s2] sm:$0xf]
  %vm29 = vcmask 31744
  %v31 = vsel %vm29, %v20, 0
  %v34 = vsel %vm29, %v21, 0
  %v37 = vsel %vm29, %v22, 0
  %v40 = vsel %vm29, %v23, 0
  %v43 = vsel %vm29, %v24, 0
  %v46 = vsel %vm29, %v25, 0
  %v49 = vsel %vm29, %v26, 0
  %v52 = vsel %vm29, %v27, 0
  %vm54 = vcmask 1043456
  %v56 = vsel %vm54, %v28, 0
  %58 = vmatprep.subr.mxu0 0.0
  %59 = vmatpush1.msra.mxu0 %v56
  %60 = vmatprep.subr.mxu0 0.0
  %61 = vmatpush1.msra.mxu0 0.0
  %62 = vmatprep.subr.mxu0 0.0
  %63 = vmatpush1.msra.mxu0 0.0
  %64 = vmatprep.subr.mxu0 0.0
  %65 = vmatpush1.msra.mxu0 0.0
  %66 = vmatprep.subr.mxu0 0.0
  %67 = vmatpush1.msra.mxu0 0.0
  %68 = vmatprep.subr.mxu0 0.0
  %69 = vmatpush1.msra.mxu0 0.0
  %70 = vmatprep.subr.mxu0 0.0
  %71 = vmatpush1.msra.mxu0 0.0
  %72 = vmatprep.subr.mxu0 0.0
  %73 = vmatpush1.msra.mxu0 0.0
  %74 = vmatprep.subr.mxu0 0.0
  %75 = vmatpush1.msra.mxu0 0.0
  %76 = vmatprep.subr.mxu0 0.0
  %77 = vmatpush1.msra.mxu0 0.0
  %78 = vmatprep.subr.mxu0 0.0
  %79 = vmatpush1.msra.mxu0 0.0
  %80 = vmatprep.subr.mxu0 0.0
  %81 = vmatpush1.msra.mxu0 0.0
  %82 = vmatprep.subr.mxu0 0.0
  %83 = vmatpush1.msra.mxu0 0.0
  %84 = vmatprep.subr.mxu0 0.0
  %85 = vmatpush1.msra.mxu0 0.0
  %86 = vmatprep.subr.mxu0 0.0
  %87 = vmatpush1.msra.mxu0 0.0
  %88 = vmatprep.subr.mxu0 0.0
  %89 = vmatpush1.msra.mxu0 0.0
  %90 = vmatprep.subr.mxu0 0.0
  %91 = vmatpush1.msra.mxu0 0.0
  %92 = vmatprep.subr.mxu0 0.0
  %93 = vmatpush1.msra.mxu0 0.0
  %94 = vmatprep.subr.mxu0 0.0
  %95 = vmatpush1.msra.mxu0 0.0
  %96 = vmatprep.subr.mxu0 0.0
  %97 = vmatpush1.msra.mxu0 0.0
  %98 = vmatprep.subr.mxu0 0.0
  %99 = vmatpush1.msra.mxu0 0.0
  %100 = vmatprep.subr.mxu0 0.0
  %101 = vmatpush1.msra.mxu0 0.0
  %102 = vmatprep.subr.mxu0 0.0
  %103 = vmatpush1.msra.mxu0 0.0
  %104 = vmatprep.subr.mxu0 0.0
  %105 = vmatpush1.msra.mxu0 0.0
  %106 = vmatprep.subr.mxu0 0.0
  %107 = vmatpush1.msra.mxu0 0.0
  %108 = vmatprep.subr.mxu0 0.0
  %109 = vmatpush1.msra.mxu0 0.0
  %110 = vmatprep.subr.mxu0 0.0
  %111 = vmatpush1.msra.mxu0 0.0
  %112 = vmatprep.subr.mxu0 0.0
  %113 = vmatpush1.msra.mxu0 0.0
  %114 = vmatprep.subr.mxu0 0.0
  %115 = vmatpush1.msra.mxu0 0.0
  %116 = vmatprep.subr.mxu0 0.0
  %117 = vmatpush1.msra.mxu0 0.0
  %118 = vmatprep.subr.mxu0 0.0
  %119 = vmatpush1.msra.mxu0 0.0
  %120 = vmatprep.subr.mxu0 0.0
  %121 = vmatpush1.msra.mxu0 0.0
  %122 = vmatprep.mubr.f32.mxu0 0.0
  %123 = vmatmul.mubr.f32.gmra.mrb[0].mxu0 %v31
  %v124 = vpop.f32.mrb[0].mxu0
  %v125 = vadd.f32 0.0, %v124
  %v126 = vpop.f32.mrb[0].mxu0
  %127 = vmatprep.mubr.f32.mxu0 0.0
  %128 = vmatmul.mubr.f32.gmra.mrb[0].mxu0 %v34
  %v129 = vpop.f32.mrb[0].mxu0
  %v130 = vadd.f32 0.0, %v129
  %v131 = vpop.f32.mrb[0].mxu0
  %132 = vmatprep.mubr.f32.mxu0 0.0
  %133 = vmatmul.mubr.f32.gmra.mrb[0].mxu0 %v37
  %v134 = vpop.f32.mrb[0].mxu0
  %v135 = vadd.f32 0.0, %v134
  %v136 = vpop.f32.mrb[0].mxu0
  %137 = vmatprep.mubr.f32.mxu0 0.0
  %138 = vmatmul.mubr.f32.gmra.mrb[0].mxu0 %v40
  %v139 = vpop.f32.mrb[0].mxu0
  %v140 = vadd.f32 0.0, %v139
  %v141 = vpop.f32.mrb[0].mxu0
  %142 = vmatprep.mubr.f32.mxu0 0.0
  %143 = vmatmul.mubr.f32.gmra.mrb[0].mxu0 %v43
  %v144 = vpop.f32.mrb[0].mxu0
  %v145 = vadd.f32 0.0, %v144
  %v146 = vpop.f32.mrb[0].mxu0
  %147 = vmatprep.mubr.f32.mxu0 0.0
  %148 = vmatmul.mubr.f32.gmra.mrb[0].mxu0 %v46
  %v149 = vpop.f32.mrb[0].mxu0
  %v150 = vadd.f32 0.0, %v149
  %v151 = vpop.f32.mrb[0].mxu0
  %152 = vmatprep.mubr.f32.mxu0 0.0
  %153 = vmatmul.mubr.f32.gmra.mrb[0].mxu0 %v49
  %v154 = vpop.f32.mrb[0].mxu0
  %v155 = vadd.f32 0.0, %v154
  %v156 = vpop.f32.mrb[0].mxu0
  %157 = vmatprep.mubr.f32.mxu0 0.0
  %158 = vmatmul.mubr.f32.gmra.mrb[0].mxu0 %v52
  %v159 = vpop.f32.mrb[0].mxu0
  %v160 = vadd.f32 0.0, %v159
  %v161 = vpop.f32.mrb[0].mxu0
  %162 = vdwg.mxu0
  %v163 = vld [vmem:[%s3] sm:$0xf]
  %v165 = vsel %vm29, %v125, 0
  %v168 = vsel %vm29, %v130, 0
  %v171 = vsel %vm29, %v135, 0
  %v174 = vsel %vm29, %v140, 0
  %v177 = vsel %vm29, %v145, 0
  %v180 = vsel %vm29, %v150, 0
  %v183 = vsel %vm29, %v155, 0
  %v186 = vsel %vm29, %v160, 0
  %v189 = vsel %vm54, %v163, 0
  %191 = vmatprep.subr.mxu0 0.0
  %192 = vmatpush1.msra.mxu0 %v189
  %193 = vmatprep.subr.mxu0 0.0
  %194 = vmatpush1.msra.mxu0 0.0
  %195 = vmatprep.subr.mxu0 0.0
  %196 = vmatpush1.msra.mxu0 0.0
  %197 = vmatprep.subr.mxu0 0.0
  %198 = vmatpush1.msra.mxu0 0.0
  %199 = vmatprep.subr.mxu0 0.0
  %200 = vmatpush1.msra.mxu0 0.0
  %201 = vmatprep.subr.mxu0 0.0
  %202 = vmatpush1.msra.mxu0 0.0
  %203 = vmatprep.subr.mxu0 0.0
  %204 = vmatpush1.msra.mxu0 0.0
  %205 = vmatprep.subr.mxu0 0.0
  %206 = vmatpush1.msra.mxu0 0.0
  %207 = vmatprep.subr.mxu0 0.0
  %208 = vmatpush1.msra.mxu0 0.0
  %209 = vmatprep.subr.mxu0 0.0
  %210 = vmatpush1.msra.mxu0 0.0
  %211 = vmatprep.subr.mxu0 0.0
  %212 = vmatpush1.msra.mxu0 0.0
  %213 = vmatprep.subr.mxu0 0.0
  %214 = vmatpush1.msra.mxu0 0.0
  %215 = vmatprep.subr.mxu0 0.0
  %216 = vmatpush1.msra.mxu0 0.0
  %217 = vmatprep.subr.mxu0 0.0
  %218 = vmatpush1.msra.mxu0 0.0
  %219 = vmatprep.subr.mxu0 0.0
  %220 = vmatpush1.msra.mxu0 0.0
  %221 = vmatprep.subr.mxu0 0.0
  %222 = vmatpush1.msra.mxu0 0.0
  %223 = vmatprep.subr.mxu0 0.0
  %224 = vmatpush1.msra.mxu0 0.0
  %225 = vmatprep.subr.mxu0 0.0
  %226 = vmatpush1.msra.mxu0 0.0
  %227 = vmatprep.subr.mxu0 0.0
  %228 = vmatpush1.msra.mxu0 0.0
  %229 = vmatprep.subr.mxu0 0.0
  %230 = vmatpush1.msra.mxu0 0.0
  %231 = vmatprep.subr.mxu0 0.0
  %232 = vmatpush1.msra.mxu0 0.0
  %233 = vmatprep.subr.mxu0 0.0
  %234 = vmatpush1.msra.mxu0 0.0
  %235 = vmatprep.subr.mxu0 0.0
  %236 = vmatpush1.msra.mxu0 0.0
  %237 = vmatprep.subr.mxu0 0.0
  %238 = vmatpush1.msra.mxu0 0.0
  %239 = vmatprep.subr.mxu0 0.0
  %240 = vmatpush1.msra.mxu0 0.0
  %241 = vmatprep.subr.mxu0 0.0
  %242 = vmatpush1.msra.mxu0 0.0
  %243 = vmatprep.subr.mxu0 0.0
  %244 = vmatpush1.msra.mxu0 0.0
  %245 = vmatprep.subr.mxu0 0.0
  %246 = vmatpush1.msra.mxu0 0.0
  %247 = vmatprep.subr.mxu0 0.0
  %248 = vmatpush1.msra.mxu0 0.0
  %249 = vmatprep.subr.mxu0 0.0
  %250 = vmatpush1.msra.mxu0 0.0
  %251 = vmatprep.subr.mxu0 0.0
  %252 = vmatpush1.msra.mxu0 0.0
  %253 = vmatprep.subr.mxu0 0.0
  %254 = vmatpush1.msra.mxu0 0.0
  %255 = vmatprep.mubr.f32.mxu0 0.0
  %256 = vmatmul.mubr.f32.gmra.mrb[0].mxu0 %v165
  %v257 = vpop.f32.mrb[0].mxu0
  %v258 = vadd.f32 0.0, %v257
  %v259 = vpop.f32.mrb[0].mxu0
  %260 = vmatprep.mubr.f32.mxu0 0.0
  %261 = vmatmul.mubr.f32.gmra.mrb[0].mxu0 %v168
  %v262 = vpop.f32.mrb[0].mxu0
  %v263 = vadd.f32 0.0, %v262
  %v264 = vpop.f32.mrb[0].mxu0
  %265 = vmatprep.mubr.f32.mxu0 0.0
  %266 = vmatmul.mubr.f32.gmra.mrb[0].mxu0 %v171
  %v267 = vpop.f32.mrb[0].mxu0
  %v268 = vadd.f32 0.0, %v267
  %v269 = vpop.f32.mrb[0].mxu0
  %270 = vmatprep.mubr.f32.mxu0 0.0
  %271 = vmatmul.mubr.f32.gmra.mrb[0].mxu0 %v174
  %v272 = vpop.f32.mrb[0].mxu0
  %v273 = vadd.f32 0.0, %v272
  %v274 = vpop.f32.mrb[0].mxu0
  %275 = vmatprep.mubr.f32.mxu0 0.0
  %276 = vmatmul.mubr.f32.gmra.mrb[0].mxu0 %v177
  %v277 = vpop.f32.mrb[0].mxu0
  %v278 = vadd.f32 0.0, %v277
  %v279 = vpop.f32.mrb[0].mxu0
  %280 = vmatprep.mubr.f32.mxu0 0.0
  %281 = vmatmul.mubr.f32.gmra.mrb[0].mxu0 %v180
  %v282 = vpop.f32.mrb[0].mxu0
  %v283 = vadd.f32 0.0, %v282
  %v284 = vpop.f32.mrb[0].mxu0
  %285 = vmatprep.mubr.f32.mxu0 0.0
  %286 = vmatmul.mubr.f32.gmra.mrb[0].mxu0 %v183
  %v287 = vpop.f32.mrb[0].mxu0
  %v288 = vadd.f32 0.0, %v287
  %v289 = vpop.f32.mrb[0].mxu0
  %290 = vmatprep.mubr.f32.mxu0 0.0
  %291 = vmatmul.mubr.f32.gmra.mrb[0].mxu0 %v186
  %v292 = vpop.f32.mrb[0].mxu0
  %v293 = vadd.f32 0.0, %v292
  %v294 = vpop.f32.mrb[0].mxu0
  %295 = vdwg.mxu0
  %v296 = vld [vmem:[%s4] sm:$0xf]
  %v298 = vsel %vm54, %v296, 0
  %300 = vmatprep.subr.mxu0 0.0
  %301 = vmatpush1.msra.mxu0 %v298
  %302 = vmatprep.subr.mxu0 0.0
  %303 = vmatpush1.msra.mxu0 0.0
  %304 = vmatprep.subr.mxu0 0.0
  %305 = vmatpush1.msra.mxu0 0.0
  %306 = vmatprep.subr.mxu0 0.0
  %307 = vmatpush1.msra.mxu0 0.0
  %308 = vmatprep.subr.mxu0 0.0
  %309 = vmatpush1.msra.mxu0 0.0
  %310 = vmatprep.subr.mxu0 0.0
  %311 = vmatpush1.msra.mxu0 0.0
  %312 = vmatprep.subr.mxu0 0.0
  %313 = vmatpush1.msra.mxu0 0.0
  %314 = vmatprep.subr.mxu0 0.0
  %315 = vmatpush1.msra.mxu0 0.0
  %316 = vmatprep.subr.mxu0 0.0
  %317 = vmatpush1.msra.mxu0 0.0
  %318 = vmatprep.subr.mxu0 0.0
  %319 = vmatpush1.msra.mxu0 0.0
  %320 = vmatprep.subr.mxu0 0.0
  %321 = vmatpush1.msra.mxu0 0.0
  %322 = vmatprep.subr.mxu0 0.0
  %323 = vmatpush1.msra.mxu0 0.0
  %324 = vmatprep.subr.mxu0 0.0
  %325 = vmatpush1.msra.mxu0 0.0
  %326 = vmatprep.subr.mxu0 0.0
  %327 = vmatpush1.msra.mxu0 0.0
  %328 = vmatprep.subr.mxu0 0.0
  %329 = vmatpush1.msra.mxu0 0.0
  %330 = vmatprep.subr.mxu0 0.0
  %331 = vmatpush1.msra.mxu0 0.0
  %332 = vmatprep.subr.mxu0 0.0
  %333 = vmatpush1.msra.mxu0 0.0
  %334 = vmatprep.subr.mxu0 0.0
  %335 = vmatpush1.msra.mxu0 0.0
  %336 = vmatprep.subr.mxu0 0.0
  %337 = vmatpush1.msra.mxu0 0.0
  %338 = vmatprep.subr.mxu0 0.0
  %339 = vmatpush1.msra.mxu0 0.0
  %340 = vmatprep.subr.mxu0 0.0
  %341 = vmatpush1.msra.mxu0 0.0
  %342 = vmatprep.subr.mxu0 0.0
  %343 = vmatpush1.msra.mxu0 0.0
  %344 = vmatprep.subr.mxu0 0.0
  %345 = vmatpush1.msra.mxu0 0.0
  %346 = vmatprep.subr.mxu0 0.0
  %347 = vmatpush1.msra.mxu0 0.0
  %348 = vmatprep.subr.mxu0 0.0
  %349 = vmatpush1.msra.mxu0 0.0
  %350 = vmatprep.subr.mxu0 0.0
  %351 = vmatpush1.msra.mxu0 0.0
  %352 = vmatprep.subr.mxu0 0.0
  %353 = vmatpush1.msra.mxu0 0.0
  %354 = vmatprep.subr.mxu0 0.0
  %355 = vmatpush1.msra.mxu0 0.0
  %356 = vmatprep.subr.mxu0 0.0
  %357 = vmatpush1.msra.mxu0 0.0
  %358 = vmatprep.subr.mxu0 0.0
  %359 = vmatpush1.msra.mxu0 0.0
  %360 = vmatprep.subr.mxu0 0.0
  %361 = vmatpush1.msra.mxu0 0.0
  %362 = vmatprep.subr.mxu0 0.0
  %363 = vmatpush1.msra.mxu0 0.0
  %364 = vmatprep.mubr.f32.mxu0 0.0
  %365 = vmatmul.mubr.f32.gmra.mrb[0].mxu0 %v165
  %v366 = vpop.f32.mrb[0].mxu0
  %v367 = vadd.f32 0.0, %v366
  %v368 = vpop.f32.mrb[0].mxu0
  %369 = vmatprep.mubr.f32.mxu0 0.0
  %370 = vmatmul.mubr.f32.gmra.mrb[0].mxu0 %v168
  %v371 = vpop.f32.mrb[0].mxu0
  %v372 = vadd.f32 0.0, %v371
  %v373 = vpop.f32.mrb[0].mxu0
  %374 = vmatprep.mubr.f32.mxu0 0.0
  %375 = vmatmul.mubr.f32.gmra.mrb[0].mxu0 %v171
  %v376 = vpop.f32.mrb[0].mxu0
  %v377 = vadd.f32 0.0, %v376
  %v378 = vpop.f32.mrb[0].mxu0
  %379 = vmatprep.mubr.f32.mxu0 0.0
  %380 = vmatmul.mubr.f32.gmra.mrb[0].mxu0 %v174
  %v381 = vpop.f32.mrb[0].mxu0
  %v382 = vadd.f32 0.0, %v381
  %v383 = vpop.f32.mrb[0].mxu0
  %384 = vmatprep.mubr.f32.mxu0 0.0
  %385 = vmatmul.mubr.f32.gmra.mrb[0].mxu0 %v177
  %v386 = vpop.f32.mrb[0].mxu0
  %v387 = vadd.f32 0.0, %v386
  %v388 = vpop.f32.mrb[0].mxu0
  %389 = vmatprep.mubr.f32.mxu0 0.0
  %390 = vmatmul.mubr.f32.gmra.mrb[0].mxu0 %v180
  %v391 = vpop.f32.mrb[0].mxu0
  %v392 = vadd.f32 0.0, %v391
  %v393 = vpop.f32.mrb[0].mxu0
  %394 = vmatprep.mubr.f32.mxu0 0.0
  %395 = vmatmul.mubr.f32.gmra.mrb[0].mxu0 %v183
  %v396 = vpop.f32.mrb[0].mxu0
  %v397 = vadd.f32 0.0, %v396
  %v398 = vpop.f32.mrb[0].mxu0
  %399 = vmatprep.mubr.f32.mxu0 0.0
  %400 = vmatmul.mubr.f32.gmra.mrb[0].mxu0 %v186
  %v401 = vpop.f32.mrb[0].mxu0
  %v402 = vadd.f32 0.0, %v401
  %v403 = vpop.f32.mrb[0].mxu0
  %404 = vdwg.mxu0
  %v405 = vld [vmem:[%s1] sm:$0xff]
  %vm406 = vcmp.gt.s32.totalorder %v405, 0
  %407 = vxpose.xlu0.b32.start [1/16] %v367, 128
  %408 = vxpose.xlu0.b32.cont [2/16] 0.0, 128
  %409 = vxpose.xlu0.b32.cont [3/16] 0.0, 128
  %410 = vxpose.xlu0.b32.cont [4/16] 0.0, 128
  %411 = vxpose.xlu0.b32.cont [5/16] 0.0, 128
  %412 = vxpose.xlu0.b32.cont [6/16] 0.0, 128
  %413 = vxpose.xlu0.b32.cont [7/16] 0.0, 128
  %414 = vxpose.xlu0.b32.cont [8/16] 0.0, 128
  %415 = vxpose.xlu0.b32.cont [9/16] 0.0, 128
  %416 = vxpose.xlu0.b32.cont [10/16] 0.0, 128
  %417 = vxpose.xlu0.b32.cont [11/16] 0.0, 128
  %418 = vxpose.xlu0.b32.cont [12/16] 0.0, 128
  %419 = vxpose.xlu0.b32.cont [13/16] 0.0, 128
  %420 = vxpose.xlu0.b32.cont [14/16] 0.0, 128
  %421 = vxpose.xlu0.b32.cont [15/16] 0.0, 128
  %422 = vxpose.xlu0.b32.end [16/16] 0.0, 128
  %v423 = vpop.trf.xlu0
  %v424 = vpop.trf.xlu0
  %v425 = vpop.trf.xlu0
  %v426 = vpop.trf.xlu0
  %v427 = vpop.trf.xlu0
  %v428 = vpop.trf.xlu0
  %v429 = vpop.trf.xlu0
  %v430 = vpop.trf.xlu0
  %v431 = vpop.trf.xlu0
  %v432 = vpop.trf.xlu0
  %v433 = vpop.trf.xlu0
  %v434 = vpop.trf.xlu0
  %v435 = vpop.trf.xlu0
  %v436 = vpop.trf.xlu0
  %v437 = vpop.trf.xlu0
  %v438 = vpop.trf.xlu0
  %440 = vset.pattern.permute.xlu0 0
  %441 = vperm.xlu0 %440, %v258
  %v442 = vpop.permute.xlu0 %441
  %v444 = vlaneseq
  %v445 = vshrl.u32 %v444, 7
  %v446 = vsub.s32 0, %v445
  %v447 = vrot.slane %v423, %v446
  %v448 = vadd.f32 %v442, %v447
  %vm449 = vcmp.gt.f32.partialorder %v448, 0.0
  %v450 = vmul.f32 %v448, 0.1
  %v451 = vsel %vm449, %v448, %v450
  %v452 = vsel %vm406, %v451, -9e+15
  %vm453 = vcmask 64512
  %v454 = vsel %vm453, %v452, -inf
  %455 = vmax.xlane.f32.xlu0 %v454
  %v456 = vpop.xlane.xlu0 %455
  %v457 = vsub.f32 %v452, %v456
  %v458 = vmul.f32 %v457, 1.442695
  %v459 = vpow.pop %v458
  %v460 = vsel %vm453, %v459, 0.0
  %461 = vadd.xlane.f32.xlu0 %v460
  %v462 = vpop.xlane.xlu0 %461
  %v463 = vrcp.pop %v462
  %v464 = vmul.f32 %v459, %v463
  %v466 = vsel %vm453, %v464, 0
  %468 = vmatprep.subr.mxu0 0.0
  %469 = vmatpush1.msra.mxu0 %v125
  %470 = vmatprep.subr.mxu0 0.0
  %471 = vmatpush1.msra.mxu0 0.0
  %472 = vmatprep.subr.mxu0 0.0
  %473 = vmatpush1.msra.mxu0 0.0
  %474 = vmatprep.subr.mxu0 0.0
  %475 = vmatpush1.msra.mxu0 0.0
  %476 = vmatprep.subr.mxu0 0.0
  %477 = vmatpush1.msra.mxu0 0.0
  %478 = vmatprep.subr.mxu0 0.0
  %479 = vmatpush1.msra.mxu0 0.0
  %480 = vmatprep.subr.mxu0 0.0
  %481 = vmatpush1.msra.mxu0 0.0
  %482 = vmatprep.subr.mxu0 0.0
  %483 = vmatpush1.msra.mxu0 0.0
  %484 = vmatprep.subr.mxu0 0.0
  %485 = vmatpush1.msra.mxu0 0.0
  %486 = vmatprep.subr.mxu0 0.0
  %487 = vmatpush1.msra.mxu0 0.0
  %488 = vmatprep.subr.mxu0 0.0
  %489 = vmatpush1.msra.mxu0 0.0
  %490 = vmatprep.subr.mxu0 0.0
  %491 = vmatpush1.msra.mxu0 0.0
  %492 = vmatprep.subr.mxu0 0.0
  %493 = vmatpush1.msra.mxu0 0.0
  %494 = vmatprep.subr.mxu0 0.0
  %495 = vmatpush1.msra.mxu0 0.0
  %496 = vmatprep.subr.mxu0 0.0
  %497 = vmatpush1.msra.mxu0 0.0
  %498 = vmatprep.subr.mxu0 0.0
  %499 = vmatpush1.msra.mxu0 0.0
  %500 = vmatprep.subr.mxu0 0.0
  %501 = vmatpush1.msra.mxu0 0.0
  %502 = vmatprep.subr.mxu0 0.0
  %503 = vmatpush1.msra.mxu0 0.0
  %504 = vmatprep.subr.mxu0 0.0
  %505 = vmatpush1.msra.mxu0 0.0
  %506 = vmatprep.subr.mxu0 0.0
  %507 = vmatpush1.msra.mxu0 0.0
  %508 = vmatprep.subr.mxu0 0.0
  %509 = vmatpush1.msra.mxu0 0.0
  %510 = vmatprep.subr.mxu0 0.0
  %511 = vmatpush1.msra.mxu0 0.0
  %512 = vmatprep.subr.mxu0 0.0
  %513 = vmatpush1.msra.mxu0 0.0
  %514 = vmatprep.subr.mxu0 0.0
  %515 = vmatpush1.msra.mxu0 0.0
  %516 = vmatprep.subr.mxu0 0.0
  %517 = vmatpush1.msra.mxu0 0.0
  %518 = vmatprep.subr.mxu0 0.0
  %519 = vmatpush1.msra.mxu0 0.0
  %520 = vmatprep.subr.mxu0 0.0
  %521 = vmatpush1.msra.mxu0 0.0
  %522 = vmatprep.subr.mxu0 0.0
  %523 = vmatpush1.msra.mxu0 0.0
  %524 = vmatprep.subr.mxu0 0.0
  %525 = vmatpush1.msra.mxu0 0.0
  %526 = vmatprep.subr.mxu0 0.0
  %527 = vmatpush1.msra.mxu0 0.0
  %528 = vmatprep.subr.mxu0 0.0
  %529 = vmatpush1.msra.mxu0 0.0
  %530 = vmatprep.subr.mxu0 0.0
  %531 = vmatpush1.msra.mxu0 0.0
  %532 = vmatprep.mubr.f32.mxu0 0.0
  %533 = vmatmul.mubr.f32.gmra.mrb[0].mxu0 %v466
  %v534 = vpop.f32.mrb[0].mxu0
  %v535 = vadd.f32 0.0, %v534
  %v536 = vpop.f32.mrb[0].mxu0
  %537 = vdwg.mxu0
  %vm538 = vcmp.gt.f32.partialorder %v535, 0.0
  %v539 = vmin.f32 %v535, 0.0
  %v540 = vmul.f32 %v539, 1.442695
  %v541 = vpow.pop %v540
  %v542 = vsub.f32 %v541, 1.0
  %v543 = vsel %vm538, %v535, %v542
  %544 = vst.msk [vmem:[%s5] sm:$0xff] %vm29, %v543
  %545 = vxpose.xlu0.b32.start [1/16] %v372, 128
  %546 = vxpose.xlu0.b32.cont [2/16] 0.0, 128
  %547 = vxpose.xlu0.b32.cont [3/16] 0.0, 128
  %548 = vxpose.xlu0.b32.cont [4/16] 0.0, 128
  %549 = vxpose.xlu0.b32.cont [5/16] 0.0, 128
  %550 = vxpose.xlu0.b32.cont [6/16] 0.0, 128
  %551 = vxpose.xlu0.b32.cont [7/16] 0.0, 128
  %552 = vxpose.xlu0.b32.cont [8/16] 0.0, 128
  %553 = vxpose.xlu0.b32.cont [9/16] 0.0, 128
  %554 = vxpose.xlu0.b32.cont [10/16] 0.0, 128
  %555 = vxpose.xlu0.b32.cont [11/16] 0.0, 128
  %556 = vxpose.xlu0.b32.cont [12/16] 0.0, 128
  %557 = vxpose.xlu0.b32.cont [13/16] 0.0, 128
  %558 = vxpose.xlu0.b32.cont [14/16] 0.0, 128
  %559 = vxpose.xlu0.b32.cont [15/16] 0.0, 128
  %560 = vxpose.xlu0.b32.end [16/16] 0.0, 128
  %v561 = vpop.trf.xlu0
  %v562 = vpop.trf.xlu0
  %v563 = vpop.trf.xlu0
  %v564 = vpop.trf.xlu0
  %v565 = vpop.trf.xlu0
  %v566 = vpop.trf.xlu0
  %v567 = vpop.trf.xlu0
  %v568 = vpop.trf.xlu0
  %v569 = vpop.trf.xlu0
  %v570 = vpop.trf.xlu0
  %v571 = vpop.trf.xlu0
  %v572 = vpop.trf.xlu0
  %v573 = vpop.trf.xlu0
  %v574 = vpop.trf.xlu0
  %v575 = vpop.trf.xlu0
  %v576 = vpop.trf.xlu0
  %578 = vset.pattern.permute.xlu0 0
  %579 = vperm.xlu0 %578, %v263
  %v580 = vpop.permute.xlu0 %579
  %v582 = vlaneseq
  %v583 = vshrl.u32 %v582, 7
  %v584 = vsub.s32 0, %v583
  %v585 = vrot.slane %v561, %v584
  %v586 = vadd.f32 %v580, %v585
  %vm587 = vcmp.gt.f32.partialorder %v586, 0.0
  %v588 = vmul.f32 %v586, 0.1
  %v589 = vsel %vm587, %v586, %v588
  %v590 = vsel %vm406, %v589, -9e+15
  %v591 = vsel %vm453, %v590, -inf
  %592 = vmax.xlane.f32.xlu0 %v591
  %v593 = vpop.xlane.xlu0 %592
  %v594 = vsub.f32 %v590, %v593
  %v595 = vmul.f32 %v594, 1.442695
  %v596 = vpow.pop %v595
  %v597 = vsel %vm453, %v596, 0.0
  %598 = vadd.xlane.f32.xlu0 %v597
  %v599 = vpop.xlane.xlu0 %598
  %v600 = vrcp.pop %v599
  %v601 = vmul.f32 %v596, %v600
  %v603 = vsel %vm453, %v601, 0
  %605 = vmatprep.subr.mxu0 0.0
  %606 = vmatpush1.msra.mxu0 %v130
  %607 = vmatprep.subr.mxu0 0.0
  %608 = vmatpush1.msra.mxu0 0.0
  %609 = vmatprep.subr.mxu0 0.0
  %610 = vmatpush1.msra.mxu0 0.0
  %611 = vmatprep.subr.mxu0 0.0
  %612 = vmatpush1.msra.mxu0 0.0
  %613 = vmatprep.subr.mxu0 0.0
  %614 = vmatpush1.msra.mxu0 0.0
  %615 = vmatprep.subr.mxu0 0.0
  %616 = vmatpush1.msra.mxu0 0.0
  %617 = vmatprep.subr.mxu0 0.0
  %618 = vmatpush1.msra.mxu0 0.0
  %619 = vmatprep.subr.mxu0 0.0
  %620 = vmatpush1.msra.mxu0 0.0
  %621 = vmatprep.subr.mxu0 0.0
  %622 = vmatpush1.msra.mxu0 0.0
  %623 = vmatprep.subr.mxu0 0.0
  %624 = vmatpush1.msra.mxu0 0.0
  %625 = vmatprep.subr.mxu0 0.0
  %626 = vmatpush1.msra.mxu0 0.0
  %627 = vmatprep.subr.mxu0 0.0
  %628 = vmatpush1.msra.mxu0 0.0
  %629 = vmatprep.subr.mxu0 0.0
  %630 = vmatpush1.msra.mxu0 0.0
  %631 = vmatprep.subr.mxu0 0.0
  %632 = vmatpush1.msra.mxu0 0.0
  %633 = vmatprep.subr.mxu0 0.0
  %634 = vmatpush1.msra.mxu0 0.0
  %635 = vmatprep.subr.mxu0 0.0
  %636 = vmatpush1.msra.mxu0 0.0
  %637 = vmatprep.subr.mxu0 0.0
  %638 = vmatpush1.msra.mxu0 0.0
  %639 = vmatprep.subr.mxu0 0.0
  %640 = vmatpush1.msra.mxu0 0.0
  %641 = vmatprep.subr.mxu0 0.0
  %642 = vmatpush1.msra.mxu0 0.0
  %643 = vmatprep.subr.mxu0 0.0
  %644 = vmatpush1.msra.mxu0 0.0
  %645 = vmatprep.subr.mxu0 0.0
  %646 = vmatpush1.msra.mxu0 0.0
  %647 = vmatprep.subr.mxu0 0.0
  %648 = vmatpush1.msra.mxu0 0.0
  %649 = vmatprep.subr.mxu0 0.0
  %650 = vmatpush1.msra.mxu0 0.0
  %651 = vmatprep.subr.mxu0 0.0
  %652 = vmatpush1.msra.mxu0 0.0
  %653 = vmatprep.subr.mxu0 0.0
  %654 = vmatpush1.msra.mxu0 0.0
  %655 = vmatprep.subr.mxu0 0.0
  %656 = vmatpush1.msra.mxu0 0.0
  %657 = vmatprep.subr.mxu0 0.0
  %658 = vmatpush1.msra.mxu0 0.0
  %659 = vmatprep.subr.mxu0 0.0
  %660 = vmatpush1.msra.mxu0 0.0
  %661 = vmatprep.subr.mxu0 0.0
  %662 = vmatpush1.msra.mxu0 0.0
  %663 = vmatprep.subr.mxu0 0.0
  %664 = vmatpush1.msra.mxu0 0.0
  %665 = vmatprep.subr.mxu0 0.0
  %666 = vmatpush1.msra.mxu0 0.0
  %667 = vmatprep.subr.mxu0 0.0
  %668 = vmatpush1.msra.mxu0 0.0
  %669 = vmatprep.mubr.f32.mxu0 0.0
  %670 = vmatmul.mubr.f32.gmra.mrb[0].mxu0 %v603
  %v671 = vpop.f32.mrb[0].mxu0
  %v672 = vadd.f32 0.0, %v671
  %v673 = vpop.f32.mrb[0].mxu0
  %674 = vdwg.mxu0
  %vm675 = vcmp.gt.f32.partialorder %v672, 0.0
  %v676 = vmin.f32 %v672, 0.0
  %v677 = vmul.f32 %v676, 1.442695
  %v678 = vpow.pop %v677
  %v679 = vsub.f32 %v678, 1.0
  %v680 = vsel %vm675, %v672, %v679
  %681 = vst.msk [vmem:[%s5 + $0x8] sm:$0xff] %vm29, %v680
  %682 = vxpose.xlu0.b32.start [1/16] %v377, 128
  %683 = vxpose.xlu0.b32.cont [2/16] 0.0, 128
  %684 = vxpose.xlu0.b32.cont [3/16] 0.0, 128
  %685 = vxpose.xlu0.b32.cont [4/16] 0.0, 128
  %686 = vxpose.xlu0.b32.cont [5/16] 0.0, 128
  %687 = vxpose.xlu0.b32.cont [6/16] 0.0, 128
  %688 = vxpose.xlu0.b32.cont [7/16] 0.0, 128
  %689 = vxpose.xlu0.b32.cont [8/16] 0.0, 128
  %690 = vxpose.xlu0.b32.cont [9/16] 0.0, 128
  %691 = vxpose.xlu0.b32.cont [10/16] 0.0, 128
  %692 = vxpose.xlu0.b32.cont [11/16] 0.0, 128
  %693 = vxpose.xlu0.b32.cont [12/16] 0.0, 128
  %694 = vxpose.xlu0.b32.cont [13/16] 0.0, 128
  %695 = vxpose.xlu0.b32.cont [14/16] 0.0, 128
  %696 = vxpose.xlu0.b32.cont [15/16] 0.0, 128
  %697 = vxpose.xlu0.b32.end [16/16] 0.0, 128
  %v698 = vpop.trf.xlu0
  %v699 = vpop.trf.xlu0
  %v700 = vpop.trf.xlu0
  %v701 = vpop.trf.xlu0
  %v702 = vpop.trf.xlu0
  %v703 = vpop.trf.xlu0
  %v704 = vpop.trf.xlu0
  %v705 = vpop.trf.xlu0
  %v706 = vpop.trf.xlu0
  %v707 = vpop.trf.xlu0
  %v708 = vpop.trf.xlu0
  %v709 = vpop.trf.xlu0
  %v710 = vpop.trf.xlu0
  %v711 = vpop.trf.xlu0
  %v712 = vpop.trf.xlu0
  %v713 = vpop.trf.xlu0
  %715 = vset.pattern.permute.xlu0 0
  %716 = vperm.xlu0 %715, %v268
  %v717 = vpop.permute.xlu0 %716
  %v719 = vlaneseq
  %v720 = vshrl.u32 %v719, 7
  %v721 = vsub.s32 0, %v720
  %v722 = vrot.slane %v698, %v721
  %v723 = vadd.f32 %v717, %v722
  %vm724 = vcmp.gt.f32.partialorder %v723, 0.0
  %v725 = vmul.f32 %v723, 0.1
  %v726 = vsel %vm724, %v723, %v725
  %v727 = vsel %vm406, %v726, -9e+15
  %v728 = vsel %vm453, %v727, -inf
  %729 = vmax.xlane.f32.xlu0 %v728
  %v730 = vpop.xlane.xlu0 %729
  %v731 = vsub.f32 %v727, %v730
  %v732 = vmul.f32 %v731, 1.442695
  %v733 = vpow.pop %v732
  %v734 = vsel %vm453, %v733, 0.0
  %735 = vadd.xlane.f32.xlu0 %v734
  %v736 = vpop.xlane.xlu0 %735
  %v737 = vrcp.pop %v736
  %v738 = vmul.f32 %v733, %v737
  %v740 = vsel %vm453, %v738, 0
  %742 = vmatprep.subr.mxu0 0.0
  %743 = vmatpush1.msra.mxu0 %v135
  %744 = vmatprep.subr.mxu0 0.0
  %745 = vmatpush1.msra.mxu0 0.0
  %746 = vmatprep.subr.mxu0 0.0
  %747 = vmatpush1.msra.mxu0 0.0
  %748 = vmatprep.subr.mxu0 0.0
  %749 = vmatpush1.msra.mxu0 0.0
  %750 = vmatprep.subr.mxu0 0.0
  %751 = vmatpush1.msra.mxu0 0.0
  %752 = vmatprep.subr.mxu0 0.0
  %753 = vmatpush1.msra.mxu0 0.0
  %754 = vmatprep.subr.mxu0 0.0
  %755 = vmatpush1.msra.mxu0 0.0
  %756 = vmatprep.subr.mxu0 0.0
  %757 = vmatpush1.msra.mxu0 0.0
  %758 = vmatprep.subr.mxu0 0.0
  %759 = vmatpush1.msra.mxu0 0.0
  %760 = vmatprep.subr.mxu0 0.0
  %761 = vmatpush1.msra.mxu0 0.0
  %762 = vmatprep.subr.mxu0 0.0
  %763 = vmatpush1.msra.mxu0 0.0
  %764 = vmatprep.subr.mxu0 0.0
  %765 = vmatpush1.msra.mxu0 0.0
  %766 = vmatprep.subr.mxu0 0.0
  %767 = vmatpush1.msra.mxu0 0.0
  %768 = vmatprep.subr.mxu0 0.0
  %769 = vmatpush1.msra.mxu0 0.0
  %770 = vmatprep.subr.mxu0 0.0
  %771 = vmatpush1.msra.mxu0 0.0
  %772 = vmatprep.subr.mxu0 0.0
  %773 = vmatpush1.msra.mxu0 0.0
  %774 = vmatprep.subr.mxu0 0.0
  %775 = vmatpush1.msra.mxu0 0.0
  %776 = vmatprep.subr.mxu0 0.0
  %777 = vmatpush1.msra.mxu0 0.0
  %778 = vmatprep.subr.mxu0 0.0
  %779 = vmatpush1.msra.mxu0 0.0
  %780 = vmatprep.subr.mxu0 0.0
  %781 = vmatpush1.msra.mxu0 0.0
  %782 = vmatprep.subr.mxu0 0.0
  %783 = vmatpush1.msra.mxu0 0.0
  %784 = vmatprep.subr.mxu0 0.0
  %785 = vmatpush1.msra.mxu0 0.0
  %786 = vmatprep.subr.mxu0 0.0
  %787 = vmatpush1.msra.mxu0 0.0
  %788 = vmatprep.subr.mxu0 0.0
  %789 = vmatpush1.msra.mxu0 0.0
  %790 = vmatprep.subr.mxu0 0.0
  %791 = vmatpush1.msra.mxu0 0.0
  %792 = vmatprep.subr.mxu0 0.0
  %793 = vmatpush1.msra.mxu0 0.0
  %794 = vmatprep.subr.mxu0 0.0
  %795 = vmatpush1.msra.mxu0 0.0
  %796 = vmatprep.subr.mxu0 0.0
  %797 = vmatpush1.msra.mxu0 0.0
  %798 = vmatprep.subr.mxu0 0.0
  %799 = vmatpush1.msra.mxu0 0.0
  %800 = vmatprep.subr.mxu0 0.0
  %801 = vmatpush1.msra.mxu0 0.0
  %802 = vmatprep.subr.mxu0 0.0
  %803 = vmatpush1.msra.mxu0 0.0
  %804 = vmatprep.subr.mxu0 0.0
  %805 = vmatpush1.msra.mxu0 0.0
  %806 = vmatprep.mubr.f32.mxu0 0.0
  %807 = vmatmul.mubr.f32.gmra.mrb[0].mxu0 %v740
  %v808 = vpop.f32.mrb[0].mxu0
  %v809 = vadd.f32 0.0, %v808
  %v810 = vpop.f32.mrb[0].mxu0
  %811 = vdwg.mxu0
  %vm812 = vcmp.gt.f32.partialorder %v809, 0.0
  %v813 = vmin.f32 %v809, 0.0
  %v814 = vmul.f32 %v813, 1.442695
  %v815 = vpow.pop %v814
  %v816 = vsub.f32 %v815, 1.0
  %v817 = vsel %vm812, %v809, %v816
  %818 = vst.msk [vmem:[%s5 + $0x10] sm:$0xff] %vm29, %v817
  %819 = vxpose.xlu0.b32.start [1/16] %v382, 128
  %820 = vxpose.xlu0.b32.cont [2/16] 0.0, 128
  %821 = vxpose.xlu0.b32.cont [3/16] 0.0, 128
  %822 = vxpose.xlu0.b32.cont [4/16] 0.0, 128
  %823 = vxpose.xlu0.b32.cont [5/16] 0.0, 128
  %824 = vxpose.xlu0.b32.cont [6/16] 0.0, 128
  %825 = vxpose.xlu0.b32.cont [7/16] 0.0, 128
  %826 = vxpose.xlu0.b32.cont [8/16] 0.0, 128
  %827 = vxpose.xlu0.b32.cont [9/16] 0.0, 128
  %828 = vxpose.xlu0.b32.cont [10/16] 0.0, 128
  %829 = vxpose.xlu0.b32.cont [11/16] 0.0, 128
  %830 = vxpose.xlu0.b32.cont [12/16] 0.0, 128
  %831 = vxpose.xlu0.b32.cont [13/16] 0.0, 128
  %832 = vxpose.xlu0.b32.cont [14/16] 0.0, 128
  %833 = vxpose.xlu0.b32.cont [15/16] 0.0, 128
  %834 = vxpose.xlu0.b32.end [16/16] 0.0, 128
  %v835 = vpop.trf.xlu0
  %v836 = vpop.trf.xlu0
  %v837 = vpop.trf.xlu0
  %v838 = vpop.trf.xlu0
  %v839 = vpop.trf.xlu0
  %v840 = vpop.trf.xlu0
  %v841 = vpop.trf.xlu0
  %v842 = vpop.trf.xlu0
  %v843 = vpop.trf.xlu0
  %v844 = vpop.trf.xlu0
  %v845 = vpop.trf.xlu0
  %v846 = vpop.trf.xlu0
  %v847 = vpop.trf.xlu0
  %v848 = vpop.trf.xlu0
  %v849 = vpop.trf.xlu0
  %v850 = vpop.trf.xlu0
  %852 = vset.pattern.permute.xlu0 0
  %853 = vperm.xlu0 %852, %v273
  %v854 = vpop.permute.xlu0 %853
  %v856 = vlaneseq
  %v857 = vshrl.u32 %v856, 7
  %v858 = vsub.s32 0, %v857
  %v859 = vrot.slane %v835, %v858
  %v860 = vadd.f32 %v854, %v859
  %vm861 = vcmp.gt.f32.partialorder %v860, 0.0
  %v862 = vmul.f32 %v860, 0.1
  %v863 = vsel %vm861, %v860, %v862
  %v864 = vsel %vm406, %v863, -9e+15
  %v865 = vsel %vm453, %v864, -inf
  %866 = vmax.xlane.f32.xlu0 %v865
  %v867 = vpop.xlane.xlu0 %866
  %v868 = vsub.f32 %v864, %v867
  %v869 = vmul.f32 %v868, 1.442695
  %v870 = vpow.pop %v869
  %v871 = vsel %vm453, %v870, 0.0
  %872 = vadd.xlane.f32.xlu0 %v871
  %v873 = vpop.xlane.xlu0 %872
  %v874 = vrcp.pop %v873
  %v875 = vmul.f32 %v870, %v874
  %v877 = vsel %vm453, %v875, 0
  %879 = vmatprep.subr.mxu0 0.0
  %880 = vmatpush1.msra.mxu0 %v140
  %881 = vmatprep.subr.mxu0 0.0
  %882 = vmatpush1.msra.mxu0 0.0
  %883 = vmatprep.subr.mxu0 0.0
  %884 = vmatpush1.msra.mxu0 0.0
  %885 = vmatprep.subr.mxu0 0.0
  %886 = vmatpush1.msra.mxu0 0.0
  %887 = vmatprep.subr.mxu0 0.0
  %888 = vmatpush1.msra.mxu0 0.0
  %889 = vmatprep.subr.mxu0 0.0
  %890 = vmatpush1.msra.mxu0 0.0
  %891 = vmatprep.subr.mxu0 0.0
  %892 = vmatpush1.msra.mxu0 0.0
  %893 = vmatprep.subr.mxu0 0.0
  %894 = vmatpush1.msra.mxu0 0.0
  %895 = vmatprep.subr.mxu0 0.0
  %896 = vmatpush1.msra.mxu0 0.0
  %897 = vmatprep.subr.mxu0 0.0
  %898 = vmatpush1.msra.mxu0 0.0
  %899 = vmatprep.subr.mxu0 0.0
  %900 = vmatpush1.msra.mxu0 0.0
  %901 = vmatprep.subr.mxu0 0.0
  %902 = vmatpush1.msra.mxu0 0.0
  %903 = vmatprep.subr.mxu0 0.0
  %904 = vmatpush1.msra.mxu0 0.0
  %905 = vmatprep.subr.mxu0 0.0
  %906 = vmatpush1.msra.mxu0 0.0
  %907 = vmatprep.subr.mxu0 0.0
  %908 = vmatpush1.msra.mxu0 0.0
  %909 = vmatprep.subr.mxu0 0.0
  %910 = vmatpush1.msra.mxu0 0.0
  %911 = vmatprep.subr.mxu0 0.0
  %912 = vmatpush1.msra.mxu0 0.0
  %913 = vmatprep.subr.mxu0 0.0
  %914 = vmatpush1.msra.mxu0 0.0
  %915 = vmatprep.subr.mxu0 0.0
  %916 = vmatpush1.msra.mxu0 0.0
  %917 = vmatprep.subr.mxu0 0.0
  %918 = vmatpush1.msra.mxu0 0.0
  %919 = vmatprep.subr.mxu0 0.0
  %920 = vmatpush1.msra.mxu0 0.0
  %921 = vmatprep.subr.mxu0 0.0
  %922 = vmatpush1.msra.mxu0 0.0
  %923 = vmatprep.subr.mxu0 0.0
  %924 = vmatpush1.msra.mxu0 0.0
  %925 = vmatprep.subr.mxu0 0.0
  %926 = vmatpush1.msra.mxu0 0.0
  %927 = vmatprep.subr.mxu0 0.0
  %928 = vmatpush1.msra.mxu0 0.0
  %929 = vmatprep.subr.mxu0 0.0
  %930 = vmatpush1.msra.mxu0 0.0
  %931 = vmatprep.subr.mxu0 0.0
  %932 = vmatpush1.msra.mxu0 0.0
  %933 = vmatprep.subr.mxu0 0.0
  %934 = vmatpush1.msra.mxu0 0.0
  %935 = vmatprep.subr.mxu0 0.0
  %936 = vmatpush1.msra.mxu0 0.0
  %937 = vmatprep.subr.mxu0 0.0
  %938 = vmatpush1.msra.mxu0 0.0
  %939 = vmatprep.subr.mxu0 0.0
  %940 = vmatpush1.msra.mxu0 0.0
  %941 = vmatprep.subr.mxu0 0.0
  %942 = vmatpush1.msra.mxu0 0.0
  %943 = vmatprep.mubr.f32.mxu0 0.0
  %944 = vmatmul.mubr.f32.gmra.mrb[0].mxu0 %v877
  %v945 = vpop.f32.mrb[0].mxu0
  %v946 = vadd.f32 0.0, %v945
  %v947 = vpop.f32.mrb[0].mxu0
  %948 = vdwg.mxu0
  %vm949 = vcmp.gt.f32.partialorder %v946, 0.0
  %v950 = vmin.f32 %v946, 0.0
  %v951 = vmul.f32 %v950, 1.442695
  %v952 = vpow.pop %v951
  %v953 = vsub.f32 %v952, 1.0
  %v954 = vsel %vm949, %v946, %v953
  %955 = vst.msk [vmem:[%s5 + $0x18] sm:$0xff] %vm29, %v954
  %956 = vxpose.xlu0.b32.start [1/16] %v387, 128
  %957 = vxpose.xlu0.b32.cont [2/16] 0.0, 128
  %958 = vxpose.xlu0.b32.cont [3/16] 0.0, 128
  %959 = vxpose.xlu0.b32.cont [4/16] 0.0, 128
  %960 = vxpose.xlu0.b32.cont [5/16] 0.0, 128
  %961 = vxpose.xlu0.b32.cont [6/16] 0.0, 128
  %962 = vxpose.xlu0.b32.cont [7/16] 0.0, 128
  %963 = vxpose.xlu0.b32.cont [8/16] 0.0, 128
  %964 = vxpose.xlu0.b32.cont [9/16] 0.0, 128
  %965 = vxpose.xlu0.b32.cont [10/16] 0.0, 128
  %966 = vxpose.xlu0.b32.cont [11/16] 0.0, 128
  %967 = vxpose.xlu0.b32.cont [12/16] 0.0, 128
  %968 = vxpose.xlu0.b32.cont [13/16] 0.0, 128
  %969 = vxpose.xlu0.b32.cont [14/16] 0.0, 128
  %970 = vxpose.xlu0.b32.cont [15/16] 0.0, 128
  %971 = vxpose.xlu0.b32.end [16/16] 0.0, 128
  %v972 = vpop.trf.xlu0
  %v973 = vpop.trf.xlu0
  %v974 = vpop.trf.xlu0
  %v975 = vpop.trf.xlu0
  %v976 = vpop.trf.xlu0
  %v977 = vpop.trf.xlu0
  %v978 = vpop.trf.xlu0
  %v979 = vpop.trf.xlu0
  %v980 = vpop.trf.xlu0
  %v981 = vpop.trf.xlu0
  %v982 = vpop.trf.xlu0
  %v983 = vpop.trf.xlu0
  %v984 = vpop.trf.xlu0
  %v985 = vpop.trf.xlu0
  %v986 = vpop.trf.xlu0
  %v987 = vpop.trf.xlu0
  %989 = vset.pattern.permute.xlu0 0
  %990 = vperm.xlu0 %989, %v278
  %v991 = vpop.permute.xlu0 %990
  %v993 = vlaneseq
  %v994 = vshrl.u32 %v993, 7
  %v995 = vsub.s32 0, %v994
  %v996 = vrot.slane %v972, %v995
  %v997 = vadd.f32 %v991, %v996
  %vm998 = vcmp.gt.f32.partialorder %v997, 0.0
  %v999 = vmul.f32 %v997, 0.1
  %v1000 = vsel %vm998, %v997, %v999
  %v1001 = vsel %vm406, %v1000, -9e+15
  %v1002 = vsel %vm453, %v1001, -inf
  %1003 = vmax.xlane.f32.xlu0 %v1002
  %v1004 = vpop.xlane.xlu0 %1003
  %v1005 = vsub.f32 %v1001, %v1004
  %v1006 = vmul.f32 %v1005, 1.442695
  %v1007 = vpow.pop %v1006
  %v1008 = vsel %vm453, %v1007, 0.0
  %1009 = vadd.xlane.f32.xlu0 %v1008
  %v1010 = vpop.xlane.xlu0 %1009
  %v1011 = vrcp.pop %v1010
  %v1012 = vmul.f32 %v1007, %v1011
  %v1014 = vsel %vm453, %v1012, 0
  %1016 = vmatprep.subr.mxu0 0.0
  %1017 = vmatpush1.msra.mxu0 %v145
  %1018 = vmatprep.subr.mxu0 0.0
  %1019 = vmatpush1.msra.mxu0 0.0
  %1020 = vmatprep.subr.mxu0 0.0
  %1021 = vmatpush1.msra.mxu0 0.0
  %1022 = vmatprep.subr.mxu0 0.0
  %1023 = vmatpush1.msra.mxu0 0.0
  %1024 = vmatprep.subr.mxu0 0.0
  %1025 = vmatpush1.msra.mxu0 0.0
  %1026 = vmatprep.subr.mxu0 0.0
  %1027 = vmatpush1.msra.mxu0 0.0
  %1028 = vmatprep.subr.mxu0 0.0
  %1029 = vmatpush1.msra.mxu0 0.0
  %1030 = vmatprep.subr.mxu0 0.0
  %1031 = vmatpush1.msra.mxu0 0.0
  %1032 = vmatprep.subr.mxu0 0.0
  %1033 = vmatpush1.msra.mxu0 0.0
  %1034 = vmatprep.subr.mxu0 0.0
  %1035 = vmatpush1.msra.mxu0 0.0
  %1036 = vmatprep.subr.mxu0 0.0
  %1037 = vmatpush1.msra.mxu0 0.0
  %1038 = vmatprep.subr.mxu0 0.0
  %1039 = vmatpush1.msra.mxu0 0.0
  %1040 = vmatprep.subr.mxu0 0.0
  %1041 = vmatpush1.msra.mxu0 0.0
  %1042 = vmatprep.subr.mxu0 0.0
  %1043 = vmatpush1.msra.mxu0 0.0
  %1044 = vmatprep.subr.mxu0 0.0
  %1045 = vmatpush1.msra.mxu0 0.0
  %1046 = vmatprep.subr.mxu0 0.0
  %1047 = vmatpush1.msra.mxu0 0.0
  %1048 = vmatprep.subr.mxu0 0.0
  %1049 = vmatpush1.msra.mxu0 0.0
  %1050 = vmatprep.subr.mxu0 0.0
  %1051 = vmatpush1.msra.mxu0 0.0
  %1052 = vmatprep.subr.mxu0 0.0
  %1053 = vmatpush1.msra.mxu0 0.0
  %1054 = vmatprep.subr.mxu0 0.0
  %1055 = vmatpush1.msra.mxu0 0.0
  %1056 = vmatprep.subr.mxu0 0.0
  %1057 = vmatpush1.msra.mxu0 0.0
  %1058 = vmatprep.subr.mxu0 0.0
  %1059 = vmatpush1.msra.mxu0 0.0
  %1060 = vmatprep.subr.mxu0 0.0
  %1061 = vmatpush1.msra.mxu0 0.0
  %1062 = vmatprep.subr.mxu0 0.0
  %1063 = vmatpush1.msra.mxu0 0.0
  %1064 = vmatprep.subr.mxu0 0.0
  %1065 = vmatpush1.msra.mxu0 0.0
  %1066 = vmatprep.subr.mxu0 0.0
  %1067 = vmatpush1.msra.mxu0 0.0
  %1068 = vmatprep.subr.mxu0 0.0
  %1069 = vmatpush1.msra.mxu0 0.0
  %1070 = vmatprep.subr.mxu0 0.0
  %1071 = vmatpush1.msra.mxu0 0.0
  %1072 = vmatprep.subr.mxu0 0.0
  %1073 = vmatpush1.msra.mxu0 0.0
  %1074 = vmatprep.subr.mxu0 0.0
  %1075 = vmatpush1.msra.mxu0 0.0
  %1076 = vmatprep.subr.mxu0 0.0
  %1077 = vmatpush1.msra.mxu0 0.0
  %1078 = vmatprep.subr.mxu0 0.0
  %1079 = vmatpush1.msra.mxu0 0.0
  %1080 = vmatprep.mubr.f32.mxu0 0.0
  %1081 = vmatmul.mubr.f32.gmra.mrb[0].mxu0 %v1014
  %v1082 = vpop.f32.mrb[0].mxu0
  %v1083 = vadd.f32 0.0, %v1082
  %v1084 = vpop.f32.mrb[0].mxu0
  %1085 = vdwg.mxu0
  %vm1086 = vcmp.gt.f32.partialorder %v1083, 0.0
  %v1087 = vmin.f32 %v1083, 0.0
  %v1088 = vmul.f32 %v1087, 1.442695
  %v1089 = vpow.pop %v1088
  %v1090 = vsub.f32 %v1089, 1.0
  %v1091 = vsel %vm1086, %v1083, %v1090
  %1092 = vst.msk [vmem:[%s5 + $0x20] sm:$0xff] %vm29, %v1091
  %1093 = vxpose.xlu0.b32.start [1/16] %v392, 128
  %1094 = vxpose.xlu0.b32.cont [2/16] 0.0, 128
  %1095 = vxpose.xlu0.b32.cont [3/16] 0.0, 128
  %1096 = vxpose.xlu0.b32.cont [4/16] 0.0, 128
  %1097 = vxpose.xlu0.b32.cont [5/16] 0.0, 128
  %1098 = vxpose.xlu0.b32.cont [6/16] 0.0, 128
  %1099 = vxpose.xlu0.b32.cont [7/16] 0.0, 128
  %1100 = vxpose.xlu0.b32.cont [8/16] 0.0, 128
  %1101 = vxpose.xlu0.b32.cont [9/16] 0.0, 128
  %1102 = vxpose.xlu0.b32.cont [10/16] 0.0, 128
  %1103 = vxpose.xlu0.b32.cont [11/16] 0.0, 128
  %1104 = vxpose.xlu0.b32.cont [12/16] 0.0, 128
  %1105 = vxpose.xlu0.b32.cont [13/16] 0.0, 128
  %1106 = vxpose.xlu0.b32.cont [14/16] 0.0, 128
  %1107 = vxpose.xlu0.b32.cont [15/16] 0.0, 128
  %1108 = vxpose.xlu0.b32.end [16/16] 0.0, 128
  %v1109 = vpop.trf.xlu0
  %v1110 = vpop.trf.xlu0
  %v1111 = vpop.trf.xlu0
  %v1112 = vpop.trf.xlu0
  %v1113 = vpop.trf.xlu0
  %v1114 = vpop.trf.xlu0
  %v1115 = vpop.trf.xlu0
  %v1116 = vpop.trf.xlu0
  %v1117 = vpop.trf.xlu0
  %v1118 = vpop.trf.xlu0
  %v1119 = vpop.trf.xlu0
  %v1120 = vpop.trf.xlu0
  %v1121 = vpop.trf.xlu0
  %v1122 = vpop.trf.xlu0
  %v1123 = vpop.trf.xlu0
  %v1124 = vpop.trf.xlu0
  %1126 = vset.pattern.permute.xlu0 0
  %1127 = vperm.xlu0 %1126, %v283
  %v1128 = vpop.permute.xlu0 %1127
  %v1130 = vlaneseq
  %v1131 = vshrl.u32 %v1130, 7
  %v1132 = vsub.s32 0, %v1131
  %v1133 = vrot.slane %v1109, %v1132
  %v1134 = vadd.f32 %v1128, %v1133
  %vm1135 = vcmp.gt.f32.partialorder %v1134, 0.0
  %v1136 = vmul.f32 %v1134, 0.1
  %v1137 = vsel %vm1135, %v1134, %v1136
  %v1138 = vsel %vm406, %v1137, -9e+15
  %v1139 = vsel %vm453, %v1138, -inf
  %1140 = vmax.xlane.f32.xlu0 %v1139
  %v1141 = vpop.xlane.xlu0 %1140
  %v1142 = vsub.f32 %v1138, %v1141
  %v1143 = vmul.f32 %v1142, 1.442695
  %v1144 = vpow.pop %v1143
  %v1145 = vsel %vm453, %v1144, 0.0
  %1146 = vadd.xlane.f32.xlu0 %v1145
  %v1147 = vpop.xlane.xlu0 %1146
  %v1148 = vrcp.pop %v1147
  %v1149 = vmul.f32 %v1144, %v1148
  %v1151 = vsel %vm453, %v1149, 0
  %1153 = vmatprep.subr.mxu0 0.0
  %1154 = vmatpush1.msra.mxu0 %v150
  %1155 = vmatprep.subr.mxu0 0.0
  %1156 = vmatpush1.msra.mxu0 0.0
  %1157 = vmatprep.subr.mxu0 0.0
  %1158 = vmatpush1.msra.mxu0 0.0
  %1159 = vmatprep.subr.mxu0 0.0
  %1160 = vmatpush1.msra.mxu0 0.0
  %1161 = vmatprep.subr.mxu0 0.0
  %1162 = vmatpush1.msra.mxu0 0.0
  %1163 = vmatprep.subr.mxu0 0.0
  %1164 = vmatpush1.msra.mxu0 0.0
  %1165 = vmatprep.subr.mxu0 0.0
  %1166 = vmatpush1.msra.mxu0 0.0
  %1167 = vmatprep.subr.mxu0 0.0
  %1168 = vmatpush1.msra.mxu0 0.0
  %1169 = vmatprep.subr.mxu0 0.0
  %1170 = vmatpush1.msra.mxu0 0.0
  %1171 = vmatprep.subr.mxu0 0.0
  %1172 = vmatpush1.msra.mxu0 0.0
  %1173 = vmatprep.subr.mxu0 0.0
  %1174 = vmatpush1.msra.mxu0 0.0
  %1175 = vmatprep.subr.mxu0 0.0
  %1176 = vmatpush1.msra.mxu0 0.0
  %1177 = vmatprep.subr.mxu0 0.0
  %1178 = vmatpush1.msra.mxu0 0.0
  %1179 = vmatprep.subr.mxu0 0.0
  %1180 = vmatpush1.msra.mxu0 0.0
  %1181 = vmatprep.subr.mxu0 0.0
  %1182 = vmatpush1.msra.mxu0 0.0
  %1183 = vmatprep.subr.mxu0 0.0
  %1184 = vmatpush1.msra.mxu0 0.0
  %1185 = vmatprep.subr.mxu0 0.0
  %1186 = vmatpush1.msra.mxu0 0.0
  %1187 = vmatprep.subr.mxu0 0.0
  %1188 = vmatpush1.msra.mxu0 0.0
  %1189 = vmatprep.subr.mxu0 0.0
  %1190 = vmatpush1.msra.mxu0 0.0
  %1191 = vmatprep.subr.mxu0 0.0
  %1192 = vmatpush1.msra.mxu0 0.0
  %1193 = vmatprep.subr.mxu0 0.0
  %1194 = vmatpush1.msra.mxu0 0.0
  %1195 = vmatprep.subr.mxu0 0.0
  %1196 = vmatpush1.msra.mxu0 0.0
  %1197 = vmatprep.subr.mxu0 0.0
  %1198 = vmatpush1.msra.mxu0 0.0
  %1199 = vmatprep.subr.mxu0 0.0
  %1200 = vmatpush1.msra.mxu0 0.0
  %1201 = vmatprep.subr.mxu0 0.0
  %1202 = vmatpush1.msra.mxu0 0.0
  %1203 = vmatprep.subr.mxu0 0.0
  %1204 = vmatpush1.msra.mxu0 0.0
  %1205 = vmatprep.subr.mxu0 0.0
  %1206 = vmatpush1.msra.mxu0 0.0
  %1207 = vmatprep.subr.mxu0 0.0
  %1208 = vmatpush1.msra.mxu0 0.0
  %1209 = vmatprep.subr.mxu0 0.0
  %1210 = vmatpush1.msra.mxu0 0.0
  %1211 = vmatprep.subr.mxu0 0.0
  %1212 = vmatpush1.msra.mxu0 0.0
  %1213 = vmatprep.subr.mxu0 0.0
  %1214 = vmatpush1.msra.mxu0 0.0
  %1215 = vmatprep.subr.mxu0 0.0
  %1216 = vmatpush1.msra.mxu0 0.0
  %1217 = vmatprep.mubr.f32.mxu0 0.0
  %1218 = vmatmul.mubr.f32.gmra.mrb[0].mxu0 %v1151
  %v1219 = vpop.f32.mrb[0].mxu0
  %v1220 = vadd.f32 0.0, %v1219
  %v1221 = vpop.f32.mrb[0].mxu0
  %1222 = vdwg.mxu0
  %vm1223 = vcmp.gt.f32.partialorder %v1220, 0.0
  %v1224 = vmin.f32 %v1220, 0.0
  %v1225 = vmul.f32 %v1224, 1.442695
  %v1226 = vpow.pop %v1225
  %v1227 = vsub.f32 %v1226, 1.0
  %v1228 = vsel %vm1223, %v1220, %v1227
  %1229 = vst.msk [vmem:[%s5 + $0x28] sm:$0xff] %vm29, %v1228
  %1230 = vxpose.xlu0.b32.start [1/16] %v397, 128
  %1231 = vxpose.xlu0.b32.cont [2/16] 0.0, 128
  %1232 = vxpose.xlu0.b32.cont [3/16] 0.0, 128
  %1233 = vxpose.xlu0.b32.cont [4/16] 0.0, 128
  %1234 = vxpose.xlu0.b32.cont [5/16] 0.0, 128
  %1235 = vxpose.xlu0.b32.cont [6/16] 0.0, 128
  %1236 = vxpose.xlu0.b32.cont [7/16] 0.0, 128
  %1237 = vxpose.xlu0.b32.cont [8/16] 0.0, 128
  %1238 = vxpose.xlu0.b32.cont [9/16] 0.0, 128
  %1239 = vxpose.xlu0.b32.cont [10/16] 0.0, 128
  %1240 = vxpose.xlu0.b32.cont [11/16] 0.0, 128
  %1241 = vxpose.xlu0.b32.cont [12/16] 0.0, 128
  %1242 = vxpose.xlu0.b32.cont [13/16] 0.0, 128
  %1243 = vxpose.xlu0.b32.cont [14/16] 0.0, 128
  %1244 = vxpose.xlu0.b32.cont [15/16] 0.0, 128
  %1245 = vxpose.xlu0.b32.end [16/16] 0.0, 128
  %v1246 = vpop.trf.xlu0
  %v1247 = vpop.trf.xlu0
  %v1248 = vpop.trf.xlu0
  %v1249 = vpop.trf.xlu0
  %v1250 = vpop.trf.xlu0
  %v1251 = vpop.trf.xlu0
  %v1252 = vpop.trf.xlu0
  %v1253 = vpop.trf.xlu0
  %v1254 = vpop.trf.xlu0
  %v1255 = vpop.trf.xlu0
  %v1256 = vpop.trf.xlu0
  %v1257 = vpop.trf.xlu0
  %v1258 = vpop.trf.xlu0
  %v1259 = vpop.trf.xlu0
  %v1260 = vpop.trf.xlu0
  %v1261 = vpop.trf.xlu0
  %1263 = vset.pattern.permute.xlu0 0
  %1264 = vperm.xlu0 %1263, %v288
  %v1265 = vpop.permute.xlu0 %1264
  %v1267 = vlaneseq
  %v1268 = vshrl.u32 %v1267, 7
  %v1269 = vsub.s32 0, %v1268
  %v1270 = vrot.slane %v1246, %v1269
  %v1271 = vadd.f32 %v1265, %v1270
  %vm1272 = vcmp.gt.f32.partialorder %v1271, 0.0
  %v1273 = vmul.f32 %v1271, 0.1
  %v1274 = vsel %vm1272, %v1271, %v1273
  %v1275 = vsel %vm406, %v1274, -9e+15
  %v1276 = vsel %vm453, %v1275, -inf
  %1277 = vmax.xlane.f32.xlu0 %v1276
  %v1278 = vpop.xlane.xlu0 %1277
  %v1279 = vsub.f32 %v1275, %v1278
  %v1280 = vmul.f32 %v1279, 1.442695
  %v1281 = vpow.pop %v1280
  %v1282 = vsel %vm453, %v1281, 0.0
  %1283 = vadd.xlane.f32.xlu0 %v1282
  %v1284 = vpop.xlane.xlu0 %1283
  %v1285 = vrcp.pop %v1284
  %v1286 = vmul.f32 %v1281, %v1285
  %v1288 = vsel %vm453, %v1286, 0
  %1290 = vmatprep.subr.mxu0 0.0
  %1291 = vmatpush1.msra.mxu0 %v155
  %1292 = vmatprep.subr.mxu0 0.0
  %1293 = vmatpush1.msra.mxu0 0.0
  %1294 = vmatprep.subr.mxu0 0.0
  %1295 = vmatpush1.msra.mxu0 0.0
  %1296 = vmatprep.subr.mxu0 0.0
  %1297 = vmatpush1.msra.mxu0 0.0
  %1298 = vmatprep.subr.mxu0 0.0
  %1299 = vmatpush1.msra.mxu0 0.0
  %1300 = vmatprep.subr.mxu0 0.0
  %1301 = vmatpush1.msra.mxu0 0.0
  %1302 = vmatprep.subr.mxu0 0.0
  %1303 = vmatpush1.msra.mxu0 0.0
  %1304 = vmatprep.subr.mxu0 0.0
  %1305 = vmatpush1.msra.mxu0 0.0
  %1306 = vmatprep.subr.mxu0 0.0
  %1307 = vmatpush1.msra.mxu0 0.0
  %1308 = vmatprep.subr.mxu0 0.0
  %1309 = vmatpush1.msra.mxu0 0.0
  %1310 = vmatprep.subr.mxu0 0.0
  %1311 = vmatpush1.msra.mxu0 0.0
  %1312 = vmatprep.subr.mxu0 0.0
  %1313 = vmatpush1.msra.mxu0 0.0
  %1314 = vmatprep.subr.mxu0 0.0
  %1315 = vmatpush1.msra.mxu0 0.0
  %1316 = vmatprep.subr.mxu0 0.0
  %1317 = vmatpush1.msra.mxu0 0.0
  %1318 = vmatprep.subr.mxu0 0.0
  %1319 = vmatpush1.msra.mxu0 0.0
  %1320 = vmatprep.subr.mxu0 0.0
  %1321 = vmatpush1.msra.mxu0 0.0
  %1322 = vmatprep.subr.mxu0 0.0
  %1323 = vmatpush1.msra.mxu0 0.0
  %1324 = vmatprep.subr.mxu0 0.0
  %1325 = vmatpush1.msra.mxu0 0.0
  %1326 = vmatprep.subr.mxu0 0.0
  %1327 = vmatpush1.msra.mxu0 0.0
  %1328 = vmatprep.subr.mxu0 0.0
  %1329 = vmatpush1.msra.mxu0 0.0
  %1330 = vmatprep.subr.mxu0 0.0
  %1331 = vmatpush1.msra.mxu0 0.0
  %1332 = vmatprep.subr.mxu0 0.0
  %1333 = vmatpush1.msra.mxu0 0.0
  %1334 = vmatprep.subr.mxu0 0.0
  %1335 = vmatpush1.msra.mxu0 0.0
  %1336 = vmatprep.subr.mxu0 0.0
  %1337 = vmatpush1.msra.mxu0 0.0
  %1338 = vmatprep.subr.mxu0 0.0
  %1339 = vmatpush1.msra.mxu0 0.0
  %1340 = vmatprep.subr.mxu0 0.0
  %1341 = vmatpush1.msra.mxu0 0.0
  %1342 = vmatprep.subr.mxu0 0.0
  %1343 = vmatpush1.msra.mxu0 0.0
  %1344 = vmatprep.subr.mxu0 0.0
  %1345 = vmatpush1.msra.mxu0 0.0
  %1346 = vmatprep.subr.mxu0 0.0
  %1347 = vmatpush1.msra.mxu0 0.0
  %1348 = vmatprep.subr.mxu0 0.0
  %1349 = vmatpush1.msra.mxu0 0.0
  %1350 = vmatprep.subr.mxu0 0.0
  %1351 = vmatpush1.msra.mxu0 0.0
  %1352 = vmatprep.subr.mxu0 0.0
  %1353 = vmatpush1.msra.mxu0 0.0
  %1354 = vmatprep.mubr.f32.mxu0 0.0
  %1355 = vmatmul.mubr.f32.gmra.mrb[0].mxu0 %v1288
  %v1356 = vpop.f32.mrb[0].mxu0
  %v1357 = vadd.f32 0.0, %v1356
  %v1358 = vpop.f32.mrb[0].mxu0
  %1359 = vdwg.mxu0
  %vm1360 = vcmp.gt.f32.partialorder %v1357, 0.0
  %v1361 = vmin.f32 %v1357, 0.0
  %v1362 = vmul.f32 %v1361, 1.442695
  %v1363 = vpow.pop %v1362
  %v1364 = vsub.f32 %v1363, 1.0
  %v1365 = vsel %vm1360, %v1357, %v1364
  %1366 = vst.msk [vmem:[%s5 + $0x30] sm:$0xff] %vm29, %v1365
  %1367 = vxpose.xlu0.b32.start [1/16] %v402, 128
  %1368 = vxpose.xlu0.b32.cont [2/16] 0.0, 128
  %1369 = vxpose.xlu0.b32.cont [3/16] 0.0, 128
  %1370 = vxpose.xlu0.b32.cont [4/16] 0.0, 128
  %1371 = vxpose.xlu0.b32.cont [5/16] 0.0, 128
  %1372 = vxpose.xlu0.b32.cont [6/16] 0.0, 128
  %1373 = vxpose.xlu0.b32.cont [7/16] 0.0, 128
  %1374 = vxpose.xlu0.b32.cont [8/16] 0.0, 128
  %1375 = vxpose.xlu0.b32.cont [9/16] 0.0, 128
  %1376 = vxpose.xlu0.b32.cont [10/16] 0.0, 128
  %1377 = vxpose.xlu0.b32.cont [11/16] 0.0, 128
  %1378 = vxpose.xlu0.b32.cont [12/16] 0.0, 128
  %1379 = vxpose.xlu0.b32.cont [13/16] 0.0, 128
  %1380 = vxpose.xlu0.b32.cont [14/16] 0.0, 128
  %1381 = vxpose.xlu0.b32.cont [15/16] 0.0, 128
  %1382 = vxpose.xlu0.b32.end [16/16] 0.0, 128
  %v1383 = vpop.trf.xlu0
  %v1384 = vpop.trf.xlu0
  %v1385 = vpop.trf.xlu0
  %v1386 = vpop.trf.xlu0
  %v1387 = vpop.trf.xlu0
  %v1388 = vpop.trf.xlu0
  %v1389 = vpop.trf.xlu0
  %v1390 = vpop.trf.xlu0
  %v1391 = vpop.trf.xlu0
  %v1392 = vpop.trf.xlu0
  %v1393 = vpop.trf.xlu0
  %v1394 = vpop.trf.xlu0
  %v1395 = vpop.trf.xlu0
  %v1396 = vpop.trf.xlu0
  %v1397 = vpop.trf.xlu0
  %v1398 = vpop.trf.xlu0
  %1400 = vset.pattern.permute.xlu0 0
  %1401 = vperm.xlu0 %1400, %v293
  %v1402 = vpop.permute.xlu0 %1401
  %v1404 = vlaneseq
  %v1405 = vshrl.u32 %v1404, 7
  %v1406 = vsub.s32 0, %v1405
  %v1407 = vrot.slane %v1383, %v1406
  %v1408 = vadd.f32 %v1402, %v1407
  %vm1409 = vcmp.gt.f32.partialorder %v1408, 0.0
  %v1410 = vmul.f32 %v1408, 0.1
  %v1411 = vsel %vm1409, %v1408, %v1410
  %v1412 = vsel %vm406, %v1411, -9e+15
  %v1413 = vsel %vm453, %v1412, -inf
  %1414 = vmax.xlane.f32.xlu0 %v1413
  %v1415 = vpop.xlane.xlu0 %1414
  %v1416 = vsub.f32 %v1412, %v1415
  %v1417 = vmul.f32 %v1416, 1.442695
  %v1418 = vpow.pop %v1417
  %v1419 = vsel %vm453, %v1418, 0.0
  %1420 = vadd.xlane.f32.xlu0 %v1419
  %v1421 = vpop.xlane.xlu0 %1420
  %v1422 = vrcp.pop %v1421
  %v1423 = vmul.f32 %v1418, %v1422
  %v1425 = vsel %vm453, %v1423, 0
  %1427 = vmatprep.subr.mxu0 0.0
  %1428 = vmatpush1.msra.mxu0 %v160
  %1429 = vmatprep.subr.mxu0 0.0
  %1430 = vmatpush1.msra.mxu0 0.0
  %1431 = vmatprep.subr.mxu0 0.0
  %1432 = vmatpush1.msra.mxu0 0.0
  %1433 = vmatprep.subr.mxu0 0.0
  %1434 = vmatpush1.msra.mxu0 0.0
  %1435 = vmatprep.subr.mxu0 0.0
  %1436 = vmatpush1.msra.mxu0 0.0
  %1437 = vmatprep.subr.mxu0 0.0
  %1438 = vmatpush1.msra.mxu0 0.0
  %1439 = vmatprep.subr.mxu0 0.0
  %1440 = vmatpush1.msra.mxu0 0.0
  %1441 = vmatprep.subr.mxu0 0.0
  %1442 = vmatpush1.msra.mxu0 0.0
  %1443 = vmatprep.subr.mxu0 0.0
  %1444 = vmatpush1.msra.mxu0 0.0
  %1445 = vmatprep.subr.mxu0 0.0
  %1446 = vmatpush1.msra.mxu0 0.0
  %1447 = vmatprep.subr.mxu0 0.0
  %1448 = vmatpush1.msra.mxu0 0.0
  %1449 = vmatprep.subr.mxu0 0.0
  %1450 = vmatpush1.msra.mxu0 0.0
  %1451 = vmatprep.subr.mxu0 0.0
  %1452 = vmatpush1.msra.mxu0 0.0
  %1453 = vmatprep.subr.mxu0 0.0
  %1454 = vmatpush1.msra.mxu0 0.0
  %1455 = vmatprep.subr.mxu0 0.0
  %1456 = vmatpush1.msra.mxu0 0.0
  %1457 = vmatprep.subr.mxu0 0.0
  %1458 = vmatpush1.msra.mxu0 0.0
  %1459 = vmatprep.subr.mxu0 0.0
  %1460 = vmatpush1.msra.mxu0 0.0
  %1461 = vmatprep.subr.mxu0 0.0
  %1462 = vmatpush1.msra.mxu0 0.0
  %1463 = vmatprep.subr.mxu0 0.0
  %1464 = vmatpush1.msra.mxu0 0.0
  %1465 = vmatprep.subr.mxu0 0.0
  %1466 = vmatpush1.msra.mxu0 0.0
  %1467 = vmatprep.subr.mxu0 0.0
  %1468 = vmatpush1.msra.mxu0 0.0
  %1469 = vmatprep.subr.mxu0 0.0
  %1470 = vmatpush1.msra.mxu0 0.0
  %1471 = vmatprep.subr.mxu0 0.0
  %1472 = vmatpush1.msra.mxu0 0.0
  %1473 = vmatprep.subr.mxu0 0.0
  %1474 = vmatpush1.msra.mxu0 0.0
  %1475 = vmatprep.subr.mxu0 0.0
  %1476 = vmatpush1.msra.mxu0 0.0
  %1477 = vmatprep.subr.mxu0 0.0
  %1478 = vmatpush1.msra.mxu0 0.0
  %1479 = vmatprep.subr.mxu0 0.0
  %1480 = vmatpush1.msra.mxu0 0.0
  %1481 = vmatprep.subr.mxu0 0.0
  %1482 = vmatpush1.msra.mxu0 0.0
  %1483 = vmatprep.subr.mxu0 0.0
  %1484 = vmatpush1.msra.mxu0 0.0
  %1485 = vmatprep.subr.mxu0 0.0
  %1486 = vmatpush1.msra.mxu0 0.0
  %1487 = vmatprep.subr.mxu0 0.0
  %1488 = vmatpush1.msra.mxu0 0.0
  %1489 = vmatprep.subr.mxu0 0.0
  %1490 = vmatpush1.msra.mxu0 0.0
  %1491 = vmatprep.mubr.f32.mxu0 0.0
  %1492 = vmatmul.mubr.f32.gmra.mrb[0].mxu0 %v1425
  %v1493 = vpop.f32.mrb[0].mxu0
  %v1494 = vadd.f32 0.0, %v1493
  %v1495 = vpop.f32.mrb[0].mxu0
  %1496 = vdwg.mxu0
  %vm1497 = vcmp.gt.f32.partialorder %v1494, 0.0
  %v1498 = vmin.f32 %v1494, 0.0
  %v1499 = vmul.f32 %v1498, 1.442695
  %v1500 = vpow.pop %v1499
  %v1501 = vsub.f32 %v1500, 1.0
  %v1502 = vsel %vm1497, %v1494, %v1501
  %1503 = vst.msk [vmem:[%s5 + $0x38] sm:$0xff] %vm29, %v1502
  // Predicated region
  $region22: #{my_model_forward.2} parent=0 // pred_check
    _
  $region23: #{my_model_forward.2} parent=0 // pred_check_branch
    %1505 = sbr.rel (0) target = $region25
  $region24: #{my_model_forward.2} parent=0 // pred_region
    _
  $region25: #{my_model_forward.2} parent=0 // pred_fallthru
    _
  // Predicated region
  $region26: #{my_model_forward.2} parent=0 // pred_check
    _
  $region27: #{my_model_forward.2} parent=0 // pred_check_branch
    %1507 = sbr.rel (0) target = $region29
  $region28: #{my_model_forward.2} parent=0 // pred_region
    _
  $region29: #{my_model_forward.2} parent=0 // pred_fallthru
    _

// kernel: my_model_forward.3
$region0: #{my_model_forward.3}
  #allocation0 [shape = 'u32[]', space=smem, size = 0x4, offset = 0x4, fixed_abs, tag = 'smem constant byte address 0x4 - core index']
  #allocation1 [shape = 'u32[144,128]{1,0:T(1,128)}', space=vmem, size = 0x12000, scoped, tag = 'internal scratch']
  #allocation2 [shape = 'f32[8,32]{1,0:T(8,128)}', space=vmem, size = 0x1000, scoped, tag = 'scratch operand']
  #allocation3 [shape = 'f32[8,32]{1,0:T(8,128)}', space=vmem, size = 0x1000, scoped, tag = 'scratch operand']
  %s0 = inlined_call_operand.vmem [shape: f32[8,32], index: 0, kind: input, shape index: {}]
  %s1 = inlined_call_operand.vmem [shape: f32[8,32], index: 1, kind: input, shape index: {}]
  %s2 = inlined_call_operand.vmem [shape: f32[8,32], index: 2, kind: input, shape index: {}]
  %s3 = inlined_call_operand.vmem [shape: f32[32,128], index: 3, kind: input, shape index: {}]
  %s4 = inlined_call_operand.vmem [shape: f32[32,128], index: 4, kind: input, shape index: {}]
  %s5 = inlined_call_operand.vmem [shape: f32[1,128], index: 5, kind: input, shape index: {}]
  %s6 = inlined_call_operand.vmem [shape: f32[32,128], index: 6, kind: input, shape index: {}]
  %s7 = inlined_call_operand.vmem [shape: f32[32,128], index: 7, kind: input, shape index: {}]
  %s8 = inlined_call_operand.vmem [shape: f32[1,128], index: 8, kind: input, shape index: {}]
  %s9 = inlined_call_operand.vmem [shape: f32[32,32], index: 9, kind: input, shape index: {}]
  %s10 = inlined_call_operand.vmem [shape: f32[1,32], index: 10, kind: input, shape index: {}]
  %s11 = inlined_call_operand.vmem [shape: f32[32,128], index: 11, kind: input, shape index: {}]
  %s12 = inlined_call_operand.vmem [shape: f32[32,128], index: 12, kind: input, shape index: {}]
  %s13 = inlined_call_operand.vmem [shape: f32[1,128], index: 13, kind: input, shape index: {}]
  %s14 = inlined_call_operand.vmem [shape: f32[32,32], index: 14, kind: input, shape index: {}]
  %s15 = inlined_call_operand.vmem [shape: f32[1,32], index: 15, kind: input, shape index: {}]
  %s16 = inlined_call_operand.hbm [shape: f32[1,1], index: 16, kind: output, shape index: {0}]
  %s17 = inlined_call_operand.hbm [shape: f32[1,1], index: 17, kind: output, shape index: {1}]
  %18 = xla_tuple %s16, %s17
  %s19 = sld [smem:[#allocation0]]
  $region82: #{my_model_forward.3} parent=0
    _
  %s21 = ssub.s32 1, %s19
  %s22 = scalar_select 0, %s21, %s19
  $region1: #{my_model_forward.3} parent=0
    #allocation4 [shape = 'u8[512]{0}', space=vmem, size = 0x400, scoped, tag = 'output window, operand 0, single buffered']
    #allocation5 [shape = 's32[1]{0}', space=sflag, size = 0x4, scoped, tag = 'scoped memory for my_model_forward.3']
    #allocation6 [shape = 'u8[512]{0}', space=vmem, size = 0x400, scoped, tag = 'output window, operand 1, single buffered']
    #allocation7 [shape = 's32[1]{0}', space=sflag, size = 0x4, scoped, tag = 'scoped memory for my_model_forward.3']
    %23 = vsyncpa [#allocation5], 0
    %24 = vsyncpa [#allocation7], 0
    // Predicated region
    $region2: #{my_model_forward.3} parent=1 // pred_check
      _
    $region3: #{my_model_forward.3} parent=1 // pred_check_branch
      %26 = sbr.rel (0) target = $region5
    $region4: #{my_model_forward.3} parent=1 // pred_region
      _
    $region5: #{my_model_forward.3} parent=1 // pred_fallthru
      _
    // Predicated region
    $region6: #{my_model_forward.3} parent=1 // pred_check
      _
    $region7: #{my_model_forward.3} parent=1 // pred_check_branch
      %28 = sbr.rel (0) target = $region9
    $region8: #{my_model_forward.3} parent=1 // pred_region
      _
    $region9: #{my_model_forward.3} parent=1 // pred_fallthru
      _
    // Predicated region
    $region10: #{my_model_forward.3} parent=1 // pred_check
      _
    $region11: #{my_model_forward.3} parent=1 // pred_check_branch
      %30 = sbr.rel (0) target = $region13
    $region12: #{my_model_forward.3} parent=1 // pred_region
      _
    $region13: #{my_model_forward.3} parent=1 // pred_fallthru
      _
    // Predicated region
    $region14: #{my_model_forward.3} parent=1 // pred_check
      _
    $region15: #{my_model_forward.3} parent=1 // pred_check_branch
      %32 = sbr.rel (0) target = $region17
    $region16: #{my_model_forward.3} parent=1 // pred_region
      _
    $region17: #{my_model_forward.3} parent=1 // pred_fallthru
      _
    // Predicated region
    $region18: #{my_model_forward.3} parent=1 // pred_check
      _
    $region19: #{my_model_forward.3} parent=1 // pred_check_branch
      %34 = sbr.rel (0) target = $region21
    $region20: #{my_model_forward.3} parent=1 // pred_region
      _
    $region21: #{my_model_forward.3} parent=1 // pred_fallthru
      _
    // Predicated region
    $region22: #{my_model_forward.3} parent=1 // pred_check
      _
    $region23: #{my_model_forward.3} parent=1 // pred_check_branch
      %36 = sbr.rel (0) target = $region25
    $region24: #{my_model_forward.3} parent=1 // pred_region
      _
    $region25: #{my_model_forward.3} parent=1 // pred_fallthru
      _
    // Predicated region
    $region26: #{my_model_forward.3} parent=1 // pred_check
      _
    $region27: #{my_model_forward.3} parent=1 // pred_check_branch
      %38 = sbr.rel (0) target = $region29
    $region28: #{my_model_forward.3} parent=1 // pred_region
      _
    $region29: #{my_model_forward.3} parent=1 // pred_fallthru
      _
    // Predicated region
    $region30: #{my_model_forward.3} parent=1 // pred_check
      _
    $region31: #{my_model_forward.3} parent=1 // pred_check_branch
      %40 = sbr.rel (0) target = $region33
    $region32: #{my_model_forward.3} parent=1 // pred_region
      _
    $region33: #{my_model_forward.3} parent=1 // pred_fallthru
      _
    // Predicated region
    $region34: #{my_model_forward.3} parent=1 // pred_check
      _
    $region35: #{my_model_forward.3} parent=1 // pred_check_branch
      %42 = sbr.rel (0) target = $region37
    $region36: #{my_model_forward.3} parent=1 // pred_region
      _
    $region37: #{my_model_forward.3} parent=1 // pred_fallthru
      _
    // Predicated region
    $region38: #{my_model_forward.3} parent=1 // pred_check
      _
    $region39: #{my_model_forward.3} parent=1 // pred_check_branch
      %44 = sbr.rel (0) target = $region41
    $region40: #{my_model_forward.3} parent=1 // pred_region
      _
    $region41: #{my_model_forward.3} parent=1 // pred_fallthru
      _
    // Predicated region
    $region42: #{my_model_forward.3} parent=1 // pred_check
      _
    $region43: #{my_model_forward.3} parent=1 // pred_check_branch
      %46 = sbr.rel (0) target = $region45
    $region44: #{my_model_forward.3} parent=1 // pred_region
      _
    $region45: #{my_model_forward.3} parent=1 // pred_fallthru
      _
    // Predicated region
    $region46: #{my_model_forward.3} parent=1 // pred_check
      _
    $region47: #{my_model_forward.3} parent=1 // pred_check_branch
      %48 = sbr.rel (0) target = $region49
    $region48: #{my_model_forward.3} parent=1 // pred_region
      _
    $region49: #{my_model_forward.3} parent=1 // pred_fallthru
      _
    // Predicated region
    $region50: #{my_model_forward.3} parent=1 // pred_check
      _
    $region51: #{my_model_forward.3} parent=1 // pred_check_branch
      %50 = sbr.rel (0) target = $region53
    $region52: #{my_model_forward.3} parent=1 // pred_region
      _
    $region53: #{my_model_forward.3} parent=1 // pred_fallthru
      _
    // Predicated region
    $region54: #{my_model_forward.3} parent=1 // pred_check
      _
    $region55: #{my_model_forward.3} parent=1 // pred_check_branch
      %52 = sbr.rel (0) target = $region57
    $region56: #{my_model_forward.3} parent=1 // pred_region
      _
    $region57: #{my_model_forward.3} parent=1 // pred_fallthru
      _
    // Predicated region
    $region58: #{my_model_forward.3} parent=1 // pred_check
      _
    $region59: #{my_model_forward.3} parent=1 // pred_check_branch
      %54 = sbr.rel (0) target = $region61
    $region60: #{my_model_forward.3} parent=1 // pred_region
      _
    $region61: #{my_model_forward.3} parent=1 // pred_fallthru
      _
    // Predicated region
    $region62: #{my_model_forward.3} parent=1 // pred_check
      _
    $region63: #{my_model_forward.3} parent=1 // pred_check_branch
      %56 = sbr.rel (0) target = $region65
    $region64: #{my_model_forward.3} parent=1 // pred_region
      _
    $region65: #{my_model_forward.3} parent=1 // pred_fallthru
      _
    %v57 = vld [vmem:[%s0] sm:$0xff]
    %v58 = vld [vmem:[%s3] sm:$0xff]
    %v59 = vld [vmem:[%s3 + $0x8] sm:$0xff]
    %v60 = vld [vmem:[%s3 + $0x10] sm:$0xff]
    %v61 = vld [vmem:[%s3 + $0x18] sm:$0xff]
    %v62 = vld [vmem:[%s5] sm:$0x1]
    %v64 = vlaneseq
    %v65 = vshrl.u32 %v64, 7
    %v66 = vsub.s32 0, %v65
    %v67 = vrot.slane %v62, %v66
    %vm69 = vcmask 261120
    %v71 = vsel %vm69, %v57, 0
    %73 = vmatprep.subr.mxu0 0.0
    %74 = vmatpush1.msra.mxu0 %v58
    %75 = vmatprep.subr.mxu0 0.0
    %76 = vmatpush1.msra.mxu0 %v59
    %77 = vmatprep.subr.mxu0 0.0
    %78 = vmatpush1.msra.mxu0 %v60
    %79 = vmatprep.subr.mxu0 0.0
    %80 = vmatpush1.msra.mxu0 %v61
    %81 = vmatprep.subr.mxu0 0.0
    %82 = vmatpush1.msra.mxu0 0.0
    %83 = vmatprep.subr.mxu0 0.0
    %84 = vmatpush1.msra.mxu0 0.0
    %85 = vmatprep.subr.mxu0 0.0
    %86 = vmatpush1.msra.mxu0 0.0
    %87 = vmatprep.subr.mxu0 0.0
    %88 = vmatpush1.msra.mxu0 0.0
    %89 = vmatprep.subr.mxu0 0.0
    %90 = vmatpush1.msra.mxu0 0.0
    %91 = vmatprep.subr.mxu0 0.0
    %92 = vmatpush1.msra.mxu0 0.0
    %93 = vmatprep.subr.mxu0 0.0
    %94 = vmatpush1.msra.mxu0 0.0
    %95 = vmatprep.subr.mxu0 0.0
    %96 = vmatpush1.msra.mxu0 0.0
    %97 = vmatprep.subr.mxu0 0.0
    %98 = vmatpush1.msra.mxu0 0.0
    %99 = vmatprep.subr.mxu0 0.0
    %100 = vmatpush1.msra.mxu0 0.0
    %101 = vmatprep.subr.mxu0 0.0
    %102 = vmatpush1.msra.mxu0 0.0
    %103 = vmatprep.subr.mxu0 0.0
    %104 = vmatpush1.msra.mxu0 0.0
    %105 = vmatprep.subr.mxu0 0.0
    %106 = vmatpush1.msra.mxu0 0.0
    %107 = vmatprep.subr.mxu0 0.0
    %108 = vmatpush1.msra.mxu0 0.0
    %109 = vmatprep.subr.mxu0 0.0
    %110 = vmatpush1.msra.mxu0 0.0
    %111 = vmatprep.subr.mxu0 0.0
    %112 = vmatpush1.msra.mxu0 0.0
    %113 = vmatprep.subr.mxu0 0.0
    %114 = vmatpush1.msra.mxu0 0.0
    %115 = vmatprep.subr.mxu0 0.0
    %116 = vmatpush1.msra.mxu0 0.0
    %117 = vmatprep.subr.mxu0 0.0
    %118 = vmatpush1.msra.mxu0 0.0
    %119 = vmatprep.subr.mxu0 0.0
    %120 = vmatpush1.msra.mxu0 0.0
    %121 = vmatprep.subr.mxu0 0.0
    %122 = vmatpush1.msra.mxu0 0.0
    %123 = vmatprep.subr.mxu0 0.0
    %124 = vmatpush1.msra.mxu0 0.0
    %125 = vmatprep.subr.mxu0 0.0
    %126 = vmatpush1.msra.mxu0 0.0
    %127 = vmatprep.subr.mxu0 0.0
    %128 = vmatpush1.msra.mxu0 0.0
    %129 = vmatprep.subr.mxu0 0.0
    %130 = vmatpush1.msra.mxu0 0.0
    %131 = vmatprep.subr.mxu0 0.0
    %132 = vmatpush1.msra.mxu0 0.0
    %133 = vmatprep.subr.mxu0 0.0
    %134 = vmatpush1.msra.mxu0 0.0
    %135 = vmatprep.subr.mxu0 0.0
    %136 = vmatpush1.msra.mxu0 0.0
    %137 = vmatprep.mubr.f32.mxu0 0.0
    %138 = vmatmul.mubr.f32.gmra.mrb[0].mxu0 %v71
    %v139 = vpop.f32.mrb[0].mxu0
    %v140 = vadd.f32 %v67, %v139
    %v141 = vpop.f32.mrb[0].mxu0
    %142 = vdwg.mxu0
    %v143 = vld [vmem:[%s4] sm:$0xff]
    %v144 = vld [vmem:[%s4 + $0x8] sm:$0xff]
    %v145 = vld [vmem:[%s4 + $0x10] sm:$0xff]
    %v146 = vld [vmem:[%s4 + $0x18] sm:$0xff]
    %v148 = vsel %vm69, 0.0, 0
    %150 = vmatprep.subr.mxu0 0.0
    %151 = vmatpush1.msra.mxu0 %v143
    %152 = vmatprep.subr.mxu0 0.0
    %153 = vmatpush1.msra.mxu0 %v144
    %154 = vmatprep.subr.mxu0 0.0
    %155 = vmatpush1.msra.mxu0 %v145
    %156 = vmatprep.subr.mxu0 0.0
    %157 = vmatpush1.msra.mxu0 %v146
    %158 = vmatprep.subr.mxu0 0.0
    %159 = vmatpush1.msra.mxu0 0.0
    %160 = vmatprep.subr.mxu0 0.0
    %161 = vmatpush1.msra.mxu0 0.0
    %162 = vmatprep.subr.mxu0 0.0
    %163 = vmatpush1.msra.mxu0 0.0
    %164 = vmatprep.subr.mxu0 0.0
    %165 = vmatpush1.msra.mxu0 0.0
    %166 = vmatprep.subr.mxu0 0.0
    %167 = vmatpush1.msra.mxu0 0.0
    %168 = vmatprep.subr.mxu0 0.0
    %169 = vmatpush1.msra.mxu0 0.0
    %170 = vmatprep.subr.mxu0 0.0
    %171 = vmatpush1.msra.mxu0 0.0
    %172 = vmatprep.subr.mxu0 0.0
    %173 = vmatpush1.msra.mxu0 0.0
    %174 = vmatprep.subr.mxu0 0.0
    %175 = vmatpush1.msra.mxu0 0.0
    %176 = vmatprep.subr.mxu0 0.0
    %177 = vmatpush1.msra.mxu0 0.0
    %178 = vmatprep.subr.mxu0 0.0
    %179 = vmatpush1.msra.mxu0 0.0
    %180 = vmatprep.subr.mxu0 0.0
    %181 = vmatpush1.msra.mxu0 0.0
    %182 = vmatprep.subr.mxu0 0.0
    %183 = vmatpush1.msra.mxu0 0.0
    %184 = vmatprep.subr.mxu0 0.0
    %185 = vmatpush1.msra.mxu0 0.0
    %186 = vmatprep.subr.mxu0 0.0
    %187 = vmatpush1.msra.mxu0 0.0
    %188 = vmatprep.subr.mxu0 0.0
    %189 = vmatpush1.msra.mxu0 0.0
    %190 = vmatprep.subr.mxu0 0.0
    %191 = vmatpush1.msra.mxu0 0.0
    %192 = vmatprep.subr.mxu0 0.0
    %193 = vmatpush1.msra.mxu0 0.0
    %194 = vmatprep.subr.mxu0 0.0
    %195 = vmatpush1.msra.mxu0 0.0
    %196 = vmatprep.subr.mxu0 0.0
    %197 = vmatpush1.msra.mxu0 0.0
    %198 = vmatprep.subr.mxu0 0.0
    %199 = vmatpush1.msra.mxu0 0.0
    %200 = vmatprep.subr.mxu0 0.0
    %201 = vmatpush1.msra.mxu0 0.0
    %202 = vmatprep.subr.mxu0 0.0
    %203 = vmatpush1.msra.mxu0 0.0
    %204 = vmatprep.subr.mxu0 0.0
    %205 = vmatpush1.msra.mxu0 0.0
    %206 = vmatprep.subr.mxu0 0.0
    %207 = vmatpush1.msra.mxu0 0.0
    %208 = vmatprep.subr.mxu0 0.0
    %209 = vmatpush1.msra.mxu0 0.0
    %210 = vmatprep.subr.mxu0 0.0
    %211 = vmatpush1.msra.mxu0 0.0
    %212 = vmatprep.subr.mxu0 0.0
    %213 = vmatpush1.msra.mxu0 0.0
    %214 = vmatprep.mubr.f32.mxu0 0.0
    %215 = vmatmul.mubr.f32.gmra.mrb[0].mxu0 %v148
    %v216 = vpop.f32.mrb[0].mxu0
    %v217 = vadd.f32 0.0, %v216
    %v218 = vpop.f32.mrb[0].mxu0
    %219 = vdwg.mxu0
    %v220 = vadd.f32 %v140, %v217
    %v221 = vxor.u32 %v220, 2147483648
    %v222 = vmul.f32 %v221, 1.442695
    %v223 = vpow.pop %v222
    %v224 = vadd.f32 %v223, 1.0
    %v225 = vrcp.pop %v224
    %v226 = vmul.f32 1.0, %v225
    %v227 = vtanh.pop %v220
    %v228 = vmul.f32 %v226, 0.0
    %230 = vrot.lane.b32.xlu0 %v227, 64
    %v231 = vpop.permute.xlu0 %230
    %v233 = vmul.f32 %v226, %v231
    %235 = vrot.lane.b32.xlu0 %v233, 32
    %v236 = vpop.permute.xlu0 %235
    %v238 = vadd.f32 %v228, %v236
    %v239 = vtanh.pop %v238
    %241 = vrot.lane.b32.xlu0 %v239, 64
    %v242 = vpop.permute.xlu0 %241
    %v244 = vmul.f32 %v226, %v242
    %246 = vrot.lane.b32.xlu0 %v244, 32
    %v247 = vpop.permute.xlu0 %246
    %v248 = vsel %vm69, %v247, 0
    %250 = vmatprep.subr.mxu0 0.0
    %251 = vmatpush1.msra.mxu0 %v143
    %252 = vmatprep.subr.mxu0 0.0
    %253 = vmatpush1.msra.mxu0 %v144
    %254 = vmatprep.subr.mxu0 0.0
    %255 = vmatpush1.msra.mxu0 %v145
    %256 = vmatprep.subr.mxu0 0.0
    %257 = vmatpush1.msra.mxu0 %v146
    %258 = vmatprep.subr.mxu0 0.0
    %259 = vmatpush1.msra.mxu0 0.0
    %260 = vmatprep.subr.mxu0 0.0
    %261 = vmatpush1.msra.mxu0 0.0
    %262 = vmatprep.subr.mxu0 0.0
    %263 = vmatpush1.msra.mxu0 0.0
    %264 = vmatprep.subr.mxu0 0.0
    %265 = vmatpush1.msra.mxu0 0.0
    %266 = vmatprep.subr.mxu0 0.0
    %267 = vmatpush1.msra.mxu0 0.0
    %268 = vmatprep.subr.mxu0 0.0
    %269 = vmatpush1.msra.mxu0 0.0
    %270 = vmatprep.subr.mxu0 0.0
    %271 = vmatpush1.msra.mxu0 0.0
    %272 = vmatprep.subr.mxu0 0.0
    %273 = vmatpush1.msra.mxu0 0.0
    %274 = vmatprep.subr.mxu0 0.0
    %275 = vmatpush1.msra.mxu0 0.0
    %276 = vmatprep.subr.mxu0 0.0
    %277 = vmatpush1.msra.mxu0 0.0
    %278 = vmatprep.subr.mxu0 0.0
    %279 = vmatpush1.msra.mxu0 0.0
    %280 = vmatprep.subr.mxu0 0.0
    %281 = vmatpush1.msra.mxu0 0.0
    %282 = vmatprep.subr.mxu0 0.0
    %283 = vmatpush1.msra.mxu0 0.0
    %284 = vmatprep.subr.mxu0 0.0
    %285 = vmatpush1.msra.mxu0 0.0
    %286 = vmatprep.subr.mxu0 0.0
    %287 = vmatpush1.msra.mxu0 0.0
    %288 = vmatprep.subr.mxu0 0.0
    %289 = vmatpush1.msra.mxu0 0.0
    %290 = vmatprep.subr.mxu0 0.0
    %291 = vmatpush1.msra.mxu0 0.0
    %292 = vmatprep.subr.mxu0 0.0
    %293 = vmatpush1.msra.mxu0 0.0
    %294 = vmatprep.subr.mxu0 0.0
    %295 = vmatpush1.msra.mxu0 0.0
    %296 = vmatprep.subr.mxu0 0.0
    %297 = vmatpush1.msra.mxu0 0.0
    %298 = vmatprep.subr.mxu0 0.0
    %299 = vmatpush1.msra.mxu0 0.0
    %300 = vmatprep.subr.mxu0 0.0
    %301 = vmatpush1.msra.mxu0 0.0
    %302 = vmatprep.subr.mxu0 0.0
    %303 = vmatpush1.msra.mxu0 0.0
    %304 = vmatprep.subr.mxu0 0.0
    %305 = vmatpush1.msra.mxu0 0.0
    %306 = vmatprep.subr.mxu0 0.0
    %307 = vmatpush1.msra.mxu0 0.0
    %308 = vmatprep.subr.mxu0 0.0
    %309 = vmatpush1.msra.mxu0 0.0
    %310 = vmatprep.subr.mxu0 0.0
    %311 = vmatpush1.msra.mxu0 0.0
    %312 = vmatprep.subr.mxu0 0.0
    %313 = vmatpush1.msra.mxu0 0.0
    %314 = vmatprep.mubr.f32.mxu0 0.0
    %315 = vmatmul.mubr.f32.gmra.mrb[0].mxu0 %v248
    %v316 = vpop.f32.mrb[0].mxu0
    %v317 = vadd.f32 0.0, %v316
    %v318 = vpop.f32.mrb[0].mxu0
    %319 = vdwg.mxu0
    %v321 = vrot.slane %v317, 7
    %v323 = vadd.f32 %v140, %v321
    %v324 = vxor.u32 %v323, 2147483648
    %v325 = vmul.f32 %v324, 1.442695
    %v326 = vpow.pop %v325
    %v327 = vadd.f32 %v326, 1.0
    %v328 = vrcp.pop %v327
    %v329 = vmul.f32 1.0, %v328
    %v330 = vtanh.pop %v323
    %v332 = vrot.slane %v238, 7
    %v334 = vmul.f32 %v329, %v332
    %336 = vrot.lane.b32.xlu0 %v330, 64
    %v337 = vpop.permute.xlu0 %336
    %v339 = vmul.f32 %v329, %v337
    %341 = vrot.lane.b32.xlu0 %v339, 32
    %v342 = vpop.permute.xlu0 %341
    %v344 = vadd.f32 %v334, %v342
    %v345 = vtanh.pop %v344
    %347 = vrot.lane.b32.xlu0 %v345, 64
    %v348 = vpop.permute.xlu0 %347
    %v350 = vmul.f32 %v329, %v348
    %v352 = vrot.slane %v350, 1
    %353 = vrot.lane.b32.xlu0 %v352, 32
    %v354 = vpop.permute.xlu0 %353
    %v355 = vsel %vm69, %v354, 0
    %357 = vmatprep.subr.mxu0 0.0
    %358 = vmatpush1.msra.mxu0 %v143
    %359 = vmatprep.subr.mxu0 0.0
    %360 = vmatpush1.msra.mxu0 %v144
    %361 = vmatprep.subr.mxu0 0.0
    %362 = vmatpush1.msra.mxu0 %v145
    %363 = vmatprep.subr.mxu0 0.0
    %364 = vmatpush1.msra.mxu0 %v146
    %365 = vmatprep.subr.mxu0 0.0
    %366 = vmatpush1.msra.mxu0 0.0
    %367 = vmatprep.subr.mxu0 0.0
    %368 = vmatpush1.msra.mxu0 0.0
    %369 = vmatprep.subr.mxu0 0.0
    %370 = vmatpush1.msra.mxu0 0.0
    %371 = vmatprep.subr.mxu0 0.0
    %372 = vmatpush1.msra.mxu0 0.0
    %373 = vmatprep.subr.mxu0 0.0
    %374 = vmatpush1.msra.mxu0 0.0
    %375 = vmatprep.subr.mxu0 0.0
    %376 = vmatpush1.msra.mxu0 0.0
    %377 = vmatprep.subr.mxu0 0.0
    %378 = vmatpush1.msra.mxu0 0.0
    %379 = vmatprep.subr.mxu0 0.0
    %380 = vmatpush1.msra.mxu0 0.0
    %381 = vmatprep.subr.mxu0 0.0
    %382 = vmatpush1.msra.mxu0 0.0
    %383 = vmatprep.subr.mxu0 0.0
    %384 = vmatpush1.msra.mxu0 0.0
    %385 = vmatprep.subr.mxu0 0.0
    %386 = vmatpush1.msra.mxu0 0.0
    %387 = vmatprep.subr.mxu0 0.0
    %388 = vmatpush1.msra.mxu0 0.0
    %389 = vmatprep.subr.mxu0 0.0
    %390 = vmatpush1.msra.mxu0 0.0
    %391 = vmatprep.subr.mxu0 0.0
    %392 = vmatpush1.msra.mxu0 0.0
    %393 = vmatprep.subr.mxu0 0.0
    %394 = vmatpush1.msra.mxu0 0.0
    %395 = vmatprep.subr.mxu0 0.0
    %396 = vmatpush1.msra.mxu0 0.0
    %397 = vmatprep.subr.mxu0 0.0
    %398 = vmatpush1.msra.mxu0 0.0
    %399 = vmatprep.subr.mxu0 0.0
    %400 = vmatpush1.msra.mxu0 0.0
    %401 = vmatprep.subr.mxu0 0.0
    %402 = vmatpush1.msra.mxu0 0.0
    %403 = vmatprep.subr.mxu0 0.0
    %404 = vmatpush1.msra.mxu0 0.0
    %405 = vmatprep.subr.mxu0 0.0
    %406 = vmatpush1.msra.mxu0 0.0
    %407 = vmatprep.subr.mxu0 0.0
    %408 = vmatpush1.msra.mxu0 0.0
    %409 = vmatprep.subr.mxu0 0.0
    %410 = vmatpush1.msra.mxu0 0.0
    %411 = vmatprep.subr.mxu0 0.0
    %412 = vmatpush1.msra.mxu0 0.0
    %413 = vmatprep.subr.mxu0 0.0
    %414 = vmatpush1.msra.mxu0 0.0
    %415 = vmatprep.subr.mxu0 0.0
    %416 = vmatpush1.msra.mxu0 0.0
    %417 = vmatprep.subr.mxu0 0.0
    %418 = vmatpush1.msra.mxu0 0.0
    %419 = vmatprep.subr.mxu0 0.0
    %420 = vmatpush1.msra.mxu0 0.0
    %421 = vmatprep.mubr.f32.mxu0 0.0
    %422 = vmatmul.mubr.f32.gmra.mrb[0].mxu0 %v355
    %v423 = vpop.f32.mrb[0].mxu0
    %v424 = vadd.f32 0.0, %v423
    %v425 = vpop.f32.mrb[0].mxu0
    %426 = vdwg.mxu0
    %v428 = vrot.slane %v424, 6
    %v430 = vadd.f32 %v140, %v428
    %v431 = vxor.u32 %v430, 2147483648
    %v432 = vmul.f32 %v431, 1.442695
    %v433 = vpow.pop %v432
    %v434 = vadd.f32 %v433, 1.0
    %v435 = vrcp.pop %v434
    %v436 = vmul.f32 1.0, %v435
    %v437 = vtanh.pop %v430
    %v439 = vrot.slane %v344, 7
    %v441 = vmul.f32 %v436, %v439
    %443 = vrot.lane.b32.xlu0 %v437, 64
    %v444 = vpop.permute.xlu0 %443
    %v446 = vmul.f32 %v436, %v444
    %448 = vrot.lane.b32.xlu0 %v446, 32
    %v449 = vpop.permute.xlu0 %448
    %v451 = vadd.f32 %v441, %v449
    %v452 = vtanh.pop %v451
    %454 = vrot.lane.b32.xlu0 %v452, 64
    %v455 = vpop.permute.xlu0 %454
    %v457 = vmul.f32 %v436, %v455
    %v459 = vrot.slane %v457, 2
    %460 = vrot.lane.b32.xlu0 %v459, 32
    %v461 = vpop.permute.xlu0 %460
    %v462 = vsel %vm69, %v461, 0
    %464 = vmatprep.subr.mxu0 0.0
    %465 = vmatpush1.msra.mxu0 %v143
    %466 = vmatprep.subr.mxu0 0.0
    %467 = vmatpush1.msra.mxu0 %v144
    %468 = vmatprep.subr.mxu0 0.0
    %469 = vmatpush1.msra.mxu0 %v145
    %470 = vmatprep.subr.mxu0 0.0
    %471 = vmatpush1.msra.mxu0 %v146
    %472 = vmatprep.subr.mxu0 0.0
    %473 = vmatpush1.msra.mxu0 0.0
    %474 = vmatprep.subr.mxu0 0.0
    %475 = vmatpush1.msra.mxu0 0.0
    %476 = vmatprep.subr.mxu0 0.0
    %477 = vmatpush1.msra.mxu0 0.0
    %478 = vmatprep.subr.mxu0 0.0
    %479 = vmatpush1.msra.mxu0 0.0
    %480 = vmatprep.subr.mxu0 0.0
    %481 = vmatpush1.msra.mxu0 0.0
    %482 = vmatprep.subr.mxu0 0.0
    %483 = vmatpush1.msra.mxu0 0.0
    %484 = vmatprep.subr.mxu0 0.0
    %485 = vmatpush1.msra.mxu0 0.0
    %486 = vmatprep.subr.mxu0 0.0
    %487 = vmatpush1.msra.mxu0 0.0
    %488 = vmatprep.subr.mxu0 0.0
    %489 = vmatpush1.msra.mxu0 0.0
    %490 = vmatprep.subr.mxu0 0.0
    %491 = vmatpush1.msra.mxu0 0.0
    %492 = vmatprep.subr.mxu0 0.0
    %493 = vmatpush1.msra.mxu0 0.0
    %494 = vmatprep.subr.mxu0 0.0
    %495 = vmatpush1.msra.mxu0 0.0
    %496 = vmatprep.subr.mxu0 0.0
    %497 = vmatpush1.msra.mxu0 0.0
    %498 = vmatprep.subr.mxu0 0.0
    %499 = vmatpush1.msra.mxu0 0.0
    %500 = vmatprep.subr.mxu0 0.0
    %501 = vmatpush1.msra.mxu0 0.0
    %502 = vmatprep.subr.mxu0 0.0
    %503 = vmatpush1.msra.mxu0 0.0
    %504 = vmatprep.subr.mxu0 0.0
    %505 = vmatpush1.msra.mxu0 0.0
    %506 = vmatprep.subr.mxu0 0.0
    %507 = vmatpush1.msra.mxu0 0.0
    %508 = vmatprep.subr.mxu0 0.0
    %509 = vmatpush1.msra.mxu0 0.0
    %510 = vmatprep.subr.mxu0 0.0
    %511 = vmatpush1.msra.mxu0 0.0
    %512 = vmatprep.subr.mxu0 0.0
    %513 = vmatpush1.msra.mxu0 0.0
    %514 = vmatprep.subr.mxu0 0.0
    %515 = vmatpush1.msra.mxu0 0.0
    %516 = vmatprep.subr.mxu0 0.0
    %517 = vmatpush1.msra.mxu0 0.0
    %518 = vmatprep.subr.mxu0 0.0
    %519 = vmatpush1.msra.mxu0 0.0
    %520 = vmatprep.subr.mxu0 0.0
    %521 = vmatpush1.msra.mxu0 0.0
    %522 = vmatprep.subr.mxu0 0.0
    %523 = vmatpush1.msra.mxu0 0.0
    %524 = vmatprep.subr.mxu0 0.0
    %525 = vmatpush1.msra.mxu0 0.0
    %526 = vmatprep.subr.mxu0 0.0
    %527 = vmatpush1.msra.mxu0 0.0
    %528 = vmatprep.mubr.f32.mxu0 0.0
    %529 = vmatmul.mubr.f32.gmra.mrb[0].mxu0 %v462
    %v530 = vpop.f32.mrb[0].mxu0
    %v531 = vadd.f32 0.0, %v530
    %v532 = vpop.f32.mrb[0].mxu0
    %533 = vdwg.mxu0
    %v535 = vrot.slane %v531, 5
    %v537 = vadd.f32 %v140, %v535
    %v538 = vxor.u32 %v537, 2147483648
    %v539 = vmul.f32 %v538, 1.442695
    %v540 = vpow.pop %v539
    %v541 = vadd.f32 %v540, 1.0
    %v542 = vrcp.pop %v541
    %v543 = vmul.f32 1.0, %v542
    %v544 = vtanh.pop %v537
    %v546 = vrot.slane %v451, 7
    %v548 = vmul.f32 %v543, %v546
    %550 = vrot.lane.b32.xlu0 %v544, 64
    %v551 = vpop.permute.xlu0 %550
    %v553 = vmul.f32 %v543, %v551
    %555 = vrot.lane.b32.xlu0 %v553, 32
    %v556 = vpop.permute.xlu0 %555
    %v558 = vadd.f32 %v548, %v556
    %v559 = vtanh.pop %v558
    %561 = vrot.lane.b32.xlu0 %v559, 64
    %v562 = vpop.permute.xlu0 %561
    %v564 = vmul.f32 %v543, %v562
    %v566 = vrot.slane %v564, 3
    %567 = vrot.lane.b32.xlu0 %v566, 32
    %v568 = vpop.permute.xlu0 %567
    %v569 = vsel %vm69, %v568, 0
    %571 = vmatprep.subr.mxu0 0.0
    %572 = vmatpush1.msra.mxu0 %v143
    %573 = vmatprep.subr.mxu0 0.0
    %574 = vmatpush1.msra.mxu0 %v144
    %575 = vmatprep.subr.mxu0 0.0
    %576 = vmatpush1.msra.mxu0 %v145
    %577 = vmatprep.subr.mxu0 0.0
    %578 = vmatpush1.msra.mxu0 %v146
    %579 = vmatprep.subr.mxu0 0.0
    %580 = vmatpush1.msra.mxu0 0.0
    %581 = vmatprep.subr.mxu0 0.0
    %582 = vmatpush1.msra.mxu0 0.0
    %583 = vmatprep.subr.mxu0 0.0
    %584 = vmatpush1.msra.mxu0 0.0
    %585 = vmatprep.subr.mxu0 0.0
    %586 = vmatpush1.msra.mxu0 0.0
    %587 = vmatprep.subr.mxu0 0.0
    %588 = vmatpush1.msra.mxu0 0.0
    %589 = vmatprep.subr.mxu0 0.0
    %590 = vmatpush1.msra.mxu0 0.0
    %591 = vmatprep.subr.mxu0 0.0
    %592 = vmatpush1.msra.mxu0 0.0
    %593 = vmatprep.subr.mxu0 0.0
    %594 = vmatpush1.msra.mxu0 0.0
    %595 = vmatprep.subr.mxu0 0.0
    %596 = vmatpush1.msra.mxu0 0.0
    %597 = vmatprep.subr.mxu0 0.0
    %598 = vmatpush1.msra.mxu0 0.0
    %599 = vmatprep.subr.mxu0 0.0
    %600 = vmatpush1.msra.mxu0 0.0
    %601 = vmatprep.subr.mxu0 0.0
    %602 = vmatpush1.msra.mxu0 0.0
    %603 = vmatprep.subr.mxu0 0.0
    %604 = vmatpush1.msra.mxu0 0.0
    %605 = vmatprep.subr.mxu0 0.0
    %606 = vmatpush1.msra.mxu0 0.0
    %607 = vmatprep.subr.mxu0 0.0
    %608 = vmatpush1.msra.mxu0 0.0
    %609 = vmatprep.subr.mxu0 0.0
    %610 = vmatpush1.msra.mxu0 0.0
    %611 = vmatprep.subr.mxu0 0.0
    %612 = vmatpush1.msra.mxu0 0.0
    %613 = vmatprep.subr.mxu0 0.0
    %614 = vmatpush1.msra.mxu0 0.0
    %615 = vmatprep.subr.mxu0 0.0
    %616 = vmatpush1.msra.mxu0 0.0
    %617 = vmatprep.subr.mxu0 0.0
    %618 = vmatpush1.msra.mxu0 0.0
    %619 = vmatprep.subr.mxu0 0.0
    %620 = vmatpush1.msra.mxu0 0.0
    %621 = vmatprep.subr.mxu0 0.0
    %622 = vmatpush1.msra.mxu0 0.0
    %623 = vmatprep.subr.mxu0 0.0
    %624 = vmatpush1.msra.mxu0 0.0
    %625 = vmatprep.subr.mxu0 0.0
    %626 = vmatpush1.msra.mxu0 0.0
    %627 = vmatprep.subr.mxu0 0.0
    %628 = vmatpush1.msra.mxu0 0.0
    %629 = vmatprep.subr.mxu0 0.0
    %630 = vmatpush1.msra.mxu0 0.0
    %631 = vmatprep.subr.mxu0 0.0
    %632 = vmatpush1.msra.mxu0 0.0
    %633 = vmatprep.subr.mxu0 0.0
    %634 = vmatpush1.msra.mxu0 0.0
    %635 = vmatprep.mubr.f32.mxu0 0.0
    %636 = vmatmul.mubr.f32.gmra.mrb[0].mxu0 %v569
    %v637 = vpop.f32.mrb[0].mxu0
    %v638 = vadd.f32 0.0, %v637
    %v639 = vpop.f32.mrb[0].mxu0
    %640 = vdwg.mxu0
    %v642 = vrot.slane %v638, 4
    %v644 = vadd.f32 %v140, %v642
    %v645 = vxor.u32 %v644, 2147483648
    %v646 = vmul.f32 %v645, 1.442695
    %v647 = vpow.pop %v646
    %v648 = vadd.f32 %v647, 1.0
    %v649 = vrcp.pop %v648
    %v650 = vmul.f32 1.0, %v649
    %v651 = vtanh.pop %v644
    %v653 = vrot.slane %v558, 7
    %v655 = vmul.f32 %v650, %v653
    %657 = vrot.lane.b32.xlu0 %v651, 64
    %v658 = vpop.permute.xlu0 %657
    %v660 = vmul.f32 %v650, %v658
    %662 = vrot.lane.b32.xlu0 %v660, 32
    %v663 = vpop.permute.xlu0 %662
    %v665 = vadd.f32 %v655, %v663
    %v666 = vtanh.pop %v665
    %668 = vrot.lane.b32.xlu0 %v666, 64
    %v669 = vpop.permute.xlu0 %668
    %v671 = vmul.f32 %v650, %v669
    %v673 = vrot.slane %v671, 4
    %674 = vrot.lane.b32.xlu0 %v673, 32
    %v675 = vpop.permute.xlu0 %674
    %v676 = vsel %vm69, %v675, 0
    %678 = vmatprep.subr.mxu0 0.0
    %679 = vmatpush1.msra.mxu0 %v143
    %680 = vmatprep.subr.mxu0 0.0
    %681 = vmatpush1.msra.mxu0 %v144
    %682 = vmatprep.subr.mxu0 0.0
    %683 = vmatpush1.msra.mxu0 %v145
    %684 = vmatprep.subr.mxu0 0.0
    %685 = vmatpush1.msra.mxu0 %v146
    %686 = vmatprep.subr.mxu0 0.0
    %687 = vmatpush1.msra.mxu0 0.0
    %688 = vmatprep.subr.mxu0 0.0
    %689 = vmatpush1.msra.mxu0 0.0
    %690 = vmatprep.subr.mxu0 0.0
    %691 = vmatpush1.msra.mxu0 0.0
    %692 = vmatprep.subr.mxu0 0.0
    %693 = vmatpush1.msra.mxu0 0.0
    %694 = vmatprep.subr.mxu0 0.0
    %695 = vmatpush1.msra.mxu0 0.0
    %696 = vmatprep.subr.mxu0 0.0
    %697 = vmatpush1.msra.mxu0 0.0
    %698 = vmatprep.subr.mxu0 0.0
    %699 = vmatpush1.msra.mxu0 0.0
    %700 = vmatprep.subr.mxu0 0.0
    %701 = vmatpush1.msra.mxu0 0.0
    %702 = vmatprep.subr.mxu0 0.0
    %703 = vmatpush1.msra.mxu0 0.0
    %704 = vmatprep.subr.mxu0 0.0
    %705 = vmatpush1.msra.mxu0 0.0
    %706 = vmatprep.subr.mxu0 0.0
    %707 = vmatpush1.msra.mxu0 0.0
    %708 = vmatprep.subr.mxu0 0.0
    %709 = vmatpush1.msra.mxu0 0.0
    %710 = vmatprep.subr.mxu0 0.0
    %711 = vmatpush1.msra.mxu0 0.0
    %712 = vmatprep.subr.mxu0 0.0
    %713 = vmatpush1.msra.mxu0 0.0
    %714 = vmatprep.subr.mxu0 0.0
    %715 = vmatpush1.msra.mxu0 0.0
    %716 = vmatprep.subr.mxu0 0.0
    %717 = vmatpush1.msra.mxu0 0.0
    %718 = vmatprep.subr.mxu0 0.0
    %719 = vmatpush1.msra.mxu0 0.0
    %720 = vmatprep.subr.mxu0 0.0
    %721 = vmatpush1.msra.mxu0 0.0
    %722 = vmatprep.subr.mxu0 0.0
    %723 = vmatpush1.msra.mxu0 0.0
    %724 = vmatprep.subr.mxu0 0.0
    %725 = vmatpush1.msra.mxu0 0.0
    %726 = vmatprep.subr.mxu0 0.0
    %727 = vmatpush1.msra.mxu0 0.0
    %728 = vmatprep.subr.mxu0 0.0
    %729 = vmatpush1.msra.mxu0 0.0
    %730 = vmatprep.subr.mxu0 0.0
    %731 = vmatpush1.msra.mxu0 0.0
    %732 = vmatprep.subr.mxu0 0.0
    %733 = vmatpush1.msra.mxu0 0.0
    %734 = vmatprep.subr.mxu0 0.0
    %735 = vmatpush1.msra.mxu0 0.0
    %736 = vmatprep.subr.mxu0 0.0
    %737 = vmatpush1.msra.mxu0 0.0
    %738 = vmatprep.subr.mxu0 0.0
    %739 = vmatpush1.msra.mxu0 0.0
    %740 = vmatprep.subr.mxu0 0.0
    %741 = vmatpush1.msra.mxu0 0.0
    %742 = vmatprep.mubr.f32.mxu0 0.0
    %743 = vmatmul.mubr.f32.gmra.mrb[0].mxu0 %v676
    %v744 = vpop.f32.mrb[0].mxu0
    %v745 = vadd.f32 0.0, %v744
    %v746 = vpop.f32.mrb[0].mxu0
    %747 = vdwg.mxu0
    %v749 = vrot.slane %v745, 3
    %v751 = vadd.f32 %v140, %v749
    %v752 = vxor.u32 %v751, 2147483648
    %v753 = vmul.f32 %v752, 1.442695
    %v754 = vpow.pop %v753
    %v755 = vadd.f32 %v754, 1.0
    %v756 = vrcp.pop %v755
    %v757 = vmul.f32 1.0, %v756
    %v758 = vtanh.pop %v751
    %v760 = vrot.slane %v665, 7
    %v762 = vmul.f32 %v757, %v760
    %764 = vrot.lane.b32.xlu0 %v758, 64
    %v765 = vpop.permute.xlu0 %764
    %v767 = vmul.f32 %v757, %v765
    %769 = vrot.lane.b32.xlu0 %v767, 32
    %v770 = vpop.permute.xlu0 %769
    %v772 = vadd.f32 %v762, %v770
    %v773 = vtanh.pop %v772
    %775 = vrot.lane.b32.xlu0 %v773, 64
    %v776 = vpop.permute.xlu0 %775
    %v778 = vmul.f32 %v757, %v776
    %v780 = vrot.slane %v778, 5
    %781 = vrot.lane.b32.xlu0 %v780, 32
    %v782 = vpop.permute.xlu0 %781
    %v783 = vsel %vm69, %v782, 0
    %785 = vmatprep.subr.mxu0 0.0
    %786 = vmatpush1.msra.mxu0 %v143
    %787 = vmatprep.subr.mxu0 0.0
    %788 = vmatpush1.msra.mxu0 %v144
    %789 = vmatprep.subr.mxu0 0.0
    %790 = vmatpush1.msra.mxu0 %v145
    %791 = vmatprep.subr.mxu0 0.0
    %792 = vmatpush1.msra.mxu0 %v146
    %793 = vmatprep.subr.mxu0 0.0
    %794 = vmatpush1.msra.mxu0 0.0
    %795 = vmatprep.subr.mxu0 0.0
    %796 = vmatpush1.msra.mxu0 0.0
    %797 = vmatprep.subr.mxu0 0.0
    %798 = vmatpush1.msra.mxu0 0.0
    %799 = vmatprep.subr.mxu0 0.0
    %800 = vmatpush1.msra.mxu0 0.0
    %801 = vmatprep.subr.mxu0 0.0
    %802 = vmatpush1.msra.mxu0 0.0
    %803 = vmatprep.subr.mxu0 0.0
    %804 = vmatpush1.msra.mxu0 0.0
    %805 = vmatprep.subr.mxu0 0.0
    %806 = vmatpush1.msra.mxu0 0.0
    %807 = vmatprep.subr.mxu0 0.0
    %808 = vmatpush1.msra.mxu0 0.0
    %809 = vmatprep.subr.mxu0 0.0
    %810 = vmatpush1.msra.mxu0 0.0
    %811 = vmatprep.subr.mxu0 0.0
    %812 = vmatpush1.msra.mxu0 0.0
    %813 = vmatprep.subr.mxu0 0.0
    %814 = vmatpush1.msra.mxu0 0.0
    %815 = vmatprep.subr.mxu0 0.0
    %816 = vmatpush1.msra.mxu0 0.0
    %817 = vmatprep.subr.mxu0 0.0
    %818 = vmatpush1.msra.mxu0 0.0
    %819 = vmatprep.subr.mxu0 0.0
    %820 = vmatpush1.msra.mxu0 0.0
    %821 = vmatprep.subr.mxu0 0.0
    %822 = vmatpush1.msra.mxu0 0.0
    %823 = vmatprep.subr.mxu0 0.0
    %824 = vmatpush1.msra.mxu0 0.0
    %825 = vmatprep.subr.mxu0 0.0
    %826 = vmatpush1.msra.mxu0 0.0
    %827 = vmatprep.subr.mxu0 0.0
    %828 = vmatpush1.msra.mxu0 0.0
    %829 = vmatprep.subr.mxu0 0.0
    %830 = vmatpush1.msra.mxu0 0.0
    %831 = vmatprep.subr.mxu0 0.0
    %832 = vmatpush1.msra.mxu0 0.0
    %833 = vmatprep.subr.mxu0 0.0
    %834 = vmatpush1.msra.mxu0 0.0
    %835 = vmatprep.subr.mxu0 0.0
    %836 = vmatpush1.msra.mxu0 0.0
    %837 = vmatprep.subr.mxu0 0.0
    %838 = vmatpush1.msra.mxu0 0.0
    %839 = vmatprep.subr.mxu0 0.0
    %840 = vmatpush1.msra.mxu0 0.0
    %841 = vmatprep.subr.mxu0 0.0
    %842 = vmatpush1.msra.mxu0 0.0
    %843 = vmatprep.subr.mxu0 0.0
    %844 = vmatpush1.msra.mxu0 0.0
    %845 = vmatprep.subr.mxu0 0.0
    %846 = vmatpush1.msra.mxu0 0.0
    %847 = vmatprep.subr.mxu0 0.0
    %848 = vmatpush1.msra.mxu0 0.0
    %849 = vmatprep.mubr.f32.mxu0 0.0
    %850 = vmatmul.mubr.f32.gmra.mrb[0].mxu0 %v783
    %v851 = vpop.f32.mrb[0].mxu0
    %v852 = vadd.f32 0.0, %v851
    %v853 = vpop.f32.mrb[0].mxu0
    %854 = vdwg.mxu0
    %v856 = vrot.slane %v852, 2
    %v858 = vadd.f32 %v140, %v856
    %v859 = vxor.u32 %v858, 2147483648
    %v860 = vmul.f32 %v859, 1.442695
    %v861 = vpow.pop %v860
    %v862 = vadd.f32 %v861, 1.0
    %v863 = vrcp.pop %v862
    %v864 = vmul.f32 1.0, %v863
    %v865 = vtanh.pop %v858
    %v867 = vrot.slane %v772, 7
    %v869 = vmul.f32 %v864, %v867
    %871 = vrot.lane.b32.xlu0 %v865, 64
    %v872 = vpop.permute.xlu0 %871
    %v874 = vmul.f32 %v864, %v872
    %876 = vrot.lane.b32.xlu0 %v874, 32
    %v877 = vpop.permute.xlu0 %876
    %v879 = vadd.f32 %v869, %v877
    %v880 = vtanh.pop %v879
    %882 = vrot.lane.b32.xlu0 %v880, 64
    %v883 = vpop.permute.xlu0 %882
    %v885 = vmul.f32 %v864, %v883
    %v887 = vrot.slane %v885, 6
    %888 = vrot.lane.b32.xlu0 %v887, 32
    %v889 = vpop.permute.xlu0 %888
    %v890 = vsel %vm69, %v889, 0
    %892 = vmatprep.subr.mxu0 0.0
    %893 = vmatpush1.msra.mxu0 %v143
    %894 = vmatprep.subr.mxu0 0.0
    %895 = vmatpush1.msra.mxu0 %v144
    %896 = vmatprep.subr.mxu0 0.0
    %897 = vmatpush1.msra.mxu0 %v145
    %898 = vmatprep.subr.mxu0 0.0
    %899 = vmatpush1.msra.mxu0 %v146
    %900 = vmatprep.subr.mxu0 0.0
    %901 = vmatpush1.msra.mxu0 0.0
    %902 = vmatprep.subr.mxu0 0.0
    %903 = vmatpush1.msra.mxu0 0.0
    %904 = vmatprep.subr.mxu0 0.0
    %905 = vmatpush1.msra.mxu0 0.0
    %906 = vmatprep.subr.mxu0 0.0
    %907 = vmatpush1.msra.mxu0 0.0
    %908 = vmatprep.subr.mxu0 0.0
    %909 = vmatpush1.msra.mxu0 0.0
    %910 = vmatprep.subr.mxu0 0.0
    %911 = vmatpush1.msra.mxu0 0.0
    %912 = vmatprep.subr.mxu0 0.0
    %913 = vmatpush1.msra.mxu0 0.0
    %914 = vmatprep.subr.mxu0 0.0
    %915 = vmatpush1.msra.mxu0 0.0
    %916 = vmatprep.subr.mxu0 0.0
    %917 = vmatpush1.msra.mxu0 0.0
    %918 = vmatprep.subr.mxu0 0.0
    %919 = vmatpush1.msra.mxu0 0.0
    %920 = vmatprep.subr.mxu0 0.0
    %921 = vmatpush1.msra.mxu0 0.0
    %922 = vmatprep.subr.mxu0 0.0
    %923 = vmatpush1.msra.mxu0 0.0
    %924 = vmatprep.subr.mxu0 0.0
    %925 = vmatpush1.msra.mxu0 0.0
    %926 = vmatprep.subr.mxu0 0.0
    %927 = vmatpush1.msra.mxu0 0.0
    %928 = vmatprep.subr.mxu0 0.0
    %929 = vmatpush1.msra.mxu0 0.0
    %930 = vmatprep.subr.mxu0 0.0
    %931 = vmatpush1.msra.mxu0 0.0
    %932 = vmatprep.subr.mxu0 0.0
    %933 = vmatpush1.msra.mxu0 0.0
    %934 = vmatprep.subr.mxu0 0.0
    %935 = vmatpush1.msra.mxu0 0.0
    %936 = vmatprep.subr.mxu0 0.0
    %937 = vmatpush1.msra.mxu0 0.0
    %938 = vmatprep.subr.mxu0 0.0
    %939 = vmatpush1.msra.mxu0 0.0
    %940 = vmatprep.subr.mxu0 0.0
    %941 = vmatpush1.msra.mxu0 0.0
    %942 = vmatprep.subr.mxu0 0.0
    %943 = vmatpush1.msra.mxu0 0.0
    %944 = vmatprep.subr.mxu0 0.0
    %945 = vmatpush1.msra.mxu0 0.0
    %946 = vmatprep.subr.mxu0 0.0
    %947 = vmatpush1.msra.mxu0 0.0
    %948 = vmatprep.subr.mxu0 0.0
    %949 = vmatpush1.msra.mxu0 0.0
    %950 = vmatprep.subr.mxu0 0.0
    %951 = vmatpush1.msra.mxu0 0.0
    %952 = vmatprep.subr.mxu0 0.0
    %953 = vmatpush1.msra.mxu0 0.0
    %954 = vmatprep.subr.mxu0 0.0
    %955 = vmatpush1.msra.mxu0 0.0
    %956 = vmatprep.mubr.f32.mxu0 0.0
    %957 = vmatmul.mubr.f32.gmra.mrb[0].mxu0 %v890
    %v958 = vpop.f32.mrb[0].mxu0
    %v959 = vadd.f32 0.0, %v958
    %v960 = vpop.f32.mrb[0].mxu0
    %961 = vdwg.mxu0
    %v963 = vrot.slane %v959, 1
    %v965 = vadd.f32 %v140, %v963
    %v966 = vxor.u32 %v965, 2147483648
    %v967 = vmul.f32 %v966, 1.442695
    %v968 = vpow.pop %v967
    %v969 = vadd.f32 %v968, 1.0
    %v970 = vrcp.pop %v969
    %v971 = vmul.f32 1.0, %v970
    %v972 = vtanh.pop %v965
    %v974 = vrot.slane %v879, 7
    %v976 = vmul.f32 %v971, %v974
    %978 = vrot.lane.b32.xlu0 %v972, 64
    %v979 = vpop.permute.xlu0 %978
    %v981 = vmul.f32 %v971, %v979
    %983 = vrot.lane.b32.xlu0 %v981, 32
    %v984 = vpop.permute.xlu0 %983
    %v986 = vadd.f32 %v976, %v984
    %v987 = vtanh.pop %v986
    %989 = vrot.lane.b32.xlu0 %v987, 64
    %v990 = vpop.permute.xlu0 %989
    %v992 = vmul.f32 %v971, %v990
    %v993 = vld [vmem:[%s7] sm:$0xff]
    %v994 = vld [vmem:[%s7 + $0x8] sm:$0xff]
    %v995 = vld [vmem:[%s7 + $0x10] sm:$0xff]
    %v996 = vld [vmem:[%s7 + $0x18] sm:$0xff]
    %v997 = vld [vmem:[%s9] sm:$0xff]
    %v998 = vld [vmem:[%s9 + $0x8] sm:$0xff]
    %v999 = vld [vmem:[%s9 + $0x10] sm:$0xff]
    %v1000 = vld [vmem:[%s9 + $0x18] sm:$0xff]
    %v1001 = vld [vmem:[%s6] sm:$0xff]
    %v1002 = vld [vmem:[%s6 + $0x8] sm:$0xff]
    %v1003 = vld [vmem:[%s6 + $0x10] sm:$0xff]
    %v1004 = vld [vmem:[%s6 + $0x18] sm:$0xff]
    %v1006 = vsel %vm69, %v997, 0
    %v1009 = vsel %vm69, %v998, 0
    %v1012 = vsel %vm69, %v999, 0
    %v1015 = vsel %vm69, %v1000, 0
    %1017 = vmatprep.subr.mxu0 0.0
    %1018 = vmatpush1.msra.mxu0 %v1001
    %1019 = vmatprep.subr.mxu0 0.0
    %1020 = vmatpush1.msra.mxu0 %v1002
    %1021 = vmatprep.subr.mxu0 0.0
    %1022 = vmatpush1.msra.mxu0 %v1003
    %1023 = vmatprep.subr.mxu0 0.0
    %1024 = vmatpush1.msra.mxu0 %v1004
    %1025 = vmatprep.subr.mxu0 0.0
    %1026 = vmatpush1.msra.mxu0 0.0
    %1027 = vmatprep.subr.mxu0 0.0
    %1028 = vmatpush1.msra.mxu0 0.0
    %1029 = vmatprep.subr.mxu0 0.0
    %1030 = vmatpush1.msra.mxu0 0.0
    %1031 = vmatprep.subr.mxu0 0.0
    %1032 = vmatpush1.msra.mxu0 0.0
    %1033 = vmatprep.subr.mxu0 0.0
    %1034 = vmatpush1.msra.mxu0 0.0
    %1035 = vmatprep.subr.mxu0 0.0
    %1036 = vmatpush1.msra.mxu0 0.0
    %1037 = vmatprep.subr.mxu0 0.0
    %1038 = vmatpush1.msra.mxu0 0.0
    %1039 = vmatprep.subr.mxu0 0.0
    %1040 = vmatpush1.msra.mxu0 0.0
    %1041 = vmatprep.subr.mxu0 0.0
    %1042 = vmatpush1.msra.mxu0 0.0
    %1043 = vmatprep.subr.mxu0 0.0
    %1044 = vmatpush1.msra.mxu0 0.0
    %1045 = vmatprep.subr.mxu0 0.0
    %1046 = vmatpush1.msra.mxu0 0.0
    %1047 = vmatprep.subr.mxu0 0.0
    %1048 = vmatpush1.msra.mxu0 0.0
    %1049 = vmatprep.subr.mxu0 0.0
    %1050 = vmatpush1.msra.mxu0 0.0
    %1051 = vmatprep.subr.mxu0 0.0
    %1052 = vmatpush1.msra.mxu0 0.0
    %1053 = vmatprep.subr.mxu0 0.0
    %1054 = vmatpush1.msra.mxu0 0.0
    %1055 = vmatprep.subr.mxu0 0.0
    %1056 = vmatpush1.msra.mxu0 0.0
    %1057 = vmatprep.subr.mxu0 0.0
    %1058 = vmatpush1.msra.mxu0 0.0
    %1059 = vmatprep.subr.mxu0 0.0
    %1060 = vmatpush1.msra.mxu0 0.0
    %1061 = vmatprep.subr.mxu0 0.0
    %1062 = vmatpush1.msra.mxu0 0.0
    %1063 = vmatprep.subr.mxu0 0.0
    %1064 = vmatpush1.msra.mxu0 0.0
    %1065 = vmatprep.subr.mxu0 0.0
    %1066 = vmatpush1.msra.mxu0 0.0
    %1067 = vmatprep.subr.mxu0 0.0
    %1068 = vmatpush1.msra.mxu0 0.0
    %1069 = vmatprep.subr.mxu0 0.0
    %1070 = vmatpush1.msra.mxu0 0.0
    %1071 = vmatprep.subr.mxu0 0.0
    %1072 = vmatpush1.msra.mxu0 0.0
    %1073 = vmatprep.subr.mxu0 0.0
    %1074 = vmatpush1.msra.mxu0 0.0
    %1075 = vmatprep.subr.mxu0 0.0
    %1076 = vmatpush1.msra.mxu0 0.0
    %1077 = vmatprep.subr.mxu0 0.0
    %1078 = vmatpush1.msra.mxu0 0.0
    %1079 = vmatprep.subr.mxu0 0.0
    %1080 = vmatpush1.msra.mxu0 0.0
    %1081 = vmatprep.mubr.f32.mxu0 0.0
    %1082 = vmatmul.mubr.f32.gmra.mrb[0].mxu0 %v1006
    %v1083 = vpop.f32.mrb[0].mxu0
    %v1084 = vadd.f32 0.0, %v1083
    %v1085 = vpop.f32.mrb[0].mxu0
    %1086 = vmatprep.mubr.f32.mxu0 0.0
    %1087 = vmatmul.mubr.f32.gmra.mrb[0].mxu0 %v1009
    %v1088 = vpop.f32.mrb[0].mxu0
    %v1089 = vadd.f32 0.0, %v1088
    %v1090 = vpop.f32.mrb[0].mxu0
    %1091 = vmatprep.mubr.f32.mxu0 0.0
    %1092 = vmatmul.mubr.f32.gmra.mrb[0].mxu0 %v1012
    %v1093 = vpop.f32.mrb[0].mxu0
    %v1094 = vadd.f32 0.0, %v1093
    %v1095 = vpop.f32.mrb[0].mxu0
    %1096 = vmatprep.mubr.f32.mxu0 0.0
    %1097 = vmatmul.mubr.f32.gmra.mrb[0].mxu0 %v1015
    %v1098 = vpop.f32.mrb[0].mxu0
    %v1099 = vadd.f32 0.0, %v1098
    %v1100 = vpop.f32.mrb[0].mxu0
    %1101 = vdwg.mxu0
    %v1102 = vadd.f32 %v993, %v1084
    %v1103 = vadd.f32 %v994, %v1089
    %v1104 = vadd.f32 %v995, %v1094
    %v1105 = vadd.f32 %v996, %v1099
    %v1106 = vld [vmem:[%s8] sm:$0x1]
    %v1107 = vld [vmem:[%s10] sm:$0x1]
    %v1109 = vsel %vm69, %v1107, 0
    %1111 = vmatprep.subr.mxu0 0.0
    %1112 = vmatpush1.msra.mxu0 %v1001
    %1113 = vmatprep.subr.mxu0 0.0
    %1114 = vmatpush1.msra.mxu0 %v1002
    %1115 = vmatprep.subr.mxu0 0.0
    %1116 = vmatpush1.msra.mxu0 %v1003
    %1117 = vmatprep.subr.mxu0 0.0
    %1118 = vmatpush1.msra.mxu0 %v1004
    %1119 = vmatprep.subr.mxu0 0.0
    %1120 = vmatpush1.msra.mxu0 0.0
    %1121 = vmatprep.subr.mxu0 0.0
    %1122 = vmatpush1.msra.mxu0 0.0
    %1123 = vmatprep.subr.mxu0 0.0
    %1124 = vmatpush1.msra.mxu0 0.0
    %1125 = vmatprep.subr.mxu0 0.0
    %1126 = vmatpush1.msra.mxu0 0.0
    %1127 = vmatprep.subr.mxu0 0.0
    %1128 = vmatpush1.msra.mxu0 0.0
    %1129 = vmatprep.subr.mxu0 0.0
    %1130 = vmatpush1.msra.mxu0 0.0
    %1131 = vmatprep.subr.mxu0 0.0
    %1132 = vmatpush1.msra.mxu0 0.0
    %1133 = vmatprep.subr.mxu0 0.0
    %1134 = vmatpush1.msra.mxu0 0.0
    %1135 = vmatprep.subr.mxu0 0.0
    %1136 = vmatpush1.msra.mxu0 0.0
    %1137 = vmatprep.subr.mxu0 0.0
    %1138 = vmatpush1.msra.mxu0 0.0
    %1139 = vmatprep.subr.mxu0 0.0
    %1140 = vmatpush1.msra.mxu0 0.0
    %1141 = vmatprep.subr.mxu0 0.0
    %1142 = vmatpush1.msra.mxu0 0.0
    %1143 = vmatprep.subr.mxu0 0.0
    %1144 = vmatpush1.msra.mxu0 0.0
    %1145 = vmatprep.subr.mxu0 0.0
    %1146 = vmatpush1.msra.mxu0 0.0
    %1147 = vmatprep.subr.mxu0 0.0
    %1148 = vmatpush1.msra.mxu0 0.0
    %1149 = vmatprep.subr.mxu0 0.0
    %1150 = vmatpush1.msra.mxu0 0.0
    %1151 = vmatprep.subr.mxu0 0.0
    %1152 = vmatpush1.msra.mxu0 0.0
    %1153 = vmatprep.subr.mxu0 0.0
    %1154 = vmatpush1.msra.mxu0 0.0
    %1155 = vmatprep.subr.mxu0 0.0
    %1156 = vmatpush1.msra.mxu0 0.0
    %1157 = vmatprep.subr.mxu0 0.0
    %1158 = vmatpush1.msra.mxu0 0.0
    %1159 = vmatprep.subr.mxu0 0.0
    %1160 = vmatpush1.msra.mxu0 0.0
    %1161 = vmatprep.subr.mxu0 0.0
    %1162 = vmatpush1.msra.mxu0 0.0
    %1163 = vmatprep.subr.mxu0 0.0
    %1164 = vmatpush1.msra.mxu0 0.0
    %1165 = vmatprep.subr.mxu0 0.0
    %1166 = vmatpush1.msra.mxu0 0.0
    %1167 = vmatprep.subr.mxu0 0.0
    %1168 = vmatpush1.msra.mxu0 0.0
    %1169 = vmatprep.subr.mxu0 0.0
    %1170 = vmatpush1.msra.mxu0 0.0
    %1171 = vmatprep.subr.mxu0 0.0
    %1172 = vmatpush1.msra.mxu0 0.0
    %1173 = vmatprep.subr.mxu0 0.0
    %1174 = vmatpush1.msra.mxu0 0.0
    %1175 = vmatprep.mubr.f32.mxu0 0.0
    %1176 = vmatmul.mubr.f32.gmra.mrb[0].mxu0 %v1109
    %v1177 = vpop.f32.mrb[0].mxu0
    %v1178 = vadd.f32 0.0, %v1177
    %v1179 = vpop.f32.mrb[0].mxu0
    %1180 = vdwg.mxu0
    %v1181 = vadd.f32 %v1106, %v1178
    %v1182 = vld [vmem:[%s12] sm:$0xff]
    %v1183 = vld [vmem:[%s12 + $0x8] sm:$0xff]
    %v1184 = vld [vmem:[%s12 + $0x10] sm:$0xff]
    %v1185 = vld [vmem:[%s12 + $0x18] sm:$0xff]
    %v1186 = vld [vmem:[%s14] sm:$0xff]
    %v1187 = vld [vmem:[%s14 + $0x8] sm:$0xff]
    %v1188 = vld [vmem:[%s14 + $0x10] sm:$0xff]
    %v1189 = vld [vmem:[%s14 + $0x18] sm:$0xff]
    %v1190 = vld [vmem:[%s11] sm:$0xff]
    %v1191 = vld [vmem:[%s11 + $0x8] sm:$0xff]
    %v1192 = vld [vmem:[%s11 + $0x10] sm:$0xff]
    %v1193 = vld [vmem:[%s11 + $0x18] sm:$0xff]
    %v1195 = vsel %vm69, %v1186, 0
    %v1198 = vsel %vm69, %v1187, 0
    %v1201 = vsel %vm69, %v1188, 0
    %v1204 = vsel %vm69, %v1189, 0
    %1206 = vmatprep.subr.mxu0 0.0
    %1207 = vmatpush1.msra.mxu0 %v1190
    %1208 = vmatprep.subr.mxu0 0.0
    %1209 = vmatpush1.msra.mxu0 %v1191
    %1210 = vmatprep.subr.mxu0 0.0
    %1211 = vmatpush1.msra.mxu0 %v1192
    %1212 = vmatprep.subr.mxu0 0.0
    %1213 = vmatpush1.msra.mxu0 %v1193
    %1214 = vmatprep.subr.mxu0 0.0
    %1215 = vmatpush1.msra.mxu0 0.0
    %1216 = vmatprep.subr.mxu0 0.0
    %1217 = vmatpush1.msra.mxu0 0.0
    %1218 = vmatprep.subr.mxu0 0.0
    %1219 = vmatpush1.msra.mxu0 0.0
    %1220 = vmatprep.subr.mxu0 0.0
    %1221 = vmatpush1.msra.mxu0 0.0
    %1222 = vmatprep.subr.mxu0 0.0
    %1223 = vmatpush1.msra.mxu0 0.0
    %1224 = vmatprep.subr.mxu0 0.0
    %1225 = vmatpush1.msra.mxu0 0.0
    %1226 = vmatprep.subr.mxu0 0.0
    %1227 = vmatpush1.msra.mxu0 0.0
    %1228 = vmatprep.subr.mxu0 0.0
    %1229 = vmatpush1.msra.mxu0 0.0
    %1230 = vmatprep.subr.mxu0 0.0
    %1231 = vmatpush1.msra.mxu0 0.0
    %1232 = vmatprep.subr.mxu0 0.0
    %1233 = vmatpush1.msra.mxu0 0.0
    %1234 = vmatprep.subr.mxu0 0.0
    %1235 = vmatpush1.msra.mxu0 0.0
    %1236 = vmatprep.subr.mxu0 0.0
    %1237 = vmatpush1.msra.mxu0 0.0
    %1238 = vmatprep.subr.mxu0 0.0
    %1239 = vmatpush1.msra.mxu0 0.0
    %1240 = vmatprep.subr.mxu0 0.0
    %1241 = vmatpush1.msra.mxu0 0.0
    %1242 = vmatprep.subr.mxu0 0.0
    %1243 = vmatpush1.msra.mxu0 0.0
    %1244 = vmatprep.subr.mxu0 0.0
    %1245 = vmatpush1.msra.mxu0 0.0
    %1246 = vmatprep.subr.mxu0 0.0
    %1247 = vmatpush1.msra.mxu0 0.0
    %1248 = vmatprep.subr.mxu0 0.0
    %1249 = vmatpush1.msra.mxu0 0.0
    %1250 = vmatprep.subr.mxu0 0.0
    %1251 = vmatpush1.msra.mxu0 0.0
    %1252 = vmatprep.subr.mxu0 0.0
    %1253 = vmatpush1.msra.mxu0 0.0
    %1254 = vmatprep.subr.mxu0 0.0
    %1255 = vmatpush1.msra.mxu0 0.0
    %1256 = vmatprep.subr.mxu0 0.0
    %1257 = vmatpush1.msra.mxu0 0.0
    %1258 = vmatprep.subr.mxu0 0.0
    %1259 = vmatpush1.msra.mxu0 0.0
    %1260 = vmatprep.subr.mxu0 0.0
    %1261 = vmatpush1.msra.mxu0 0.0
    %1262 = vmatprep.subr.mxu0 0.0
    %1263 = vmatpush1.msra.mxu0 0.0
    %1264 = vmatprep.subr.mxu0 0.0
    %1265 = vmatpush1.msra.mxu0 0.0
    %1266 = vmatprep.subr.mxu0 0.0
    %1267 = vmatpush1.msra.mxu0 0.0
    %1268 = vmatprep.subr.mxu0 0.0
    %1269 = vmatpush1.msra.mxu0 0.0
    %1270 = vmatprep.mubr.f32.mxu0 0.0
    %1271 = vmatmul.mubr.f32.gmra.mrb[0].mxu0 %v1195
    %v1272 = vpop.f32.mrb[0].mxu0
    %v1273 = vadd.f32 0.0, %v1272
    %v1274 = vpop.f32.mrb[0].mxu0
    %1275 = vmatprep.mubr.f32.mxu0 0.0
    %1276 = vmatmul.mubr.f32.gmra.mrb[0].mxu0 %v1198
    %v1277 = vpop.f32.mrb[0].mxu0
    %v1278 = vadd.f32 0.0, %v1277
    %v1279 = vpop.f32.mrb[0].mxu0
    %1280 = vmatprep.mubr.f32.mxu0 0.0
    %1281 = vmatmul.mubr.f32.gmra.mrb[0].mxu0 %v1201
    %v1282 = vpop.f32.mrb[0].mxu0
    %v1283 = vadd.f32 0.0, %v1282
    %v1284 = vpop.f32.mrb[0].mxu0
    %1285 = vmatprep.mubr.f32.mxu0 0.0
    %1286 = vmatmul.mubr.f32.gmra.mrb[0].mxu0 %v1204
    %v1287 = vpop.f32.mrb[0].mxu0
    %v1288 = vadd.f32 0.0, %v1287
    %v1289 = vpop.f32.mrb[0].mxu0
    %1290 = vdwg.mxu0
    %v1291 = vadd.f32 %v1182, %v1273
    %v1292 = vadd.f32 %v1183, %v1278
    %v1293 = vadd.f32 %v1184, %v1283
    %v1294 = vadd.f32 %v1185, %v1288
    %v1295 = vld [vmem:[%s13] sm:$0x1]
    %v1296 = vld [vmem:[%s15] sm:$0x1]
    %v1298 = vsel %vm69, %v1296, 0
    %1300 = vmatprep.subr.mxu0 0.0
    %1301 = vmatpush1.msra.mxu0 %v1190
    %1302 = vmatprep.subr.mxu0 0.0
    %1303 = vmatpush1.msra.mxu0 %v1191
    %1304 = vmatprep.subr.mxu0 0.0
    %1305 = vmatpush1.msra.mxu0 %v1192
    %1306 = vmatprep.subr.mxu0 0.0
    %1307 = vmatpush1.msra.mxu0 %v1193
    %1308 = vmatprep.subr.mxu0 0.0
    %1309 = vmatpush1.msra.mxu0 0.0
    %1310 = vmatprep.subr.mxu0 0.0
    %1311 = vmatpush1.msra.mxu0 0.0
    %1312 = vmatprep.subr.mxu0 0.0
    %1313 = vmatpush1.msra.mxu0 0.0
    %1314 = vmatprep.subr.mxu0 0.0
    %1315 = vmatpush1.msra.mxu0 0.0
    %1316 = vmatprep.subr.mxu0 0.0
    %1317 = vmatpush1.msra.mxu0 0.0
    %1318 = vmatprep.subr.mxu0 0.0
    %1319 = vmatpush1.msra.mxu0 0.0
    %1320 = vmatprep.subr.mxu0 0.0
    %1321 = vmatpush1.msra.mxu0 0.0
    %1322 = vmatprep.subr.mxu0 0.0
    %1323 = vmatpush1.msra.mxu0 0.0
    %1324 = vmatprep.subr.mxu0 0.0
    %1325 = vmatpush1.msra.mxu0 0.0
    %1326 = vmatprep.subr.mxu0 0.0
    %1327 = vmatpush1.msra.mxu0 0.0
    %1328 = vmatprep.subr.mxu0 0.0
    %1329 = vmatpush1.msra.mxu0 0.0
    %1330 = vmatprep.subr.mxu0 0.0
    %1331 = vmatpush1.msra.mxu0 0.0
    %1332 = vmatprep.subr.mxu0 0.0
    %1333 = vmatpush1.msra.mxu0 0.0
    %1334 = vmatprep.subr.mxu0 0.0
    %1335 = vmatpush1.msra.mxu0 0.0
    %1336 = vmatprep.subr.mxu0 0.0
    %1337 = vmatpush1.msra.mxu0 0.0
    %1338 = vmatprep.subr.mxu0 0.0
    %1339 = vmatpush1.msra.mxu0 0.0
    %1340 = vmatprep.subr.mxu0 0.0
    %1341 = vmatpush1.msra.mxu0 0.0
    %1342 = vmatprep.subr.mxu0 0.0
    %1343 = vmatpush1.msra.mxu0 0.0
    %1344 = vmatprep.subr.mxu0 0.0
    %1345 = vmatpush1.msra.mxu0 0.0
    %1346 = vmatprep.subr.mxu0 0.0
    %1347 = vmatpush1.msra.mxu0 0.0
    %1348 = vmatprep.subr.mxu0 0.0
    %1349 = vmatpush1.msra.mxu0 0.0
    %1350 = vmatprep.subr.mxu0 0.0
    %1351 = vmatpush1.msra.mxu0 0.0
    %1352 = vmatprep.subr.mxu0 0.0
    %1353 = vmatpush1.msra.mxu0 0.0
    %1354 = vmatprep.subr.mxu0 0.0
    %1355 = vmatpush1.msra.mxu0 0.0
    %1356 = vmatprep.subr.mxu0 0.0
    %1357 = vmatpush1.msra.mxu0 0.0
    %1358 = vmatprep.subr.mxu0 0.0
    %1359 = vmatpush1.msra.mxu0 0.0
    %1360 = vmatprep.subr.mxu0 0.0
    %1361 = vmatpush1.msra.mxu0 0.0
    %1362 = vmatprep.subr.mxu0 0.0
    %1363 = vmatpush1.msra.mxu0 0.0
    %1364 = vmatprep.mubr.f32.mxu0 0.0
    %1365 = vmatmul.mubr.f32.gmra.mrb[0].mxu0 %v1298
    %v1366 = vpop.f32.mrb[0].mxu0
    %v1367 = vadd.f32 0.0, %v1366
    %v1368 = vpop.f32.mrb[0].mxu0
    %1369 = vdwg.mxu0
    %v1370 = vadd.f32 %v1295, %v1367
    %v1372 = vrot.slane %v992, 7
    %1373 = vrot.lane.b32.xlu0 %v1372, 32
    %v1374 = vpop.permute.xlu0 %1373
    %v1375 = vsel %vm69, %v1374, 0
    %1377 = vmatprep.subr.mxu0 0.0
    %1378 = vmatpush1.msra.mxu0 %v993
    %1379 = vmatprep.subr.mxu0 0.0
    %1380 = vmatpush1.msra.mxu0 %v994
    %1381 = vmatprep.subr.mxu0 0.0
    %1382 = vmatpush1.msra.mxu0 %v995
    %1383 = vmatprep.subr.mxu0 0.0
    %1384 = vmatpush1.msra.mxu0 %v996
    %1385 = vmatprep.subr.mxu0 0.0
    %1386 = vmatpush1.msra.mxu0 0.0
    %1387 = vmatprep.subr.mxu0 0.0
    %1388 = vmatpush1.msra.mxu0 0.0
    %1389 = vmatprep.subr.mxu0 0.0
    %1390 = vmatpush1.msra.mxu0 0.0
    %1391 = vmatprep.subr.mxu0 0.0
    %1392 = vmatpush1.msra.mxu0 0.0
    %1393 = vmatprep.subr.mxu0 0.0
    %1394 = vmatpush1.msra.mxu0 0.0
    %1395 = vmatprep.subr.mxu0 0.0
    %1396 = vmatpush1.msra.mxu0 0.0
    %1397 = vmatprep.subr.mxu0 0.0
    %1398 = vmatpush1.msra.mxu0 0.0
    %1399 = vmatprep.subr.mxu0 0.0
    %1400 = vmatpush1.msra.mxu0 0.0
    %1401 = vmatprep.subr.mxu0 0.0
    %1402 = vmatpush1.msra.mxu0 0.0
    %1403 = vmatprep.subr.mxu0 0.0
    %1404 = vmatpush1.msra.mxu0 0.0
    %1405 = vmatprep.subr.mxu0 0.0
    %1406 = vmatpush1.msra.mxu0 0.0
    %1407 = vmatprep.subr.mxu0 0.0
    %1408 = vmatpush1.msra.mxu0 0.0
    %1409 = vmatprep.subr.mxu0 0.0
    %1410 = vmatpush1.msra.mxu0 0.0
    %1411 = vmatprep.subr.mxu0 0.0
    %1412 = vmatpush1.msra.mxu0 0.0
    %1413 = vmatprep.subr.mxu0 0.0
    %1414 = vmatpush1.msra.mxu0 0.0
    %1415 = vmatprep.subr.mxu0 0.0
    %1416 = vmatpush1.msra.mxu0 0.0
    %1417 = vmatprep.subr.mxu0 0.0
    %1418 = vmatpush1.msra.mxu0 0.0
    %1419 = vmatprep.subr.mxu0 0.0
    %1420 = vmatpush1.msra.mxu0 0.0
    %1421 = vmatprep.subr.mxu0 0.0
    %1422 = vmatpush1.msra.mxu0 0.0
    %1423 = vmatprep.subr.mxu0 0.0
    %1424 = vmatpush1.msra.mxu0 0.0
    %1425 = vmatprep.subr.mxu0 0.0
    %1426 = vmatpush1.msra.mxu0 0.0
    %1427 = vmatprep.subr.mxu0 0.0
    %1428 = vmatpush1.msra.mxu0 0.0
    %1429 = vmatprep.subr.mxu0 0.0
    %1430 = vmatpush1.msra.mxu0 0.0
    %1431 = vmatprep.subr.mxu0 0.0
    %1432 = vmatpush1.msra.mxu0 0.0
    %1433 = vmatprep.subr.mxu0 0.0
    %1434 = vmatpush1.msra.mxu0 0.0
    %1435 = vmatprep.subr.mxu0 0.0
    %1436 = vmatpush1.msra.mxu0 0.0
    %1437 = vmatprep.subr.mxu0 0.0
    %1438 = vmatpush1.msra.mxu0 0.0
    %1439 = vmatprep.subr.mxu0 0.0
    %1440 = vmatpush1.msra.mxu0 0.0
    %1441 = vmatprep.mubr.f32.mxu0 0.0
    %1442 = vmatmul.mubr.f32.gmra.mrb[0].mxu0 %v1375
    %v1443 = vpop.f32.mrb[0].mxu0
    %v1444 = vadd.f32 %v1106, %v1443
    %v1445 = vpop.f32.mrb[0].mxu0
    %1446 = vdwg.mxu0
    %1447 = vmatprep.subr.mxu0 0.0
    %1448 = vmatpush1.msra.mxu0 %v1182
    %1449 = vmatprep.subr.mxu0 0.0
    %1450 = vmatpush1.msra.mxu0 %v1183
    %1451 = vmatprep.subr.mxu0 0.0
    %1452 = vmatpush1.msra.mxu0 %v1184
    %1453 = vmatprep.subr.mxu0 0.0
    %1454 = vmatpush1.msra.mxu0 %v1185
    %1455 = vmatprep.subr.mxu0 0.0
    %1456 = vmatpush1.msra.mxu0 0.0
    %1457 = vmatprep.subr.mxu0 0.0
    %1458 = vmatpush1.msra.mxu0 0.0
    %1459 = vmatprep.subr.mxu0 0.0
    %1460 = vmatpush1.msra.mxu0 0.0
    %1461 = vmatprep.subr.mxu0 0.0
    %1462 = vmatpush1.msra.mxu0 0.0
    %1463 = vmatprep.subr.mxu0 0.0
    %1464 = vmatpush1.msra.mxu0 0.0
    %1465 = vmatprep.subr.mxu0 0.0
    %1466 = vmatpush1.msra.mxu0 0.0
    %1467 = vmatprep.subr.mxu0 0.0
    %1468 = vmatpush1.msra.mxu0 0.0
    %1469 = vmatprep.subr.mxu0 0.0
    %1470 = vmatpush1.msra.mxu0 0.0
    %1471 = vmatprep.subr.mxu0 0.0
    %1472 = vmatpush1.msra.mxu0 0.0
    %1473 = vmatprep.subr.mxu0 0.0
    %1474 = vmatpush1.msra.mxu0 0.0
    %1475 = vmatprep.subr.mxu0 0.0
    %1476 = vmatpush1.msra.mxu0 0.0
    %1477 = vmatprep.subr.mxu0 0.0
    %1478 = vmatpush1.msra.mxu0 0.0
    %1479 = vmatprep.subr.mxu0 0.0
    %1480 = vmatpush1.msra.mxu0 0.0
    %1481 = vmatprep.subr.mxu0 0.0
    %1482 = vmatpush1.msra.mxu0 0.0
    %1483 = vmatprep.subr.mxu0 0.0
    %1484 = vmatpush1.msra.mxu0 0.0
    %1485 = vmatprep.subr.mxu0 0.0
    %1486 = vmatpush1.msra.mxu0 0.0
    %1487 = vmatprep.subr.mxu0 0.0
    %1488 = vmatpush1.msra.mxu0 0.0
    %1489 = vmatprep.subr.mxu0 0.0
    %1490 = vmatpush1.msra.mxu0 0.0
    %1491 = vmatprep.subr.mxu0 0.0
    %1492 = vmatpush1.msra.mxu0 0.0
    %1493 = vmatprep.subr.mxu0 0.0
    %1494 = vmatpush1.msra.mxu0 0.0
    %1495 = vmatprep.subr.mxu0 0.0
    %1496 = vmatpush1.msra.mxu0 0.0
    %1497 = vmatprep.subr.mxu0 0.0
    %1498 = vmatpush1.msra.mxu0 0.0
    %1499 = vmatprep.subr.mxu0 0.0
    %1500 = vmatpush1.msra.mxu0 0.0
    %1501 = vmatprep.subr.mxu0 0.0
    %1502 = vmatpush1.msra.mxu0 0.0
    %1503 = vmatprep.subr.mxu0 0.0
    %1504 = vmatpush1.msra.mxu0 0.0
    %1505 = vmatprep.subr.mxu0 0.0
    %1506 = vmatpush1.msra.mxu0 0.0
    %1507 = vmatprep.subr.mxu0 0.0
    %1508 = vmatpush1.msra.mxu0 0.0
    %1509 = vmatprep.subr.mxu0 0.0
    %1510 = vmatpush1.msra.mxu0 0.0
    %1511 = vmatprep.mubr.f32.mxu0 0.0
    %1512 = vmatmul.mubr.f32.gmra.mrb[0].mxu0 %v1375
    %v1513 = vpop.f32.mrb[0].mxu0
    %v1514 = vadd.f32 %v1295, %v1513
    %v1515 = vpop.f32.mrb[0].mxu0
    %1516 = vdwg.mxu0
    %v1517 = vxor.u32 %v1444, 2147483648
    %v1518 = vmul.f32 %v1517, 1.442695
    %v1519 = vpow.pop %v1518
    %v1520 = vadd.f32 %v1519, 1.0
    %v1521 = vrcp.pop %v1520
    %v1522 = vmul.f32 1.0, %v1521
    %v1523 = vtanh.pop %v1444
    %v1525 = vrot.slane %v986, 7
    %v1527 = vmul.f32 %v1522, %v1525
    %1529 = vrot.lane.b32.xlu0 %v1523, 64
    %v1530 = vpop.permute.xlu0 %1529
    %v1532 = vmul.f32 %v1522, %v1530
    %1534 = vrot.lane.b32.xlu0 %v1532, 32
    %v1535 = vpop.permute.xlu0 %1534
    %v1537 = vadd.f32 %v1527, %v1535
    %v1538 = vtanh.pop %v1537
    %1540 = vrot.lane.b32.xlu0 %v1538, 64
    %v1541 = vpop.permute.xlu0 %1540
    %v1543 = vmul.f32 %v1522, %v1541
    %v1544 = vxor.u32 %v1514, 2147483648
    %v1545 = vmul.f32 %v1544, 1.442695
    %v1546 = vpow.pop %v1545
    %v1547 = vadd.f32 %v1546, 1.0
    %v1548 = vrcp.pop %v1547
    %v1549 = vmul.f32 1.0, %v1548
    %v1550 = vtanh.pop %v1514
    %v1551 = vmul.f32 %v1549, %v1525
    %1553 = vrot.lane.b32.xlu0 %v1550, 64
    %v1554 = vpop.permute.xlu0 %1553
    %v1556 = vmul.f32 %v1549, %v1554
    %1558 = vrot.lane.b32.xlu0 %v1556, 32
    %v1559 = vpop.permute.xlu0 %1558
    %v1561 = vadd.f32 %v1551, %v1559
    %v1562 = vtanh.pop %v1561
    %1564 = vrot.lane.b32.xlu0 %v1562, 64
    %v1565 = vpop.permute.xlu0 %1564
    %v1567 = vmul.f32 %v1549, %v1565
    %1569 = vrot.lane.b32.xlu0 %v1543, 32
    %v1570 = vpop.permute.xlu0 %1569
    %vm1572 = vcmask 253952
    %1573 = vst.msk [vmem:[#allocation2] sm:$0x1] %vm1572, %v1570
    %1575 = vrot.lane.b32.xlu0 %v1567, 32
    %v1576 = vpop.permute.xlu0 %1575
    %1578 = vst.msk [vmem:[#allocation3 + $0x7] sm:$0x1] %vm1572, %v1576
    %v1579 = vsel %vm69, %v1570, 0
    %1581 = vmatprep.subr.mxu0 0.0
    %1582 = vmatpush1.msra.mxu0 %v1102
    %1583 = vmatprep.subr.mxu0 0.0
    %1584 = vmatpush1.msra.mxu0 %v1103
    %1585 = vmatprep.subr.mxu0 0.0
    %1586 = vmatpush1.msra.mxu0 %v1104
    %1587 = vmatprep.subr.mxu0 0.0
    %1588 = vmatpush1.msra.mxu0 %v1105
    %1589 = vmatprep.subr.mxu0 0.0
    %1590 = vmatpush1.msra.mxu0 0.0
    %1591 = vmatprep.subr.mxu0 0.0
    %1592 = vmatpush1.msra.mxu0 0.0
    %1593 = vmatprep.subr.mxu0 0.0
    %1594 = vmatpush1.msra.mxu0 0.0
    %1595 = vmatprep.subr.mxu0 0.0
    %1596 = vmatpush1.msra.mxu0 0.0
    %1597 = vmatprep.subr.mxu0 0.0
    %1598 = vmatpush1.msra.mxu0 0.0
    %1599 = vmatprep.subr.mxu0 0.0
    %1600 = vmatpush1.msra.mxu0 0.0
    %1601 = vmatprep.subr.mxu0 0.0
    %1602 = vmatpush1.msra.mxu0 0.0
    %1603 = vmatprep.subr.mxu0 0.0
    %1604 = vmatpush1.msra.mxu0 0.0
    %1605 = vmatprep.subr.mxu0 0.0
    %1606 = vmatpush1.msra.mxu0 0.0
    %1607 = vmatprep.subr.mxu0 0.0
    %1608 = vmatpush1.msra.mxu0 0.0
    %1609 = vmatprep.subr.mxu0 0.0
    %1610 = vmatpush1.msra.mxu0 0.0
    %1611 = vmatprep.subr.mxu0 0.0
    %1612 = vmatpush1.msra.mxu0 0.0
    %1613 = vmatprep.subr.mxu0 0.0
    %1614 = vmatpush1.msra.mxu0 0.0
    %1615 = vmatprep.subr.mxu0 0.0
    %1616 = vmatpush1.msra.mxu0 0.0
    %1617 = vmatprep.subr.mxu0 0.0
    %1618 = vmatpush1.msra.mxu0 0.0
    %1619 = vmatprep.subr.mxu0 0.0
    %1620 = vmatpush1.msra.mxu0 0.0
    %1621 = vmatprep.subr.mxu0 0.0
    %1622 = vmatpush1.msra.mxu0 0.0
    %1623 = vmatprep.subr.mxu0 0.0
    %1624 = vmatpush1.msra.mxu0 0.0
    %1625 = vmatprep.subr.mxu0 0.0
    %1626 = vmatpush1.msra.mxu0 0.0
    %1627 = vmatprep.subr.mxu0 0.0
    %1628 = vmatpush1.msra.mxu0 0.0
    %1629 = vmatprep.subr.mxu0 0.0
    %1630 = vmatpush1.msra.mxu0 0.0
    %1631 = vmatprep.subr.mxu0 0.0
    %1632 = vmatpush1.msra.mxu0 0.0
    %1633 = vmatprep.subr.mxu0 0.0
    %1634 = vmatpush1.msra.mxu0 0.0
    %1635 = vmatprep.subr.mxu0 0.0
    %1636 = vmatpush1.msra.mxu0 0.0
    %1637 = vmatprep.subr.mxu0 0.0
    %1638 = vmatpush1.msra.mxu0 0.0
    %1639 = vmatprep.subr.mxu0 0.0
    %1640 = vmatpush1.msra.mxu0 0.0
    %1641 = vmatprep.subr.mxu0 0.0
    %1642 = vmatpush1.msra.mxu0 0.0
    %1643 = vmatprep.subr.mxu0 0.0
    %1644 = vmatpush1.msra.mxu0 0.0
    %1645 = vmatprep.mubr.f32.mxu0 0.0
    %1646 = vmatmul.mubr.f32.gmra.mrb[0].mxu0 %v1579
    %v1647 = vpop.f32.mrb[0].mxu0
    %v1648 = vadd.f32 %v1181, %v1647
    %v1649 = vpop.f32.mrb[0].mxu0
    %1650 = vdwg.mxu0
    %v1651 = vsel %vm69, %v1576, 0
    %1653 = vmatprep.subr.mxu0 0.0
    %1654 = vmatpush1.msra.mxu0 %v1291
    %1655 = vmatprep.subr.mxu0 0.0
    %1656 = vmatpush1.msra.mxu0 %v1292
    %1657 = vmatprep.subr.mxu0 0.0
    %1658 = vmatpush1.msra.mxu0 %v1293
    %1659 = vmatprep.subr.mxu0 0.0
    %1660 = vmatpush1.msra.mxu0 %v1294
    %1661 = vmatprep.subr.mxu0 0.0
    %1662 = vmatpush1.msra.mxu0 0.0
    %1663 = vmatprep.subr.mxu0 0.0
    %1664 = vmatpush1.msra.mxu0 0.0
    %1665 = vmatprep.subr.mxu0 0.0
    %1666 = vmatpush1.msra.mxu0 0.0
    %1667 = vmatprep.subr.mxu0 0.0
    %1668 = vmatpush1.msra.mxu0 0.0
    %1669 = vmatprep.subr.mxu0 0.0
    %1670 = vmatpush1.msra.mxu0 0.0
    %1671 = vmatprep.subr.mxu0 0.0
    %1672 = vmatpush1.msra.mxu0 0.0
    %1673 = vmatprep.subr.mxu0 0.0
    %1674 = vmatpush1.msra.mxu0 0.0
    %1675 = vmatprep.subr.mxu0 0.0
    %1676 = vmatpush1.msra.mxu0 0.0
    %1677 = vmatprep.subr.mxu0 0.0
    %1678 = vmatpush1.msra.mxu0 0.0
    %1679 = vmatprep.subr.mxu0 0.0
    %1680 = vmatpush1.msra.mxu0 0.0
    %1681 = vmatprep.subr.mxu0 0.0
    %1682 = vmatpush1.msra.mxu0 0.0
    %1683 = vmatprep.subr.mxu0 0.0
    %1684 = vmatpush1.msra.mxu0 0.0
    %1685 = vmatprep.subr.mxu0 0.0
    %1686 = vmatpush1.msra.mxu0 0.0
    %1687 = vmatprep.subr.mxu0 0.0
    %1688 = vmatpush1.msra.mxu0 0.0
    %1689 = vmatprep.subr.mxu0 0.0
    %1690 = vmatpush1.msra.mxu0 0.0
    %1691 = vmatprep.subr.mxu0 0.0
    %1692 = vmatpush1.msra.mxu0 0.0
    %1693 = vmatprep.subr.mxu0 0.0
    %1694 = vmatpush1.msra.mxu0 0.0
    %1695 = vmatprep.subr.mxu0 0.0
    %1696 = vmatpush1.msra.mxu0 0.0
    %1697 = vmatprep.subr.mxu0 0.0
    %1698 = vmatpush1.msra.mxu0 0.0
    %1699 = vmatprep.subr.mxu0 0.0
    %1700 = vmatpush1.msra.mxu0 0.0
    %1701 = vmatprep.subr.mxu0 0.0
    %1702 = vmatpush1.msra.mxu0 0.0
    %1703 = vmatprep.subr.mxu0 0.0
    %1704 = vmatpush1.msra.mxu0 0.0
    %1705 = vmatprep.subr.mxu0 0.0
    %1706 = vmatpush1.msra.mxu0 0.0
    %1707 = vmatprep.subr.mxu0 0.0
    %1708 = vmatpush1.msra.mxu0 0.0
    %1709 = vmatprep.subr.mxu0 0.0
    %1710 = vmatpush1.msra.mxu0 0.0
    %1711 = vmatprep.subr.mxu0 0.0
    %1712 = vmatpush1.msra.mxu0 0.0
    %1713 = vmatprep.subr.mxu0 0.0
    %1714 = vmatpush1.msra.mxu0 0.0
    %1715 = vmatprep.subr.mxu0 0.0
    %1716 = vmatpush1.msra.mxu0 0.0
    %1717 = vmatprep.mubr.f32.mxu0 0.0
    %1718 = vmatmul.mubr.f32.gmra.mrb[0].mxu0 %v1651
    %v1719 = vpop.f32.mrb[0].mxu0
    %v1720 = vadd.f32 %v1370, %v1719
    %v1721 = vpop.f32.mrb[0].mxu0
    %1722 = vdwg.mxu0
    %v1723 = vxor.u32 %v1648, 2147483648
    %v1724 = vmul.f32 %v1723, 1.442695
    %v1725 = vpow.pop %v1724
    %v1726 = vadd.f32 %v1725, 1.0
    %v1727 = vrcp.pop %v1726
    %v1728 = vmul.f32 1.0, %v1727
    %v1729 = vtanh.pop %v1648
    %v1730 = vmul.f32 %v1728, %v1537
    %1732 = vrot.lane.b32.xlu0 %v1729, 64
    %v1733 = vpop.permute.xlu0 %1732
    %v1735 = vmul.f32 %v1728, %v1733
    %1737 = vrot.lane.b32.xlu0 %v1735, 32
    %v1738 = vpop.permute.xlu0 %1737
    %v1740 = vadd.f32 %v1730, %v1738
    %v1741 = vtanh.pop %v1740
    %1743 = vrot.lane.b32.xlu0 %v1741, 64
    %v1744 = vpop.permute.xlu0 %1743
    %v1746 = vmul.f32 %v1728, %v1744
    %v1747 = vxor.u32 %v1720, 2147483648
    %v1748 = vmul.f32 %v1747, 1.442695
    %v1749 = vpow.pop %v1748
    %v1750 = vadd.f32 %v1749, 1.0
    %v1751 = vrcp.pop %v1750
    %v1752 = vmul.f32 1.0, %v1751
    %v1753 = vtanh.pop %v1720
    %v1754 = vmul.f32 %v1752, %v1561
    %1756 = vrot.lane.b32.xlu0 %v1753, 64
    %v1757 = vpop.permute.xlu0 %1756
    %v1759 = vmul.f32 %v1752, %v1757
    %1761 = vrot.lane.b32.xlu0 %v1759, 32
    %v1762 = vpop.permute.xlu0 %1761
    %v1764 = vadd.f32 %v1754, %v1762
    %v1765 = vtanh.pop %v1764
    %1767 = vrot.lane.b32.xlu0 %v1765, 64
    %v1768 = vpop.permute.xlu0 %1767
    %v1770 = vmul.f32 %v1752, %v1768
    %1772 = vrot.lane.b32.xlu0 %v1746, 32
    %v1773 = vpop.permute.xlu0 %1772
    %1775 = vst.msk [vmem:[#allocation2 + $0x1] sm:$0x1] %vm1572, %v1773
    %1777 = vrot.lane.b32.xlu0 %v1770, 32
    %v1778 = vpop.permute.xlu0 %1777
    %1780 = vst.msk [vmem:[#allocation3 + $0x6] sm:$0x1] %vm1572, %v1778
    %v1781 = vsel %vm69, %v1773, 0
    %1783 = vmatprep.subr.mxu0 0.0
    %1784 = vmatpush1.msra.mxu0 %v1102
    %1785 = vmatprep.subr.mxu0 0.0
    %1786 = vmatpush1.msra.mxu0 %v1103
    %1787 = vmatprep.subr.mxu0 0.0
    %1788 = vmatpush1.msra.mxu0 %v1104
    %1789 = vmatprep.subr.mxu0 0.0
    %1790 = vmatpush1.msra.mxu0 %v1105
    %1791 = vmatprep.subr.mxu0 0.0
    %1792 = vmatpush1.msra.mxu0 0.0
    %1793 = vmatprep.subr.mxu0 0.0
    %1794 = vmatpush1.msra.mxu0 0.0
    %1795 = vmatprep.subr.mxu0 0.0
    %1796 = vmatpush1.msra.mxu0 0.0
    %1797 = vmatprep.subr.mxu0 0.0
    %1798 = vmatpush1.msra.mxu0 0.0
    %1799 = vmatprep.subr.mxu0 0.0
    %1800 = vmatpush1.msra.mxu0 0.0
    %1801 = vmatprep.subr.mxu0 0.0
    %1802 = vmatpush1.msra.mxu0 0.0
    %1803 = vmatprep.subr.mxu0 0.0
    %1804 = vmatpush1.msra.mxu0 0.0
    %1805 = vmatprep.subr.mxu0 0.0
    %1806 = vmatpush1.msra.mxu0 0.0
    %1807 = vmatprep.subr.mxu0 0.0
    %1808 = vmatpush1.msra.mxu0 0.0
    %1809 = vmatprep.subr.mxu0 0.0
    %1810 = vmatpush1.msra.mxu0 0.0
    %1811 = vmatprep.subr.mxu0 0.0
    %1812 = vmatpush1.msra.mxu0 0.0
    %1813 = vmatprep.subr.mxu0 0.0
    %1814 = vmatpush1.msra.mxu0 0.0
    %1815 = vmatprep.subr.mxu0 0.0
    %1816 = vmatpush1.msra.mxu0 0.0
    %1817 = vmatprep.subr.mxu0 0.0
    %1818 = vmatpush1.msra.mxu0 0.0
    %1819 = vmatprep.subr.mxu0 0.0
    %1820 = vmatpush1.msra.mxu0 0.0
    %1821 = vmatprep.subr.mxu0 0.0
    %1822 = vmatpush1.msra.mxu0 0.0
    %1823 = vmatprep.subr.mxu0 0.0
    %1824 = vmatpush1.msra.mxu0 0.0
    %1825 = vmatprep.subr.mxu0 0.0
    %1826 = vmatpush1.msra.mxu0 0.0
    %1827 = vmatprep.subr.mxu0 0.0
    %1828 = vmatpush1.msra.mxu0 0.0
    %1829 = vmatprep.subr.mxu0 0.0
    %1830 = vmatpush1.msra.mxu0 0.0
    %1831 = vmatprep.subr.mxu0 0.0
    %1832 = vmatpush1.msra.mxu0 0.0
    %1833 = vmatprep.subr.mxu0 0.0
    %1834 = vmatpush1.msra.mxu0 0.0
    %1835 = vmatprep.subr.mxu0 0.0
    %1836 = vmatpush1.msra.mxu0 0.0
    %1837 = vmatprep.subr.mxu0 0.0
    %1838 = vmatpush1.msra.mxu0 0.0
    %1839 = vmatprep.subr.mxu0 0.0
    %1840 = vmatpush1.msra.mxu0 0.0
    %1841 = vmatprep.subr.mxu0 0.0
    %1842 = vmatpush1.msra.mxu0 0.0
    %1843 = vmatprep.subr.mxu0 0.0
    %1844 = vmatpush1.msra.mxu0 0.0
    %1845 = vmatprep.subr.mxu0 0.0
    %1846 = vmatpush1.msra.mxu0 0.0
    %1847 = vmatprep.mubr.f32.mxu0 0.0
    %1848 = vmatmul.mubr.f32.gmra.mrb[0].mxu0 %v1781
    %v1849 = vpop.f32.mrb[0].mxu0
    %v1850 = vadd.f32 %v1181, %v1849
    %v1851 = vpop.f32.mrb[0].mxu0
    %1852 = vdwg.mxu0
    %v1853 = vsel %vm69, %v1778, 0
    %1855 = vmatprep.subr.mxu0 0.0
    %1856 = vmatpush1.msra.mxu0 %v1291
    %1857 = vmatprep.subr.mxu0 0.0
    %1858 = vmatpush1.msra.mxu0 %v1292
    %1859 = vmatprep.subr.mxu0 0.0
    %1860 = vmatpush1.msra.mxu0 %v1293
    %1861 = vmatprep.subr.mxu0 0.0
    %1862 = vmatpush1.msra.mxu0 %v1294
    %1863 = vmatprep.subr.mxu0 0.0
    %1864 = vmatpush1.msra.mxu0 0.0
    %1865 = vmatprep.subr.mxu0 0.0
    %1866 = vmatpush1.msra.mxu0 0.0
    %1867 = vmatprep.subr.mxu0 0.0
    %1868 = vmatpush1.msra.mxu0 0.0
    %1869 = vmatprep.subr.mxu0 0.0
    %1870 = vmatpush1.msra.mxu0 0.0
    %1871 = vmatprep.subr.mxu0 0.0
    %1872 = vmatpush1.msra.mxu0 0.0
    %1873 = vmatprep.subr.mxu0 0.0
    %1874 = vmatpush1.msra.mxu0 0.0
    %1875 = vmatprep.subr.mxu0 0.0
    %1876 = vmatpush1.msra.mxu0 0.0
    %1877 = vmatprep.subr.mxu0 0.0
    %1878 = vmatpush1.msra.mxu0 0.0
    %1879 = vmatprep.subr.mxu0 0.0
    %1880 = vmatpush1.msra.mxu0 0.0
    %1881 = vmatprep.subr.mxu0 0.0
    %1882 = vmatpush1.msra.mxu0 0.0
    %1883 = vmatprep.subr.mxu0 0.0
    %1884 = vmatpush1.msra.mxu0 0.0
    %1885 = vmatprep.subr.mxu0 0.0
    %1886 = vmatpush1.msra.mxu0 0.0
    %1887 = vmatprep.subr.mxu0 0.0
    %1888 = vmatpush1.msra.mxu0 0.0
    %1889 = vmatprep.subr.mxu0 0.0
    %1890 = vmatpush1.msra.mxu0 0.0
    %1891 = vmatprep.subr.mxu0 0.0
    %1892 = vmatpush1.msra.mxu0 0.0
    %1893 = vmatprep.subr.mxu0 0.0
    %1894 = vmatpush1.msra.mxu0 0.0
    %1895 = vmatprep.subr.mxu0 0.0
    %1896 = vmatpush1.msra.mxu0 0.0
    %1897 = vmatprep.subr.mxu0 0.0
    %1898 = vmatpush1.msra.mxu0 0.0
    %1899 = vmatprep.subr.mxu0 0.0
    %1900 = vmatpush1.msra.mxu0 0.0
    %1901 = vmatprep.subr.mxu0 0.0
    %1902 = vmatpush1.msra.mxu0 0.0
    %1903 = vmatprep.subr.mxu0 0.0
    %1904 = vmatpush1.msra.mxu0 0.0
    %1905 = vmatprep.subr.mxu0 0.0
    %1906 = vmatpush1.msra.mxu0 0.0
    %1907 = vmatprep.subr.mxu0 0.0
    %1908 = vmatpush1.msra.mxu0 0.0
    %1909 = vmatprep.subr.mxu0 0.0
    %1910 = vmatpush1.msra.mxu0 0.0
    %1911 = vmatprep.subr.mxu0 0.0
    %1912 = vmatpush1.msra.mxu0 0.0
    %1913 = vmatprep.subr.mxu0 0.0
    %1914 = vmatpush1.msra.mxu0 0.0
    %1915 = vmatprep.subr.mxu0 0.0
    %1916 = vmatpush1.msra.mxu0 0.0
    %1917 = vmatprep.subr.mxu0 0.0
    %1918 = vmatpush1.msra.mxu0 0.0
    %1919 = vmatprep.mubr.f32.mxu0 0.0
    %1920 = vmatmul.mubr.f32.gmra.mrb[0].mxu0 %v1853
    %v1921 = vpop.f32.mrb[0].mxu0
    %v1922 = vadd.f32 %v1370, %v1921
    %v1923 = vpop.f32.mrb[0].mxu0
    %1924 = vdwg.mxu0
    %v1925 = vxor.u32 %v1850, 2147483648
    %v1926 = vmul.f32 %v1925, 1.442695
    %v1927 = vpow.pop %v1926
    %v1928 = vadd.f32 %v1927, 1.0
    %v1929 = vrcp.pop %v1928
    %v1930 = vmul.f32 1.0, %v1929
    %v1931 = vtanh.pop %v1850
    %v1932 = vmul.f32 %v1930, %v1740
    %1934 = vrot.lane.b32.xlu0 %v1931, 64
    %v1935 = vpop.permute.xlu0 %1934
    %v1937 = vmul.f32 %v1930, %v1935
    %1939 = vrot.lane.b32.xlu0 %v1937, 32
    %v1940 = vpop.permute.xlu0 %1939
    %v1942 = vadd.f32 %v1932, %v1940
    %v1943 = vtanh.pop %v1942
    %1945 = vrot.lane.b32.xlu0 %v1943, 64
    %v1946 = vpop.permute.xlu0 %1945
    %v1948 = vmul.f32 %v1930, %v1946
    %v1949 = vxor.u32 %v1922, 2147483648
    %v1950 = vmul.f32 %v1949, 1.442695
    %v1951 = vpow.pop %v1950
    %v1952 = vadd.f32 %v1951, 1.0
    %v1953 = vrcp.pop %v1952
    %v1954 = vmul.f32 1.0, %v1953
    %v1955 = vtanh.pop %v1922
    %v1956 = vmul.f32 %v1954, %v1764
    %1958 = vrot.lane.b32.xlu0 %v1955, 64
    %v1959 = vpop.permute.xlu0 %1958
    %v1961 = vmul.f32 %v1954, %v1959
    %1963 = vrot.lane.b32.xlu0 %v1961, 32
    %v1964 = vpop.permute.xlu0 %1963
    %v1966 = vadd.f32 %v1956, %v1964
    %v1967 = vtanh.pop %v1966
    %1969 = vrot.lane.b32.xlu0 %v1967, 64
    %v1970 = vpop.permute.xlu0 %1969
    %v1972 = vmul.f32 %v1954, %v1970
    %1974 = vrot.lane.b32.xlu0 %v1948, 32
    %v1975 = vpop.permute.xlu0 %1974
    %1977 = vst.msk [vmem:[#allocation2 + $0x2] sm:$0x1] %vm1572, %v1975
    %1979 = vrot.lane.b32.xlu0 %v1972, 32
    %v1980 = vpop.permute.xlu0 %1979
    %1982 = vst.msk [vmem:[#allocation3 + $0x5] sm:$0x1] %vm1572, %v1980
    %v1983 = vsel %vm69, %v1975, 0
    %1985 = vmatprep.subr.mxu0 0.0
    %1986 = vmatpush1.msra.mxu0 %v1102
    %1987 = vmatprep.subr.mxu0 0.0
    %1988 = vmatpush1.msra.mxu0 %v1103
    %1989 = vmatprep.subr.mxu0 0.0
    %1990 = vmatpush1.msra.mxu0 %v1104
    %1991 = vmatprep.subr.mxu0 0.0
    %1992 = vmatpush1.msra.mxu0 %v1105
    %1993 = vmatprep.subr.mxu0 0.0
    %1994 = vmatpush1.msra.mxu0 0.0
    %1995 = vmatprep.subr.mxu0 0.0
    %1996 = vmatpush1.msra.mxu0 0.0
    %1997 = vmatprep.subr.mxu0 0.0
    %1998 = vmatpush1.msra.mxu0 0.0
    %1999 = vmatprep.subr.mxu0 0.0
    %2000 = vmatpush1.msra.mxu0 0.0
    %2001 = vmatprep.subr.mxu0 0.0
    %2002 = vmatpush1.msra.mxu0 0.0
    %2003 = vmatprep.subr.mxu0 0.0
    %2004 = vmatpush1.msra.mxu0 0.0
    %2005 = vmatprep.subr.mxu0 0.0
    %2006 = vmatpush1.msra.mxu0 0.0
    %2007 = vmatprep.subr.mxu0 0.0
    %2008 = vmatpush1.msra.mxu0 0.0
    %2009 = vmatprep.subr.mxu0 0.0
    %2010 = vmatpush1.msra.mxu0 0.0
    %2011 = vmatprep.subr.mxu0 0.0
    %2012 = vmatpush1.msra.mxu0 0.0
    %2013 = vmatprep.subr.mxu0 0.0
    %2014 = vmatpush1.msra.mxu0 0.0
    %2015 = vmatprep.subr.mxu0 0.0
    %2016 = vmatpush1.msra.mxu0 0.0
    %2017 = vmatprep.subr.mxu0 0.0
    %2018 = vmatpush1.msra.mxu0 0.0
    %2019 = vmatprep.subr.mxu0 0.0
    %2020 = vmatpush1.msra.mxu0 0.0
    %2021 = vmatprep.subr.mxu0 0.0
    %2022 = vmatpush1.msra.mxu0 0.0
    %2023 = vmatprep.subr.mxu0 0.0
    %2024 = vmatpush1.msra.mxu0 0.0
    %2025 = vmatprep.subr.mxu0 0.0
    %2026 = vmatpush1.msra.mxu0 0.0
    %2027 = vmatprep.subr.mxu0 0.0
    %2028 = vmatpush1.msra.mxu0 0.0
    %2029 = vmatprep.subr.mxu0 0.0
    %2030 = vmatpush1.msra.mxu0 0.0
    %2031 = vmatprep.subr.mxu0 0.0
    %2032 = vmatpush1.msra.mxu0 0.0
    %2033 = vmatprep.subr.mxu0 0.0
    %2034 = vmatpush1.msra.mxu0 0.0
    %2035 = vmatprep.subr.mxu0 0.0
    %2036 = vmatpush1.msra.mxu0 0.0
    %2037 = vmatprep.subr.mxu0 0.0
    %2038 = vmatpush1.msra.mxu0 0.0
    %2039 = vmatprep.subr.mxu0 0.0
    %2040 = vmatpush1.msra.mxu0 0.0
    %2041 = vmatprep.subr.mxu0 0.0
    %2042 = vmatpush1.msra.mxu0 0.0
    %2043 = vmatprep.subr.mxu0 0.0
    %2044 = vmatpush1.msra.mxu0 0.0
    %2045 = vmatprep.subr.mxu0 0.0
    %2046 = vmatpush1.msra.mxu0 0.0
    %2047 = vmatprep.subr.mxu0 0.0
    %2048 = vmatpush1.msra.mxu0 0.0
    %2049 = vmatprep.mubr.f32.mxu0 0.0
    %2050 = vmatmul.mubr.f32.gmra.mrb[0].mxu0 %v1983
    %v2051 = vpop.f32.mrb[0].mxu0
    %v2052 = vadd.f32 %v1181, %v2051
    %v2053 = vpop.f32.mrb[0].mxu0
    %2054 = vdwg.mxu0
    %v2055 = vsel %vm69, %v1980, 0
    %2057 = vmatprep.subr.mxu0 0.0
    %2058 = vmatpush1.msra.mxu0 %v1291
    %2059 = vmatprep.subr.mxu0 0.0
    %2060 = vmatpush1.msra.mxu0 %v1292
    %2061 = vmatprep.subr.mxu0 0.0
    %2062 = vmatpush1.msra.mxu0 %v1293
    %2063 = vmatprep.subr.mxu0 0.0
    %2064 = vmatpush1.msra.mxu0 %v1294
    %2065 = vmatprep.subr.mxu0 0.0
    %2066 = vmatpush1.msra.mxu0 0.0
    %2067 = vmatprep.subr.mxu0 0.0
    %2068 = vmatpush1.msra.mxu0 0.0
    %2069 = vmatprep.subr.mxu0 0.0
    %2070 = vmatpush1.msra.mxu0 0.0
    %2071 = vmatprep.subr.mxu0 0.0
    %2072 = vmatpush1.msra.mxu0 0.0
    %2073 = vmatprep.subr.mxu0 0.0
    %2074 = vmatpush1.msra.mxu0 0.0
    %2075 = vmatprep.subr.mxu0 0.0
    %2076 = vmatpush1.msra.mxu0 0.0
    %2077 = vmatprep.subr.mxu0 0.0
    %2078 = vmatpush1.msra.mxu0 0.0
    %2079 = vmatprep.subr.mxu0 0.0
    %2080 = vmatpush1.msra.mxu0 0.0
    %2081 = vmatprep.subr.mxu0 0.0
    %2082 = vmatpush1.msra.mxu0 0.0
    %2083 = vmatprep.subr.mxu0 0.0
    %2084 = vmatpush1.msra.mxu0 0.0
    %2085 = vmatprep.subr.mxu0 0.0
    %2086 = vmatpush1.msra.mxu0 0.0
    %2087 = vmatprep.subr.mxu0 0.0
    %2088 = vmatpush1.msra.mxu0 0.0
    %2089 = vmatprep.subr.mxu0 0.0
    %2090 = vmatpush1.msra.mxu0 0.0
    %2091 = vmatprep.subr.mxu0 0.0
    %2092 = vmatpush1.msra.mxu0 0.0
    %2093 = vmatprep.subr.mxu0 0.0
    %2094 = vmatpush1.msra.mxu0 0.0
    %2095 = vmatprep.subr.mxu0 0.0
    %2096 = vmatpush1.msra.mxu0 0.0
    %2097 = vmatprep.subr.mxu0 0.0
    %2098 = vmatpush1.msra.mxu0 0.0
    %2099 = vmatprep.subr.mxu0 0.0
    %2100 = vmatpush1.msra.mxu0 0.0
    %2101 = vmatprep.subr.mxu0 0.0
    %2102 = vmatpush1.msra.mxu0 0.0
    %2103 = vmatprep.subr.mxu0 0.0
    %2104 = vmatpush1.msra.mxu0 0.0
    %2105 = vmatprep.subr.mxu0 0.0
    %2106 = vmatpush1.msra.mxu0 0.0
    %2107 = vmatprep.subr.mxu0 0.0
    %2108 = vmatpush1.msra.mxu0 0.0
    %2109 = vmatprep.subr.mxu0 0.0
    %2110 = vmatpush1.msra.mxu0 0.0
    %2111 = vmatprep.subr.mxu0 0.0
    %2112 = vmatpush1.msra.mxu0 0.0
    %2113 = vmatprep.subr.mxu0 0.0
    %2114 = vmatpush1.msra.mxu0 0.0
    %2115 = vmatprep.subr.mxu0 0.0
    %2116 = vmatpush1.msra.mxu0 0.0
    %2117 = vmatprep.subr.mxu0 0.0
    %2118 = vmatpush1.msra.mxu0 0.0
    %2119 = vmatprep.subr.mxu0 0.0
    %2120 = vmatpush1.msra.mxu0 0.0
    %2121 = vmatprep.mubr.f32.mxu0 0.0
    %2122 = vmatmul.mubr.f32.gmra.mrb[0].mxu0 %v2055
    %v2123 = vpop.f32.mrb[0].mxu0
    %v2124 = vadd.f32 %v1370, %v2123
    %v2125 = vpop.f32.mrb[0].mxu0
    %2126 = vdwg.mxu0
    %v2127 = vxor.u32 %v2052, 2147483648
    %v2128 = vmul.f32 %v2127, 1.442695
    %v2129 = vpow.pop %v2128
    %v2130 = vadd.f32 %v2129, 1.0
    %v2131 = vrcp.pop %v2130
    %v2132 = vmul.f32 1.0, %v2131
    %v2133 = vtanh.pop %v2052
    %v2134 = vmul.f32 %v2132, %v1942
    %2136 = vrot.lane.b32.xlu0 %v2133, 64
    %v2137 = vpop.permute.xlu0 %2136
    %v2139 = vmul.f32 %v2132, %v2137
    %2141 = vrot.lane.b32.xlu0 %v2139, 32
    %v2142 = vpop.permute.xlu0 %2141
    %v2144 = vadd.f32 %v2134, %v2142
    %v2145 = vtanh.pop %v2144
    %2147 = vrot.lane.b32.xlu0 %v2145, 64
    %v2148 = vpop.permute.xlu0 %2147
    %v2150 = vmul.f32 %v2132, %v2148
    %v2151 = vxor.u32 %v2124, 2147483648
    %v2152 = vmul.f32 %v2151, 1.442695
    %v2153 = vpow.pop %v2152
    %v2154 = vadd.f32 %v2153, 1.0
    %v2155 = vrcp.pop %v2154
    %v2156 = vmul.f32 1.0, %v2155
    %v2157 = vtanh.pop %v2124
    %v2158 = vmul.f32 %v2156, %v1966
    %2160 = vrot.lane.b32.xlu0 %v2157, 64
    %v2161 = vpop.permute.xlu0 %2160
    %v2163 = vmul.f32 %v2156, %v2161
    %2165 = vrot.lane.b32.xlu0 %v2163, 32
    %v2166 = vpop.permute.xlu0 %2165
    %v2168 = vadd.f32 %v2158, %v2166
    %v2169 = vtanh.pop %v2168
    %2171 = vrot.lane.b32.xlu0 %v2169, 64
    %v2172 = vpop.permute.xlu0 %2171
    %v2174 = vmul.f32 %v2156, %v2172
    %2176 = vrot.lane.b32.xlu0 %v2150, 32
    %v2177 = vpop.permute.xlu0 %2176
    %2179 = vst.msk [vmem:[#allocation2 + $0x3] sm:$0x1] %vm1572, %v2177
    %2181 = vrot.lane.b32.xlu0 %v2174, 32
    %v2182 = vpop.permute.xlu0 %2181
    %2184 = vst.msk [vmem:[#allocation3 + $0x4] sm:$0x1] %vm1572, %v2182
    %v2185 = vsel %vm69, %v2177, 0
    %2187 = vmatprep.subr.mxu0 0.0
    %2188 = vmatpush1.msra.mxu0 %v1102
    %2189 = vmatprep.subr.mxu0 0.0
    %2190 = vmatpush1.msra.mxu0 %v1103
    %2191 = vmatprep.subr.mxu0 0.0
    %2192 = vmatpush1.msra.mxu0 %v1104
    %2193 = vmatprep.subr.mxu0 0.0
    %2194 = vmatpush1.msra.mxu0 %v1105
    %2195 = vmatprep.subr.mxu0 0.0
    %2196 = vmatpush1.msra.mxu0 0.0
    %2197 = vmatprep.subr.mxu0 0.0
    %2198 = vmatpush1.msra.mxu0 0.0
    %2199 = vmatprep.subr.mxu0 0.0
    %2200 = vmatpush1.msra.mxu0 0.0
    %2201 = vmatprep.subr.mxu0 0.0
    %2202 = vmatpush1.msra.mxu0 0.0
    %2203 = vmatprep.subr.mxu0 0.0
    %2204 = vmatpush1.msra.mxu0 0.0
    %2205 = vmatprep.subr.mxu0 0.0
    %2206 = vmatpush1.msra.mxu0 0.0
    %2207 = vmatprep.subr.mxu0 0.0
    %2208 = vmatpush1.msra.mxu0 0.0
    %2209 = vmatprep.subr.mxu0 0.0
    %2210 = vmatpush1.msra.mxu0 0.0
    %2211 = vmatprep.subr.mxu0 0.0
    %2212 = vmatpush1.msra.mxu0 0.0
    %2213 = vmatprep.subr.mxu0 0.0
    %2214 = vmatpush1.msra.mxu0 0.0
    %2215 = vmatprep.subr.mxu0 0.0
    %2216 = vmatpush1.msra.mxu0 0.0
    %2217 = vmatprep.subr.mxu0 0.0
    %2218 = vmatpush1.msra.mxu0 0.0
    %2219 = vmatprep.subr.mxu0 0.0
    %2220 = vmatpush1.msra.mxu0 0.0
    %2221 = vmatprep.subr.mxu0 0.0
    %2222 = vmatpush1.msra.mxu0 0.0
    %2223 = vmatprep.subr.mxu0 0.0
    %2224 = vmatpush1.msra.mxu0 0.0
    %2225 = vmatprep.subr.mxu0 0.0
    %2226 = vmatpush1.msra.mxu0 0.0
    %2227 = vmatprep.subr.mxu0 0.0
    %2228 = vmatpush1.msra.mxu0 0.0
    %2229 = vmatprep.subr.mxu0 0.0
    %2230 = vmatpush1.msra.mxu0 0.0
    %2231 = vmatprep.subr.mxu0 0.0
    %2232 = vmatpush1.msra.mxu0 0.0
    %2233 = vmatprep.subr.mxu0 0.0
    %2234 = vmatpush1.msra.mxu0 0.0
    %2235 = vmatprep.subr.mxu0 0.0
    %2236 = vmatpush1.msra.mxu0 0.0
    %2237 = vmatprep.subr.mxu0 0.0
    %2238 = vmatpush1.msra.mxu0 0.0
    %2239 = vmatprep.subr.mxu0 0.0
    %2240 = vmatpush1.msra.mxu0 0.0
    %2241 = vmatprep.subr.mxu0 0.0
    %2242 = vmatpush1.msra.mxu0 0.0
    %2243 = vmatprep.subr.mxu0 0.0
    %2244 = vmatpush1.msra.mxu0 0.0
    %2245 = vmatprep.subr.mxu0 0.0
    %2246 = vmatpush1.msra.mxu0 0.0
    %2247 = vmatprep.subr.mxu0 0.0
    %2248 = vmatpush1.msra.mxu0 0.0
    %2249 = vmatprep.subr.mxu0 0.0
    %2250 = vmatpush1.msra.mxu0 0.0
    %2251 = vmatprep.mubr.f32.mxu0 0.0
    %2252 = vmatmul.mubr.f32.gmra.mrb[0].mxu0 %v2185
    %v2253 = vpop.f32.mrb[0].mxu0
    %v2254 = vadd.f32 %v1181, %v2253
    %v2255 = vpop.f32.mrb[0].mxu0
    %2256 = vdwg.mxu0
    %v2257 = vsel %vm69, %v2182, 0
    %2259 = vmatprep.subr.mxu0 0.0
    %2260 = vmatpush1.msra.mxu0 %v1291
    %2261 = vmatprep.subr.mxu0 0.0
    %2262 = vmatpush1.msra.mxu0 %v1292
    %2263 = vmatprep.subr.mxu0 0.0
    %2264 = vmatpush1.msra.mxu0 %v1293
    %2265 = vmatprep.subr.mxu0 0.0
    %2266 = vmatpush1.msra.mxu0 %v1294
    %2267 = vmatprep.subr.mxu0 0.0
    %2268 = vmatpush1.msra.mxu0 0.0
    %2269 = vmatprep.subr.mxu0 0.0
    %2270 = vmatpush1.msra.mxu0 0.0
    %2271 = vmatprep.subr.mxu0 0.0
    %2272 = vmatpush1.msra.mxu0 0.0
    %2273 = vmatprep.subr.mxu0 0.0
    %2274 = vmatpush1.msra.mxu0 0.0
    %2275 = vmatprep.subr.mxu0 0.0
    %2276 = vmatpush1.msra.mxu0 0.0
    %2277 = vmatprep.subr.mxu0 0.0
    %2278 = vmatpush1.msra.mxu0 0.0
    %2279 = vmatprep.subr.mxu0 0.0
    %2280 = vmatpush1.msra.mxu0 0.0
    %2281 = vmatprep.subr.mxu0 0.0
    %2282 = vmatpush1.msra.mxu0 0.0
    %2283 = vmatprep.subr.mxu0 0.0
    %2284 = vmatpush1.msra.mxu0 0.0
    %2285 = vmatprep.subr.mxu0 0.0
    %2286 = vmatpush1.msra.mxu0 0.0
    %2287 = vmatprep.subr.mxu0 0.0
    %2288 = vmatpush1.msra.mxu0 0.0
    %2289 = vmatprep.subr.mxu0 0.0
    %2290 = vmatpush1.msra.mxu0 0.0
    %2291 = vmatprep.subr.mxu0 0.0
    %2292 = vmatpush1.msra.mxu0 0.0
    %2293 = vmatprep.subr.mxu0 0.0
    %2294 = vmatpush1.msra.mxu0 0.0
    %2295 = vmatprep.subr.mxu0 0.0
    %2296 = vmatpush1.msra.mxu0 0.0
    %2297 = vmatprep.subr.mxu0 0.0
    %2298 = vmatpush1.msra.mxu0 0.0
    %2299 = vmatprep.subr.mxu0 0.0
    %2300 = vmatpush1.msra.mxu0 0.0
    %2301 = vmatprep.subr.mxu0 0.0
    %2302 = vmatpush1.msra.mxu0 0.0
    %2303 = vmatprep.subr.mxu0 0.0
    %2304 = vmatpush1.msra.mxu0 0.0
    %2305 = vmatprep.subr.mxu0 0.0
    %2306 = vmatpush1.msra.mxu0 0.0
    %2307 = vmatprep.subr.mxu0 0.0
    %2308 = vmatpush1.msra.mxu0 0.0
    %2309 = vmatprep.subr.mxu0 0.0
    %2310 = vmatpush1.msra.mxu0 0.0
    %2311 = vmatprep.subr.mxu0 0.0
    %2312 = vmatpush1.msra.mxu0 0.0
    %2313 = vmatprep.subr.mxu0 0.0
    %2314 = vmatpush1.msra.mxu0 0.0
    %2315 = vmatprep.subr.mxu0 0.0
    %2316 = vmatpush1.msra.mxu0 0.0
    %2317 = vmatprep.subr.mxu0 0.0
    %2318 = vmatpush1.msra.mxu0 0.0
    %2319 = vmatprep.subr.mxu0 0.0
    %2320 = vmatpush1.msra.mxu0 0.0
    %2321 = vmatprep.subr.mxu0 0.0
    %2322 = vmatpush1.msra.mxu0 0.0
    %2323 = vmatprep.mubr.f32.mxu0 0.0
    %2324 = vmatmul.mubr.f32.gmra.mrb[0].mxu0 %v2257
    %v2325 = vpop.f32.mrb[0].mxu0
    %v2326 = vadd.f32 %v1370, %v2325
    %v2327 = vpop.f32.mrb[0].mxu0
    %2328 = vdwg.mxu0
    %v2329 = vxor.u32 %v2254, 2147483648
    %v2330 = vmul.f32 %v2329, 1.442695
    %v2331 = vpow.pop %v2330
    %v2332 = vadd.f32 %v2331, 1.0
    %v2333 = vrcp.pop %v2332
    %v2334 = vmul.f32 1.0, %v2333
    %v2335 = vtanh.pop %v2254
    %v2336 = vmul.f32 %v2334, %v2144
    %2338 = vrot.lane.b32.xlu0 %v2335, 64
    %v2339 = vpop.permute.xlu0 %2338
    %v2341 = vmul.f32 %v2334, %v2339
    %2343 = vrot.lane.b32.xlu0 %v2341, 32
    %v2344 = vpop.permute.xlu0 %2343
    %v2346 = vadd.f32 %v2336, %v2344
    %v2347 = vtanh.pop %v2346
    %2349 = vrot.lane.b32.xlu0 %v2347, 64
    %v2350 = vpop.permute.xlu0 %2349
    %v2352 = vmul.f32 %v2334, %v2350
    %v2353 = vxor.u32 %v2326, 2147483648
    %v2354 = vmul.f32 %v2353, 1.442695
    %v2355 = vpow.pop %v2354
    %v2356 = vadd.f32 %v2355, 1.0
    %v2357 = vrcp.pop %v2356
    %v2358 = vmul.f32 1.0, %v2357
    %v2359 = vtanh.pop %v2326
    %v2360 = vmul.f32 %v2358, %v2168
    %2362 = vrot.lane.b32.xlu0 %v2359, 64
    %v2363 = vpop.permute.xlu0 %2362
    %v2365 = vmul.f32 %v2358, %v2363
    %2367 = vrot.lane.b32.xlu0 %v2365, 32
    %v2368 = vpop.permute.xlu0 %2367
    %v2370 = vadd.f32 %v2360, %v2368
    %v2371 = vtanh.pop %v2370
    %2373 = vrot.lane.b32.xlu0 %v2371, 64
    %v2374 = vpop.permute.xlu0 %2373
    %v2376 = vmul.f32 %v2358, %v2374
    %2378 = vrot.lane.b32.xlu0 %v2352, 32
    %v2379 = vpop.permute.xlu0 %2378
    %2381 = vst.msk [vmem:[#allocation2 + $0x4] sm:$0x1] %vm1572, %v2379
    %2383 = vrot.lane.b32.xlu0 %v2376, 32
    %v2384 = vpop.permute.xlu0 %2383
    %2386 = vst.msk [vmem:[#allocation3 + $0x3] sm:$0x1] %vm1572, %v2384
    %v2387 = vsel %vm69, %v2379, 0
    %2389 = vmatprep.subr.mxu0 0.0
    %2390 = vmatpush1.msra.mxu0 %v1102
    %2391 = vmatprep.subr.mxu0 0.0
    %2392 = vmatpush1.msra.mxu0 %v1103
    %2393 = vmatprep.subr.mxu0 0.0
    %2394 = vmatpush1.msra.mxu0 %v1104
    %2395 = vmatprep.subr.mxu0 0.0
    %2396 = vmatpush1.msra.mxu0 %v1105
    %2397 = vmatprep.subr.mxu0 0.0
    %2398 = vmatpush1.msra.mxu0 0.0
    %2399 = vmatprep.subr.mxu0 0.0
    %2400 = vmatpush1.msra.mxu0 0.0
    %2401 = vmatprep.subr.mxu0 0.0
    %2402 = vmatpush1.msra.mxu0 0.0
    %2403 = vmatprep.subr.mxu0 0.0
    %2404 = vmatpush1.msra.mxu0 0.0
    %2405 = vmatprep.subr.mxu0 0.0
    %2406 = vmatpush1.msra.mxu0 0.0
    %2407 = vmatprep.subr.mxu0 0.0
    %2408 = vmatpush1.msra.mxu0 0.0
    %2409 = vmatprep.subr.mxu0 0.0
    %2410 = vmatpush1.msra.mxu0 0.0
    %2411 = vmatprep.subr.mxu0 0.0
    %2412 = vmatpush1.msra.mxu0 0.0
    %2413 = vmatprep.subr.mxu0 0.0
    %2414 = vmatpush1.msra.mxu0 0.0
    %2415 = vmatprep.subr.mxu0 0.0
    %2416 = vmatpush1.msra.mxu0 0.0
    %2417 = vmatprep.subr.mxu0 0.0
    %2418 = vmatpush1.msra.mxu0 0.0
    %2419 = vmatprep.subr.mxu0 0.0
    %2420 = vmatpush1.msra.mxu0 0.0
    %2421 = vmatprep.subr.mxu0 0.0
    %2422 = vmatpush1.msra.mxu0 0.0
    %2423 = vmatprep.subr.mxu0 0.0
    %2424 = vmatpush1.msra.mxu0 0.0
    %2425 = vmatprep.subr.mxu0 0.0
    %2426 = vmatpush1.msra.mxu0 0.0
    %2427 = vmatprep.subr.mxu0 0.0
    %2428 = vmatpush1.msra.mxu0 0.0
    %2429 = vmatprep.subr.mxu0 0.0
    %2430 = vmatpush1.msra.mxu0 0.0
    %2431 = vmatprep.subr.mxu0 0.0
    %2432 = vmatpush1.msra.mxu0 0.0
    %2433 = vmatprep.subr.mxu0 0.0
    %2434 = vmatpush1.msra.mxu0 0.0
    %2435 = vmatprep.subr.mxu0 0.0
    %2436 = vmatpush1.msra.mxu0 0.0
    %2437 = vmatprep.subr.mxu0 0.0
    %2438 = vmatpush1.msra.mxu0 0.0
    %2439 = vmatprep.subr.mxu0 0.0
    %2440 = vmatpush1.msra.mxu0 0.0
    %2441 = vmatprep.subr.mxu0 0.0
    %2442 = vmatpush1.msra.mxu0 0.0
    %2443 = vmatprep.subr.mxu0 0.0
    %2444 = vmatpush1.msra.mxu0 0.0
    %2445 = vmatprep.subr.mxu0 0.0
    %2446 = vmatpush1.msra.mxu0 0.0
    %2447 = vmatprep.subr.mxu0 0.0
    %2448 = vmatpush1.msra.mxu0 0.0
    %2449 = vmatprep.subr.mxu0 0.0
    %2450 = vmatpush1.msra.mxu0 0.0
    %2451 = vmatprep.subr.mxu0 0.0
    %2452 = vmatpush1.msra.mxu0 0.0
    %2453 = vmatprep.mubr.f32.mxu0 0.0
    %2454 = vmatmul.mubr.f32.gmra.mrb[0].mxu0 %v2387
    %v2455 = vpop.f32.mrb[0].mxu0
    %v2456 = vadd.f32 %v1181, %v2455
    %v2457 = vpop.f32.mrb[0].mxu0
    %2458 = vdwg.mxu0
    %v2459 = vsel %vm69, %v2384, 0
    %2461 = vmatprep.subr.mxu0 0.0
    %2462 = vmatpush1.msra.mxu0 %v1291
    %2463 = vmatprep.subr.mxu0 0.0
    %2464 = vmatpush1.msra.mxu0 %v1292
    %2465 = vmatprep.subr.mxu0 0.0
    %2466 = vmatpush1.msra.mxu0 %v1293
    %2467 = vmatprep.subr.mxu0 0.0
    %2468 = vmatpush1.msra.mxu0 %v1294
    %2469 = vmatprep.subr.mxu0 0.0
    %2470 = vmatpush1.msra.mxu0 0.0
    %2471 = vmatprep.subr.mxu0 0.0
    %2472 = vmatpush1.msra.mxu0 0.0
    %2473 = vmatprep.subr.mxu0 0.0
    %2474 = vmatpush1.msra.mxu0 0.0
    %2475 = vmatprep.subr.mxu0 0.0
    %2476 = vmatpush1.msra.mxu0 0.0
    %2477 = vmatprep.subr.mxu0 0.0
    %2478 = vmatpush1.msra.mxu0 0.0
    %2479 = vmatprep.subr.mxu0 0.0
    %2480 = vmatpush1.msra.mxu0 0.0
    %2481 = vmatprep.subr.mxu0 0.0
    %2482 = vmatpush1.msra.mxu0 0.0
    %2483 = vmatprep.subr.mxu0 0.0
    %2484 = vmatpush1.msra.mxu0 0.0
    %2485 = vmatprep.subr.mxu0 0.0
    %2486 = vmatpush1.msra.mxu0 0.0
    %2487 = vmatprep.subr.mxu0 0.0
    %2488 = vmatpush1.msra.mxu0 0.0
    %2489 = vmatprep.subr.mxu0 0.0
    %2490 = vmatpush1.msra.mxu0 0.0
    %2491 = vmatprep.subr.mxu0 0.0
    %2492 = vmatpush1.msra.mxu0 0.0
    %2493 = vmatprep.subr.mxu0 0.0
    %2494 = vmatpush1.msra.mxu0 0.0
    %2495 = vmatprep.subr.mxu0 0.0
    %2496 = vmatpush1.msra.mxu0 0.0
    %2497 = vmatprep.subr.mxu0 0.0
    %2498 = vmatpush1.msra.mxu0 0.0
    %2499 = vmatprep.subr.mxu0 0.0
    %2500 = vmatpush1.msra.mxu0 0.0
    %2501 = vmatprep.subr.mxu0 0.0
    %2502 = vmatpush1.msra.mxu0 0.0
    %2503 = vmatprep.subr.mxu0 0.0
    %2504 = vmatpush1.msra.mxu0 0.0
    %2505 = vmatprep.subr.mxu0 0.0
    %2506 = vmatpush1.msra.mxu0 0.0
    %2507 = vmatprep.subr.mxu0 0.0
    %2508 = vmatpush1.msra.mxu0 0.0
    %2509 = vmatprep.subr.mxu0 0.0
    %2510 = vmatpush1.msra.mxu0 0.0
    %2511 = vmatprep.subr.mxu0 0.0
    %2512 = vmatpush1.msra.mxu0 0.0
    %2513 = vmatprep.subr.mxu0 0.0
    %2514 = vmatpush1.msra.mxu0 0.0
    %2515 = vmatprep.subr.mxu0 0.0
    %2516 = vmatpush1.msra.mxu0 0.0
    %2517 = vmatprep.subr.mxu0 0.0
    %2518 = vmatpush1.msra.mxu0 0.0
    %2519 = vmatprep.subr.mxu0 0.0
    %2520 = vmatpush1.msra.mxu0 0.0
    %2521 = vmatprep.subr.mxu0 0.0
    %2522 = vmatpush1.msra.mxu0 0.0
    %2523 = vmatprep.subr.mxu0 0.0
    %2524 = vmatpush1.msra.mxu0 0.0
    %2525 = vmatprep.mubr.f32.mxu0 0.0
    %2526 = vmatmul.mubr.f32.gmra.mrb[0].mxu0 %v2459
    %v2527 = vpop.f32.mrb[0].mxu0
    %v2528 = vadd.f32 %v1370, %v2527
    %v2529 = vpop.f32.mrb[0].mxu0
    %2530 = vdwg.mxu0
    %v2531 = vxor.u32 %v2456, 2147483648
    %v2532 = vmul.f32 %v2531, 1.442695
    %v2533 = vpow.pop %v2532
    %v2534 = vadd.f32 %v2533, 1.0
    %v2535 = vrcp.pop %v2534
    %v2536 = vmul.f32 1.0, %v2535
    %v2537 = vtanh.pop %v2456
    %v2538 = vmul.f32 %v2536, %v2346
    %2540 = vrot.lane.b32.xlu0 %v2537, 64
    %v2541 = vpop.permute.xlu0 %2540
    %v2543 = vmul.f32 %v2536, %v2541
    %2545 = vrot.lane.b32.xlu0 %v2543, 32
    %v2546 = vpop.permute.xlu0 %2545
    %v2548 = vadd.f32 %v2538, %v2546
    %v2549 = vtanh.pop %v2548
    %2551 = vrot.lane.b32.xlu0 %v2549, 64
    %v2552 = vpop.permute.xlu0 %2551
    %v2554 = vmul.f32 %v2536, %v2552
    %v2555 = vxor.u32 %v2528, 2147483648
    %v2556 = vmul.f32 %v2555, 1.442695
    %v2557 = vpow.pop %v2556
    %v2558 = vadd.f32 %v2557, 1.0
    %v2559 = vrcp.pop %v2558
    %v2560 = vmul.f32 1.0, %v2559
    %v2561 = vtanh.pop %v2528
    %v2562 = vmul.f32 %v2560, %v2370
    %2564 = vrot.lane.b32.xlu0 %v2561, 64
    %v2565 = vpop.permute.xlu0 %2564
    %v2567 = vmul.f32 %v2560, %v2565
    %2569 = vrot.lane.b32.xlu0 %v2567, 32
    %v2570 = vpop.permute.xlu0 %2569
    %v2572 = vadd.f32 %v2562, %v2570
    %v2573 = vtanh.pop %v2572
    %2575 = vrot.lane.b32.xlu0 %v2573, 64
    %v2576 = vpop.permute.xlu0 %2575
    %v2578 = vmul.f32 %v2560, %v2576
    %2580 = vrot.lane.b32.xlu0 %v2554, 32
    %v2581 = vpop.permute.xlu0 %2580
    %2583 = vst.msk [vmem:[#allocation2 + $0x5] sm:$0x1] %vm1572, %v2581
    %2585 = vrot.lane.b32.xlu0 %v2578, 32
    %v2586 = vpop.permute.xlu0 %2585
    %2588 = vst.msk [vmem:[#allocation3 + $0x2] sm:$0x1] %vm1572, %v2586
    %v2589 = vsel %vm69, %v2581, 0
    %2591 = vmatprep.subr.mxu0 0.0
    %2592 = vmatpush1.msra.mxu0 %v1102
    %2593 = vmatprep.subr.mxu0 0.0
    %2594 = vmatpush1.msra.mxu0 %v1103
    %2595 = vmatprep.subr.mxu0 0.0
    %2596 = vmatpush1.msra.mxu0 %v1104
    %2597 = vmatprep.subr.mxu0 0.0
    %2598 = vmatpush1.msra.mxu0 %v1105
    %2599 = vmatprep.subr.mxu0 0.0
    %2600 = vmatpush1.msra.mxu0 0.0
    %2601 = vmatprep.subr.mxu0 0.0
    %2602 = vmatpush1.msra.mxu0 0.0
    %2603 = vmatprep.subr.mxu0 0.0
    %2604 = vmatpush1.msra.mxu0 0.0
    %2605 = vmatprep.subr.mxu0 0.0
    %2606 = vmatpush1.msra.mxu0 0.0
    %2607 = vmatprep.subr.mxu0 0.0
    %2608 = vmatpush1.msra.mxu0 0.0
    %2609 = vmatprep.subr.mxu0 0.0
    %2610 = vmatpush1.msra.mxu0 0.0
    %2611 = vmatprep.subr.mxu0 0.0
    %2612 = vmatpush1.msra.mxu0 0.0
    %2613 = vmatprep.subr.mxu0 0.0
    %2614 = vmatpush1.msra.mxu0 0.0
    %2615 = vmatprep.subr.mxu0 0.0
    %2616 = vmatpush1.msra.mxu0 0.0
    %2617 = vmatprep.subr.mxu0 0.0
    %2618 = vmatpush1.msra.mxu0 0.0
    %2619 = vmatprep.subr.mxu0 0.0
    %2620 = vmatpush1.msra.mxu0 0.0
    %2621 = vmatprep.subr.mxu0 0.0
    %2622 = vmatpush1.msra.mxu0 0.0
    %2623 = vmatprep.subr.mxu0 0.0
    %2624 = vmatpush1.msra.mxu0 0.0
    %2625 = vmatprep.subr.mxu0 0.0
    %2626 = vmatpush1.msra.mxu0 0.0
    %2627 = vmatprep.subr.mxu0 0.0
    %2628 = vmatpush1.msra.mxu0 0.0
    %2629 = vmatprep.subr.mxu0 0.0
    %2630 = vmatpush1.msra.mxu0 0.0
    %2631 = vmatprep.subr.mxu0 0.0
    %2632 = vmatpush1.msra.mxu0 0.0
    %2633 = vmatprep.subr.mxu0 0.0
    %2634 = vmatpush1.msra.mxu0 0.0
    %2635 = vmatprep.subr.mxu0 0.0
    %2636 = vmatpush1.msra.mxu0 0.0
    %2637 = vmatprep.subr.mxu0 0.0
    %2638 = vmatpush1.msra.mxu0 0.0
    %2639 = vmatprep.subr.mxu0 0.0
    %2640 = vmatpush1.msra.mxu0 0.0
    %2641 = vmatprep.subr.mxu0 0.0
    %2642 = vmatpush1.msra.mxu0 0.0
    %2643 = vmatprep.subr.mxu0 0.0
    %2644 = vmatpush1.msra.mxu0 0.0
    %2645 = vmatprep.subr.mxu0 0.0
    %2646 = vmatpush1.msra.mxu0 0.0
    %2647 = vmatprep.subr.mxu0 0.0
    %2648 = vmatpush1.msra.mxu0 0.0
    %2649 = vmatprep.subr.mxu0 0.0
    %2650 = vmatpush1.msra.mxu0 0.0
    %2651 = vmatprep.subr.mxu0 0.0
    %2652 = vmatpush1.msra.mxu0 0.0
    %2653 = vmatprep.subr.mxu0 0.0
    %2654 = vmatpush1.msra.mxu0 0.0
    %2655 = vmatprep.mubr.f32.mxu0 0.0
    %2656 = vmatmul.mubr.f32.gmra.mrb[0].mxu0 %v2589
    %v2657 = vpop.f32.mrb[0].mxu0
    %v2658 = vadd.f32 %v1181, %v2657
    %v2659 = vpop.f32.mrb[0].mxu0
    %2660 = vdwg.mxu0
    %v2661 = vsel %vm69, %v2586, 0
    %2663 = vmatprep.subr.mxu0 0.0
    %2664 = vmatpush1.msra.mxu0 %v1291
    %2665 = vmatprep.subr.mxu0 0.0
    %2666 = vmatpush1.msra.mxu0 %v1292
    %2667 = vmatprep.subr.mxu0 0.0
    %2668 = vmatpush1.msra.mxu0 %v1293
    %2669 = vmatprep.subr.mxu0 0.0
    %2670 = vmatpush1.msra.mxu0 %v1294
    %2671 = vmatprep.subr.mxu0 0.0
    %2672 = vmatpush1.msra.mxu0 0.0
    %2673 = vmatprep.subr.mxu0 0.0
    %2674 = vmatpush1.msra.mxu0 0.0
    %2675 = vmatprep.subr.mxu0 0.0
    %2676 = vmatpush1.msra.mxu0 0.0
    %2677 = vmatprep.subr.mxu0 0.0
    %2678 = vmatpush1.msra.mxu0 0.0
    %2679 = vmatprep.subr.mxu0 0.0
    %2680 = vmatpush1.msra.mxu0 0.0
    %2681 = vmatprep.subr.mxu0 0.0
    %2682 = vmatpush1.msra.mxu0 0.0
    %2683 = vmatprep.subr.mxu0 0.0
    %2684 = vmatpush1.msra.mxu0 0.0
    %2685 = vmatprep.subr.mxu0 0.0
    %2686 = vmatpush1.msra.mxu0 0.0
    %2687 = vmatprep.subr.mxu0 0.0
    %2688 = vmatpush1.msra.mxu0 0.0
    %2689 = vmatprep.subr.mxu0 0.0
    %2690 = vmatpush1.msra.mxu0 0.0
    %2691 = vmatprep.subr.mxu0 0.0
    %2692 = vmatpush1.msra.mxu0 0.0
    %2693 = vmatprep.subr.mxu0 0.0
    %2694 = vmatpush1.msra.mxu0 0.0
    %2695 = vmatprep.subr.mxu0 0.0
    %2696 = vmatpush1.msra.mxu0 0.0
    %2697 = vmatprep.subr.mxu0 0.0
    %2698 = vmatpush1.msra.mxu0 0.0
    %2699 = vmatprep.subr.mxu0 0.0
    %2700 = vmatpush1.msra.mxu0 0.0
    %2701 = vmatprep.subr.mxu0 0.0
    %2702 = vmatpush1.msra.mxu0 0.0
    %2703 = vmatprep.subr.mxu0 0.0
    %2704 = vmatpush1.msra.mxu0 0.0
    %2705 = vmatprep.subr.mxu0 0.0
    %2706 = vmatpush1.msra.mxu0 0.0
    %2707 = vmatprep.subr.mxu0 0.0
    %2708 = vmatpush1.msra.mxu0 0.0
    %2709 = vmatprep.subr.mxu0 0.0
    %2710 = vmatpush1.msra.mxu0 0.0
    %2711 = vmatprep.subr.mxu0 0.0
    %2712 = vmatpush1.msra.mxu0 0.0
    %2713 = vmatprep.subr.mxu0 0.0
    %2714 = vmatpush1.msra.mxu0 0.0
    %2715 = vmatprep.subr.mxu0 0.0
    %2716 = vmatpush1.msra.mxu0 0.0
    %2717 = vmatprep.subr.mxu0 0.0
    %2718 = vmatpush1.msra.mxu0 0.0
    %2719 = vmatprep.subr.mxu0 0.0
    %2720 = vmatpush1.msra.mxu0 0.0
    %2721 = vmatprep.subr.mxu0 0.0
    %2722 = vmatpush1.msra.mxu0 0.0
    %2723 = vmatprep.subr.mxu0 0.0
    %2724 = vmatpush1.msra.mxu0 0.0
    %2725 = vmatprep.subr.mxu0 0.0
    %2726 = vmatpush1.msra.mxu0 0.0
    %2727 = vmatprep.mubr.f32.mxu0 0.0
    %2728 = vmatmul.mubr.f32.gmra.mrb[0].mxu0 %v2661
    %v2729 = vpop.f32.mrb[0].mxu0
    %v2730 = vadd.f32 %v1370, %v2729
    %v2731 = vpop.f32.mrb[0].mxu0
    %2732 = vdwg.mxu0
    %v2733 = vxor.u32 %v2658, 2147483648
    %v2734 = vmul.f32 %v2733, 1.442695
    %v2735 = vpow.pop %v2734
    %v2736 = vadd.f32 %v2735, 1.0
    %v2737 = vrcp.pop %v2736
    %v2738 = vmul.f32 1.0, %v2737
    %v2739 = vtanh.pop %v2658
    %v2740 = vmul.f32 %v2738, %v2548
    %2742 = vrot.lane.b32.xlu0 %v2739, 64
    %v2743 = vpop.permute.xlu0 %2742
    %v2745 = vmul.f32 %v2738, %v2743
    %2747 = vrot.lane.b32.xlu0 %v2745, 32
    %v2748 = vpop.permute.xlu0 %2747
    %v2750 = vadd.f32 %v2740, %v2748
    %v2751 = vtanh.pop %v2750
    %2753 = vrot.lane.b32.xlu0 %v2751, 64
    %v2754 = vpop.permute.xlu0 %2753
    %v2756 = vmul.f32 %v2738, %v2754
    %v2757 = vxor.u32 %v2730, 2147483648
    %v2758 = vmul.f32 %v2757, 1.442695
    %v2759 = vpow.pop %v2758
    %v2760 = vadd.f32 %v2759, 1.0
    %v2761 = vrcp.pop %v2760
    %v2762 = vmul.f32 1.0, %v2761
    %v2763 = vtanh.pop %v2730
    %v2764 = vmul.f32 %v2762, %v2572
    %2766 = vrot.lane.b32.xlu0 %v2763, 64
    %v2767 = vpop.permute.xlu0 %2766
    %v2769 = vmul.f32 %v2762, %v2767
    %2771 = vrot.lane.b32.xlu0 %v2769, 32
    %v2772 = vpop.permute.xlu0 %2771
    %v2774 = vadd.f32 %v2764, %v2772
    %v2775 = vtanh.pop %v2774
    %2777 = vrot.lane.b32.xlu0 %v2775, 64
    %v2778 = vpop.permute.xlu0 %2777
    %v2780 = vmul.f32 %v2762, %v2778
    %2782 = vrot.lane.b32.xlu0 %v2756, 32
    %v2783 = vpop.permute.xlu0 %2782
    %2785 = vst.msk [vmem:[#allocation2 + $0x6] sm:$0x1] %vm1572, %v2783
    %2787 = vrot.lane.b32.xlu0 %v2780, 32
    %v2788 = vpop.permute.xlu0 %2787
    %2790 = vst.msk [vmem:[#allocation3 + $0x1] sm:$0x1] %vm1572, %v2788
    %v2791 = vsel %vm69, %v2783, 0
    %2793 = vmatprep.subr.mxu0 0.0
    %2794 = vmatpush1.msra.mxu0 %v1102
    %2795 = vmatprep.subr.mxu0 0.0
    %2796 = vmatpush1.msra.mxu0 %v1103
    %2797 = vmatprep.subr.mxu0 0.0
    %2798 = vmatpush1.msra.mxu0 %v1104
    %2799 = vmatprep.subr.mxu0 0.0
    %2800 = vmatpush1.msra.mxu0 %v1105
    %2801 = vmatprep.subr.mxu0 0.0
    %2802 = vmatpush1.msra.mxu0 0.0
    %2803 = vmatprep.subr.mxu0 0.0
    %2804 = vmatpush1.msra.mxu0 0.0
    %2805 = vmatprep.subr.mxu0 0.0
    %2806 = vmatpush1.msra.mxu0 0.0
    %2807 = vmatprep.subr.mxu0 0.0
    %2808 = vmatpush1.msra.mxu0 0.0
    %2809 = vmatprep.subr.mxu0 0.0
    %2810 = vmatpush1.msra.mxu0 0.0
    %2811 = vmatprep.subr.mxu0 0.0
    %2812 = vmatpush1.msra.mxu0 0.0
    %2813 = vmatprep.subr.mxu0 0.0
    %2814 = vmatpush1.msra.mxu0 0.0
    %2815 = vmatprep.subr.mxu0 0.0
    %2816 = vmatpush1.msra.mxu0 0.0
    %2817 = vmatprep.subr.mxu0 0.0
    %2818 = vmatpush1.msra.mxu0 0.0
    %2819 = vmatprep.subr.mxu0 0.0
    %2820 = vmatpush1.msra.mxu0 0.0
    %2821 = vmatprep.subr.mxu0 0.0
    %2822 = vmatpush1.msra.mxu0 0.0
    %2823 = vmatprep.subr.mxu0 0.0
    %2824 = vmatpush1.msra.mxu0 0.0
    %2825 = vmatprep.subr.mxu0 0.0
    %2826 = vmatpush1.msra.mxu0 0.0
    %2827 = vmatprep.subr.mxu0 0.0
    %2828 = vmatpush1.msra.mxu0 0.0
    %2829 = vmatprep.subr.mxu0 0.0
    %2830 = vmatpush1.msra.mxu0 0.0
    %2831 = vmatprep.subr.mxu0 0.0
    %2832 = vmatpush1.msra.mxu0 0.0
    %2833 = vmatprep.subr.mxu0 0.0
    %2834 = vmatpush1.msra.mxu0 0.0
    %2835 = vmatprep.subr.mxu0 0.0
    %2836 = vmatpush1.msra.mxu0 0.0
    %2837 = vmatprep.subr.mxu0 0.0
    %2838 = vmatpush1.msra.mxu0 0.0
    %2839 = vmatprep.subr.mxu0 0.0
    %2840 = vmatpush1.msra.mxu0 0.0
    %2841 = vmatprep.subr.mxu0 0.0
    %2842 = vmatpush1.msra.mxu0 0.0
    %2843 = vmatprep.subr.mxu0 0.0
    %2844 = vmatpush1.msra.mxu0 0.0
    %2845 = vmatprep.subr.mxu0 0.0
    %2846 = vmatpush1.msra.mxu0 0.0
    %2847 = vmatprep.subr.mxu0 0.0
    %2848 = vmatpush1.msra.mxu0 0.0
    %2849 = vmatprep.subr.mxu0 0.0
    %2850 = vmatpush1.msra.mxu0 0.0
    %2851 = vmatprep.subr.mxu0 0.0
    %2852 = vmatpush1.msra.mxu0 0.0
    %2853 = vmatprep.subr.mxu0 0.0
    %2854 = vmatpush1.msra.mxu0 0.0
    %2855 = vmatprep.subr.mxu0 0.0
    %2856 = vmatpush1.msra.mxu0 0.0
    %2857 = vmatprep.mubr.f32.mxu0 0.0
    %2858 = vmatmul.mubr.f32.gmra.mrb[0].mxu0 %v2791
    %v2859 = vpop.f32.mrb[0].mxu0
    %v2860 = vadd.f32 %v1181, %v2859
    %v2861 = vpop.f32.mrb[0].mxu0
    %2862 = vdwg.mxu0
    %v2863 = vsel %vm69, %v2788, 0
    %2865 = vmatprep.subr.mxu0 0.0
    %2866 = vmatpush1.msra.mxu0 %v1291
    %2867 = vmatprep.subr.mxu0 0.0
    %2868 = vmatpush1.msra.mxu0 %v1292
    %2869 = vmatprep.subr.mxu0 0.0
    %2870 = vmatpush1.msra.mxu0 %v1293
    %2871 = vmatprep.subr.mxu0 0.0
    %2872 = vmatpush1.msra.mxu0 %v1294
    %2873 = vmatprep.subr.mxu0 0.0
    %2874 = vmatpush1.msra.mxu0 0.0
    %2875 = vmatprep.subr.mxu0 0.0
    %2876 = vmatpush1.msra.mxu0 0.0
    %2877 = vmatprep.subr.mxu0 0.0
    %2878 = vmatpush1.msra.mxu0 0.0
    %2879 = vmatprep.subr.mxu0 0.0
    %2880 = vmatpush1.msra.mxu0 0.0
    %2881 = vmatprep.subr.mxu0 0.0
    %2882 = vmatpush1.msra.mxu0 0.0
    %2883 = vmatprep.subr.mxu0 0.0
    %2884 = vmatpush1.msra.mxu0 0.0
    %2885 = vmatprep.subr.mxu0 0.0
    %2886 = vmatpush1.msra.mxu0 0.0
    %2887 = vmatprep.subr.mxu0 0.0
    %2888 = vmatpush1.msra.mxu0 0.0
    %2889 = vmatprep.subr.mxu0 0.0
    %2890 = vmatpush1.msra.mxu0 0.0
    %2891 = vmatprep.subr.mxu0 0.0
    %2892 = vmatpush1.msra.mxu0 0.0
    %2893 = vmatprep.subr.mxu0 0.0
    %2894 = vmatpush1.msra.mxu0 0.0
    %2895 = vmatprep.subr.mxu0 0.0
    %2896 = vmatpush1.msra.mxu0 0.0
    %2897 = vmatprep.subr.mxu0 0.0
    %2898 = vmatpush1.msra.mxu0 0.0
    %2899 = vmatprep.subr.mxu0 0.0
    %2900 = vmatpush1.msra.mxu0 0.0
    %2901 = vmatprep.subr.mxu0 0.0
    %2902 = vmatpush1.msra.mxu0 0.0
    %2903 = vmatprep.subr.mxu0 0.0
    %2904 = vmatpush1.msra.mxu0 0.0
    %2905 = vmatprep.subr.mxu0 0.0
    %2906 = vmatpush1.msra.mxu0 0.0
    %2907 = vmatprep.subr.mxu0 0.0
    %2908 = vmatpush1.msra.mxu0 0.0
    %2909 = vmatprep.subr.mxu0 0.0
    %2910 = vmatpush1.msra.mxu0 0.0
    %2911 = vmatprep.subr.mxu0 0.0
    %2912 = vmatpush1.msra.mxu0 0.0
    %2913 = vmatprep.subr.mxu0 0.0
    %2914 = vmatpush1.msra.mxu0 0.0
    %2915 = vmatprep.subr.mxu0 0.0
    %2916 = vmatpush1.msra.mxu0 0.0
    %2917 = vmatprep.subr.mxu0 0.0
    %2918 = vmatpush1.msra.mxu0 0.0
    %2919 = vmatprep.subr.mxu0 0.0
    %2920 = vmatpush1.msra.mxu0 0.0
    %2921 = vmatprep.subr.mxu0 0.0
    %2922 = vmatpush1.msra.mxu0 0.0
    %2923 = vmatprep.subr.mxu0 0.0
    %2924 = vmatpush1.msra.mxu0 0.0
    %2925 = vmatprep.subr.mxu0 0.0
    %2926 = vmatpush1.msra.mxu0 0.0
    %2927 = vmatprep.subr.mxu0 0.0
    %2928 = vmatpush1.msra.mxu0 0.0
    %2929 = vmatprep.mubr.f32.mxu0 0.0
    %2930 = vmatmul.mubr.f32.gmra.mrb[0].mxu0 %v2863
    %v2931 = vpop.f32.mrb[0].mxu0
    %v2932 = vadd.f32 %v1370, %v2931
    %v2933 = vpop.f32.mrb[0].mxu0
    %2934 = vdwg.mxu0
    %v2935 = vxor.u32 %v2860, 2147483648
    %v2936 = vmul.f32 %v2935, 1.442695
    %v2937 = vpow.pop %v2936
    %v2938 = vadd.f32 %v2937, 1.0
    %v2939 = vrcp.pop %v2938
    %v2940 = vmul.f32 1.0, %v2939
    %v2941 = vtanh.pop %v2860
    %v2942 = vmul.f32 %v2940, %v2750
    %2944 = vrot.lane.b32.xlu0 %v2941, 64
    %v2945 = vpop.permute.xlu0 %2944
    %v2947 = vmul.f32 %v2940, %v2945
    %2949 = vrot.lane.b32.xlu0 %v2947, 32
    %v2950 = vpop.permute.xlu0 %2949
    %v2952 = vadd.f32 %v2942, %v2950
    %v2953 = vtanh.pop %v2952
    %2955 = vrot.lane.b32.xlu0 %v2953, 64
    %v2956 = vpop.permute.xlu0 %2955
    %v2958 = vmul.f32 %v2940, %v2956
    %v2959 = vxor.u32 %v2932, 2147483648
    %v2960 = vmul.f32 %v2959, 1.442695
    %v2961 = vpow.pop %v2960
    %v2962 = vadd.f32 %v2961, 1.0
    %v2963 = vrcp.pop %v2962
    %v2964 = vmul.f32 1.0, %v2963
    %v2965 = vtanh.pop %v2932
    %v2966 = vmul.f32 %v2964, %v2774
    %2968 = vrot.lane.b32.xlu0 %v2965, 64
    %v2969 = vpop.permute.xlu0 %2968
    %v2971 = vmul.f32 %v2964, %v2969
    %2973 = vrot.lane.b32.xlu0 %v2971, 32
    %v2974 = vpop.permute.xlu0 %2973
    %v2976 = vadd.f32 %v2966, %v2974
    %v2977 = vtanh.pop %v2976
    %2979 = vrot.lane.b32.xlu0 %v2977, 64
    %v2980 = vpop.permute.xlu0 %2979
    %v2982 = vmul.f32 %v2964, %v2980
    %2984 = vrot.lane.b32.xlu0 %v2958, 32
    %v2985 = vpop.permute.xlu0 %2984
    %2987 = vst.msk [vmem:[#allocation2 + $0x7] sm:$0x1] %vm1572, %v2985
    %2989 = vrot.lane.b32.xlu0 %v2982, 32
    %v2990 = vpop.permute.xlu0 %2989
    %2992 = vst.msk [vmem:[#allocation3] sm:$0x1] %vm1572, %v2990
    %v2993 = vld [vmem:[#allocation2] sm:$0xff]
    %v2994 = vld [vmem:[%s9] sm:$0xff]
    %v2995 = vld [vmem:[%s9 + $0x8] sm:$0xff]
    %v2996 = vld [vmem:[%s9 + $0x10] sm:$0xff]
    %v2997 = vld [vmem:[%s9 + $0x18] sm:$0xff]
    %v2998 = vld [vmem:[%s10] sm:$0x1]
    %v3000 = vlaneseq
    %v3001 = vshrl.u32 %v3000, 7
    %v3002 = vsub.s32 0, %v3001
    %v3003 = vrot.slane %v2998, %v3002
    %v3006 = vsel %vm69, %v2993, 0
    %3008 = vmatprep.subr.mxu0 0.0
    %3009 = vmatpush1.msra.mxu0 %v2994
    %3010 = vmatprep.subr.mxu0 0.0
    %3011 = vmatpush1.msra.mxu0 %v2995
    %3012 = vmatprep.subr.mxu0 0.0
    %3013 = vmatpush1.msra.mxu0 %v2996
    %3014 = vmatprep.subr.mxu0 0.0
    %3015 = vmatpush1.msra.mxu0 %v2997
    %3016 = vmatprep.subr.mxu0 0.0
    %3017 = vmatpush1.msra.mxu0 0.0
    %3018 = vmatprep.subr.mxu0 0.0
    %3019 = vmatpush1.msra.mxu0 0.0
    %3020 = vmatprep.subr.mxu0 0.0
    %3021 = vmatpush1.msra.mxu0 0.0
    %3022 = vmatprep.subr.mxu0 0.0
    %3023 = vmatpush1.msra.mxu0 0.0
    %3024 = vmatprep.subr.mxu0 0.0
    %3025 = vmatpush1.msra.mxu0 0.0
    %3026 = vmatprep.subr.mxu0 0.0
    %3027 = vmatpush1.msra.mxu0 0.0
    %3028 = vmatprep.subr.mxu0 0.0
    %3029 = vmatpush1.msra.mxu0 0.0
    %3030 = vmatprep.subr.mxu0 0.0
    %3031 = vmatpush1.msra.mxu0 0.0
    %3032 = vmatprep.subr.mxu0 0.0
    %3033 = vmatpush1.msra.mxu0 0.0
    %3034 = vmatprep.subr.mxu0 0.0
    %3035 = vmatpush1.msra.mxu0 0.0
    %3036 = vmatprep.subr.mxu0 0.0
    %3037 = vmatpush1.msra.mxu0 0.0
    %3038 = vmatprep.subr.mxu0 0.0
    %3039 = vmatpush1.msra.mxu0 0.0
    %3040 = vmatprep.subr.mxu0 0.0
    %3041 = vmatpush1.msra.mxu0 0.0
    %3042 = vmatprep.subr.mxu0 0.0
    %3043 = vmatpush1.msra.mxu0 0.0
    %3044 = vmatprep.subr.mxu0 0.0
    %3045 = vmatpush1.msra.mxu0 0.0
    %3046 = vmatprep.subr.mxu0 0.0
    %3047 = vmatpush1.msra.mxu0 0.0
    %3048 = vmatprep.subr.mxu0 0.0
    %3049 = vmatpush1.msra.mxu0 0.0
    %3050 = vmatprep.subr.mxu0 0.0
    %3051 = vmatpush1.msra.mxu0 0.0
    %3052 = vmatprep.subr.mxu0 0.0
    %3053 = vmatpush1.msra.mxu0 0.0
    %3054 = vmatprep.subr.mxu0 0.0
    %3055 = vmatpush1.msra.mxu0 0.0
    %3056 = vmatprep.subr.mxu0 0.0
    %3057 = vmatpush1.msra.mxu0 0.0
    %3058 = vmatprep.subr.mxu0 0.0
    %3059 = vmatpush1.msra.mxu0 0.0
    %3060 = vmatprep.subr.mxu0 0.0
    %3061 = vmatpush1.msra.mxu0 0.0
    %3062 = vmatprep.subr.mxu0 0.0
    %3063 = vmatpush1.msra.mxu0 0.0
    %3064 = vmatprep.subr.mxu0 0.0
    %3065 = vmatpush1.msra.mxu0 0.0
    %3066 = vmatprep.subr.mxu0 0.0
    %3067 = vmatpush1.msra.mxu0 0.0
    %3068 = vmatprep.subr.mxu0 0.0
    %3069 = vmatpush1.msra.mxu0 0.0
    %3070 = vmatprep.subr.mxu0 0.0
    %3071 = vmatpush1.msra.mxu0 0.0
    %3072 = vmatprep.mubr.f32.mxu0 0.0
    %3073 = vmatmul.mubr.f32.gmra.mrb[0].mxu0 %v3006
    %v3074 = vpop.f32.mrb[0].mxu0
    %v3075 = vadd.f32 %v3003, %v3074
    %v3076 = vpop.f32.mrb[0].mxu0
    %3077 = vdwg.mxu0
    %v3078 = vld [vmem:[#allocation3] sm:$0xff]
    %v3079 = vld [vmem:[%s14] sm:$0xff]
    %v3080 = vld [vmem:[%s14 + $0x8] sm:$0xff]
    %v3081 = vld [vmem:[%s14 + $0x10] sm:$0xff]
    %v3082 = vld [vmem:[%s14 + $0x18] sm:$0xff]
    %v3083 = vld [vmem:[%s15] sm:$0x1]
    %v3085 = vlaneseq
    %v3086 = vshrl.u32 %v3085, 7
    %v3087 = vsub.s32 0, %v3086
    %v3088 = vrot.slane %v3083, %v3087
    %v3091 = vsel %vm69, %v3078, 0
    %3093 = vmatprep.subr.mxu0 0.0
    %3094 = vmatpush1.msra.mxu0 %v3079
    %3095 = vmatprep.subr.mxu0 0.0
    %3096 = vmatpush1.msra.mxu0 %v3080
    %3097 = vmatprep.subr.mxu0 0.0
    %3098 = vmatpush1.msra.mxu0 %v3081
    %3099 = vmatprep.subr.mxu0 0.0
    %3100 = vmatpush1.msra.mxu0 %v3082
    %3101 = vmatprep.subr.mxu0 0.0
    %3102 = vmatpush1.msra.mxu0 0.0
    %3103 = vmatprep.subr.mxu0 0.0
    %3104 = vmatpush1.msra.mxu0 0.0
    %3105 = vmatprep.subr.mxu0 0.0
    %3106 = vmatpush1.msra.mxu0 0.0
    %3107 = vmatprep.subr.mxu0 0.0
    %3108 = vmatpush1.msra.mxu0 0.0
    %3109 = vmatprep.subr.mxu0 0.0
    %3110 = vmatpush1.msra.mxu0 0.0
    %3111 = vmatprep.subr.mxu0 0.0
    %3112 = vmatpush1.msra.mxu0 0.0
    %3113 = vmatprep.subr.mxu0 0.0
    %3114 = vmatpush1.msra.mxu0 0.0
    %3115 = vmatprep.subr.mxu0 0.0
    %3116 = vmatpush1.msra.mxu0 0.0
    %3117 = vmatprep.subr.mxu0 0.0
    %3118 = vmatpush1.msra.mxu0 0.0
    %3119 = vmatprep.subr.mxu0 0.0
    %3120 = vmatpush1.msra.mxu0 0.0
    %3121 = vmatprep.subr.mxu0 0.0
    %3122 = vmatpush1.msra.mxu0 0.0
    %3123 = vmatprep.subr.mxu0 0.0
    %3124 = vmatpush1.msra.mxu0 0.0
    %3125 = vmatprep.subr.mxu0 0.0
    %3126 = vmatpush1.msra.mxu0 0.0
    %3127 = vmatprep.subr.mxu0 0.0
    %3128 = vmatpush1.msra.mxu0 0.0
    %3129 = vmatprep.subr.mxu0 0.0
    %3130 = vmatpush1.msra.mxu0 0.0
    %3131 = vmatprep.subr.mxu0 0.0
    %3132 = vmatpush1.msra.mxu0 0.0
    %3133 = vmatprep.subr.mxu0 0.0
    %3134 = vmatpush1.msra.mxu0 0.0
    %3135 = vmatprep.subr.mxu0 0.0
    %3136 = vmatpush1.msra.mxu0 0.0
    %3137 = vmatprep.subr.mxu0 0.0
    %3138 = vmatpush1.msra.mxu0 0.0
    %3139 = vmatprep.subr.mxu0 0.0
    %3140 = vmatpush1.msra.mxu0 0.0
    %3141 = vmatprep.subr.mxu0 0.0
    %3142 = vmatpush1.msra.mxu0 0.0
    %3143 = vmatprep.subr.mxu0 0.0
    %3144 = vmatpush1.msra.mxu0 0.0
    %3145 = vmatprep.subr.mxu0 0.0
    %3146 = vmatpush1.msra.mxu0 0.0
    %3147 = vmatprep.subr.mxu0 0.0
    %3148 = vmatpush1.msra.mxu0 0.0
    %3149 = vmatprep.subr.mxu0 0.0
    %3150 = vmatpush1.msra.mxu0 0.0
    %3151 = vmatprep.subr.mxu0 0.0
    %3152 = vmatpush1.msra.mxu0 0.0
    %3153 = vmatprep.subr.mxu0 0.0
    %3154 = vmatpush1.msra.mxu0 0.0
    %3155 = vmatprep.subr.mxu0 0.0
    %3156 = vmatpush1.msra.mxu0 0.0
    %3157 = vmatprep.mubr.f32.mxu0 0.0
    %3158 = vmatmul.mubr.f32.gmra.mrb[0].mxu0 %v3091
    %v3159 = vpop.f32.mrb[0].mxu0
    %v3160 = vadd.f32 %v3088, %v3159
    %v3161 = vpop.f32.mrb[0].mxu0
    %3162 = vdwg.mxu0
    %v3163 = vld [vmem:[%s2] sm:$0xff]
    %v3164 = vsub.f32 %v3075, %v3163
    %v3165 = vld [vmem:[%s1] sm:$0xff]
    %v3166 = vsub.f32 %v3160, %v3165
    %v3167 = vmul.f32 %v3164, %v3164
    %v3168 = vsel %vm69, %v3167, 0.0
    %3169 = vadd.xlane.f32.xlu0 %v3168
    %v3170 = vpop.xlane.xlu0 %3169
    %v3171 = vrot.slane %v3170, 4
    %v3172 = vadd.f32 %v3170, %v3171
    %v3173 = vrot.slane %v3172, 2
    %v3174 = vadd.f32 %v3172, %v3173
    %v3175 = vrot.slane %v3174, 1
    %v3176 = vadd.f32 %v3174, %v3175
    %s3177 = vtos %v3176
    %s3178 = smul.f32 %s3177, 0.00390625
    %v3179 = vstv %s3178
    %vm3180 = vcmask 0
    %3181 = vst.msk [vmem:[#allocation6] sm:$0x1] %vm3180, %v3179
    %v3182 = vmul.f32 %v3166, %v3166
    %v3183 = vsel %vm69, %v3182, 0.0
    %3184 = vadd.xlane.f32.xlu0 %v3183
    %v3185 = vpop.xlane.xlu0 %3184
    %v3186 = vrot.slane %v3185, 4
    %v3187 = vadd.f32 %v3185, %v3186
    %v3188 = vrot.slane %v3187, 2
    %v3189 = vadd.f32 %v3187, %v3188
    %v3190 = vrot.slane %v3189, 1
    %v3191 = vadd.f32 %v3189, %v3190
    %s3192 = vtos %v3191
    %s3193 = smul.f32 %s3192, 0.00390625
    %v3194 = vstv %s3193
    %3195 = vst.msk [vmem:[#allocation4] sm:$0x1] %vm3180, %v3194
    // Predicated region
    $region66: #{my_model_forward.3} parent=1 // pred_check
      _
    $region67: #{my_model_forward.3} parent=1 // pred_check_branch
      %3197 = sbr.rel (0) target = $region69
    $region68: #{my_model_forward.3} parent=1 // pred_region
      %s3199 = ssub.s32 16, 16
      %3200 = vsyncadd [#allocation5], %s3199
      %s3202 = sshll.u32 [#allocation4], 4
      %s3203 = int_to_ptr.vmem [resolvable:$true] %s3202
      %3205 = dma.vmem_to_hbm [thread:$0]  %s3203, 16, %s16, [#allocation5]
    $region69: #{my_model_forward.3} parent=1 // pred_fallthru
      _
    // Predicated region
    $region70: #{my_model_forward.3} parent=1 // pred_check
      _
    $region71: #{my_model_forward.3} parent=1 // pred_check_branch
      %3207 = sbr.rel (0) target = $region73
    $region72: #{my_model_forward.3} parent=1 // pred_region
      %s3209 = ssub.s32 16, 16
      %3210 = vsyncadd [#allocation7], %s3209
      %s3212 = sshll.u32 [#allocation6], 4
      %s3213 = int_to_ptr.vmem [resolvable:$true] %s3212
      %3215 = dma.vmem_to_hbm [thread:$0]  %s3213, 16, %s17, [#allocation7]
    $region73: #{my_model_forward.3} parent=1 // pred_fallthru
      _
    // Predicated region
    $region74: #{my_model_forward.3} parent=1 // pred_check
      _
    $region75: #{my_model_forward.3} parent=1 // pred_check_branch
      %3217 = sbr.rel (0) target = $region77
    $region76: #{my_model_forward.3} parent=1 // pred_region
      %3218 = dma.done [#allocation5], 16
    $region77: #{my_model_forward.3} parent=1 // pred_fallthru
      _
    // Predicated region
    $region78: #{my_model_forward.3} parent=1 // pred_check
      _
    $region79: #{my_model_forward.3} parent=1 // pred_check_branch
      %3220 = sbr.rel (0) target = $region81
    $region80: #{my_model_forward.3} parent=1 // pred_region
      %3221 = dma.done [#allocation7], 16
    $region81: #{my_model_forward.3} parent=1 // pred_fallthru
      _
    %3222 = vsyncpa [#allocation5], 1
    %3223 = vsyncpa [#allocation7], 1

</llo_original>
